<compile_context>
chip_gen: v6e
topology: v6e:2x2x1
jax: 0.10.0
libtpu: 0.0.40
codegen_flags: <defaults>
</compile_context>

<pallas_src>
import functools

import jax
import jax.numpy as jnp
from jax.experimental import pallas as pl
from jax.experimental.pallas import tpu as pltpu

# Left padding inside the halo scratch: the zero halo column sits at index
# _PADL and the image interior starts at _PADL + 1 == 8, keeping the interior
# store aligned to the 8-sublane tile.
_PADL = 7
_SCRATCH_W_EXTRA = _PADL + 2  # unused cols [0.._PADL-1], left halo, right halo


def _layer_t2_kernel(x_ref, w1_ref, s1_ref, b1_ref, w2_ref, s2_ref, b2_ref,
                     o_ref, xpad_ref, hpad_ref, *, H, W, cin, cmid):
    """Fused Layer_T2 for one image.

    x_ref : (1, H, W, cin)        input image (NHWC block)
    w1_ref: (9*cin, cmid)         conv1 weights, (ky,kx,ci)-major flattened
    w2_ref: (9*cmid, cmid)        conv2 weights, (ky,kx,ci)-major flattened
    s*_ref/b*_ref: (1, cmid)      folded BatchNorm scale / bias
    o_ref : (1, H*W, cmid)        output (flattened spatial)
    xpad_ref: (H+2, W+_SCRATCH_W_EXTRA, cin)   zero-halo input staging (VMEM)
    hpad_ref: (H+2, W+_SCRATCH_W_EXTRA, cmid)  zero-halo intermediate (VMEM)
    """
    f32 = jnp.float32

    def im2col(pad_ref, c):
        # 9 shifted 3x3 windows packed along the contraction dim ->
        # (H*W, 9*c); feeds a single deep-K MXU matmul.
        xp = pad_ref[...]
        cols = []
        for ky in range(3):
            for kx in range(3):
                cols.append(
                    xp[ky:ky + H, _PADL + kx:_PADL + kx + W, :]
                    .reshape(H * W, c))
        return jnp.concatenate(cols, axis=-1)

    # Stage zero-padded input in VMEM (halo handled in-kernel, no wrapper pad).
    xpad_ref[...] = jnp.zeros_like(xpad_ref)
    xpad_ref[1:H + 1, _PADL + 1:_PADL + 1 + W, :] = x_ref[0].astype(f32)

    # conv1 (single matmul, K = 9*cin) + folded BN1 + ReLU.
    # TODO(synk): for production channel counts, cast matmul inputs to bf16
    # (f32 accumulation) and tile Cout to 128/256-wide lane blocks.
    h = jnp.dot(im2col(xpad_ref, cin), w1_ref[...], preferred_element_type=f32)
    h = jnp.maximum(h * s1_ref[0, :] + b1_ref[0, :], 0.0)       # (H*W, cmid)

    # Stage zero-padded intermediate in VMEM (never touches HBM).
    hpad_ref[...] = jnp.zeros_like(hpad_ref)
    hpad_ref[1:H + 1, _PADL + 1:_PADL + 1 + W, :] = h.reshape(H, W, cmid)

    # conv2 (single matmul, K = 9*cmid) + folded BN2 (no ReLU, no residual —
    # the residual add in the PyTorch source is a dead typo'd assignment).
    y = jnp.dot(im2col(hpad_ref, cmid), w2_ref[...], preferred_element_type=f32)
    y = y * s2_ref[0, :] + b2_ref[0, :]

    # TODO(synk): at production Cout (>=128) present a lane-dense output tile
    # (128/256-wide last dim); with Cout=8 here the masked store is tiny.
    o_ref[0] = y.astype(o_ref.dtype)


def layer_t2_forward(x_nchw, params):
    """Layer_T2 forward. Input NCHW (PyTorch convention), output NCHW."""
    N, Cin, H, W = x_nchw.shape
    Cout = params["w1"].shape[-1]
    x = jnp.transpose(x_nchw, (0, 2, 3, 1))             # -> NHWC
    w1 = params["w1"].reshape(9 * Cin, Cout)
    w2 = params["w2"].reshape(9 * Cout, Cout)
    s1 = params["bn1_scale"].reshape(1, Cout).astype(jnp.float32)
    b1 = params["bn1_bias"].reshape(1, Cout).astype(jnp.float32)
    s2 = params["bn2_scale"].reshape(1, Cout).astype(jnp.float32)
    b2 = params["bn2_bias"].reshape(1, Cout).astype(jnp.float32)

    kernel = functools.partial(_layer_t2_kernel, H=H, W=W, cin=Cin, cmid=Cout)
    sw = W + _SCRATCH_W_EXTRA
    out = pl.pallas_call(
        kernel,
        out_shape=jax.ShapeDtypeStruct((N, H * W, Cout), x.dtype),
        grid=(N,),
        in_specs=[
            pl.BlockSpec((1, H, W, Cin), lambda n: (n, 0, 0, 0)),
            pl.BlockSpec((9 * Cin, Cout), lambda n: (0, 0)),
            pl.BlockSpec((1, Cout), lambda n: (0, 0)),
            pl.BlockSpec((1, Cout), lambda n: (0, 0)),
            pl.BlockSpec((9 * Cout, Cout), lambda n: (0, 0)),
            pl.BlockSpec((1, Cout), lambda n: (0, 0)),
            pl.BlockSpec((1, Cout), lambda n: (0, 0)),
        ],
        out_specs=pl.BlockSpec((1, H * W, Cout), lambda n: (n, 0, 0)),
        scratch_shapes=[
            pltpu.VMEM((H + 2, sw, Cin), jnp.float32),
            pltpu.VMEM((H + 2, sw, Cout), jnp.float32),
        ],
        compiler_params=pltpu.CompilerParams(
            dimension_semantics=("parallel",)),
    )(x, w1, s1, b1, w2, s2, b2)
    # TODO(synk): for production shapes (large H/W/C, esp. v7x's 64 MiB VMEM)
    # add an H-tile grid axis with a 1-row halo; at 16x16x8 a whole image per
    # grid step fits VMEM comfortably.
    out = out.reshape(N, H, W, Cout)
    return jnp.transpose(out, (0, 3, 1, 2))             # -> NCHW


def make_params(key, in_channel, out_channel):
    """Deterministic parameter init matching module shapes (synthetic)."""
    k1, k2 = jax.random.split(key, 2)
    eps = 1e-5
    w1 = jax.random.normal(k1, (3, 3, in_channel, out_channel),
                           jnp.float32) * (1.0 / (3.0 * in_channel ** 0.5))
    w2 = jax.random.normal(k2, (3, 3, out_channel, out_channel),
                           jnp.float32) * (1.0 / (3.0 * out_channel ** 0.5))
    # BatchNorm2d default init, eval mode: y = gamma*(x-mean)/sqrt(var+eps)+beta
    gamma = jnp.ones((out_channel,), jnp.float32)
    beta = jnp.zeros((out_channel,), jnp.float32)
    rmean = jnp.zeros((out_channel,), jnp.float32)
    rvar = jnp.ones((out_channel,), jnp.float32)
    scale = gamma / jnp.sqrt(rvar + eps)
    shift = beta - rmean * scale
    return dict(w1=w1, w2=w2, bn1_scale=scale, bn1_bias=shift,
                bn2_scale=scale, bn2_bias=shift)


def _reference_forward(x_nchw, params):
    """Pure-JAX reference for correctness checking."""
    x = jnp.transpose(x_nchw, (0, 2, 3, 1))

    def conv(inp, w):
        return jax.lax.conv_general_dilated(
            inp, w, window_strides=(1, 1), padding="SAME",
            dimension_numbers=("NHWC", "HWIO", "NHWC"))

    h = conv(x, params["w1"]) * params["bn1_scale"] + params["bn1_bias"]
    h = jnp.maximum(h, 0.0)
    out = conv(h, params["w2"]) * params["bn2_scale"] + params["bn2_bias"]
    return jnp.transpose(out, (0, 3, 1, 2))


if __name__ == "__main__":
    key = jax.random.PRNGKey(0)
    kx, kp = jax.random.split(key)

    N, Cin, Cout, H, W = 2, 4, 8, 16, 16
    x = jax.random.normal(kx, (N, Cin, H, W), jnp.float32)  # NCHW like PyTorch
    params = make_params(kp, Cin, Cout)

    out = layer_t2_forward(x, params)
    out = jax.block_until_ready(out)

    ref = _reference_forward(x, params)
    assert out.shape == (N, Cout, H, W)
    assert jnp.allclose(out, ref, atol=1e-4, rtol=1e-4), (
        float(jnp.max(jnp.abs(out - ref))))

    print("KERNEL_OK")
</pallas_src>

<mosaic_0001>
module attributes {stable_mosaic.version = 11 : i64} {
  func.func @_layer_t2_kernel(%arg0: i32, %arg1: memref<1x16x16x4xf32, #tpu.memory_space<vmem>>, %arg2: memref<36x8xf32, #tpu.memory_space<vmem>>, %arg3: memref<1x8xf32, #tpu.memory_space<vmem>>, %arg4: memref<1x8xf32, #tpu.memory_space<vmem>>, %arg5: memref<72x8xf32, #tpu.memory_space<vmem>>, %arg6: memref<1x8xf32, #tpu.memory_space<vmem>>, %arg7: memref<1x8xf32, #tpu.memory_space<vmem>>, %arg8: memref<1x256x8xf32, #tpu.memory_space<vmem>>, %arg9: memref<18x25x4xf32, #tpu.memory_space<vmem>>, %arg10: memref<18x25x8xf32, #tpu.memory_space<vmem>>) attributes {dimension_semantics = [#tpu.dimension_semantics<parallel>], iteration_bounds = array<i64: 2>, scalar_prefetch = 0 : i64, scratch_operands = 2 : i64, tpu.core_type = #tpu.core_type<tc>, window_params = [{transform_indices = @transform_0, window_bounds = array<i64: 1, 16, 16, 4>}, {pipeline_mode = #tpu.pipeline_mode<synchronous>, transform_indices = @transform_1, window_bounds = array<i64: 36, 8>}, {pipeline_mode = #tpu.pipeline_mode<synchronous>, transform_indices = @transform_2, window_bounds = array<i64: 1, 8>}, {pipeline_mode = #tpu.pipeline_mode<synchronous>, transform_indices = @transform_3, window_bounds = array<i64: 1, 8>}, {pipeline_mode = #tpu.pipeline_mode<synchronous>, transform_indices = @transform_4, window_bounds = array<i64: 72, 8>}, {pipeline_mode = #tpu.pipeline_mode<synchronous>, transform_indices = @transform_5, window_bounds = array<i64: 1, 8>}, {pipeline_mode = #tpu.pipeline_mode<synchronous>, transform_indices = @transform_6, window_bounds = array<i64: 1, 8>}, {transform_indices = @transform_7, window_bounds = array<i64: 1, 256, 8>}]} {
    %cst = arith.constant 0.000000e+00 : f32
    %0 = vector.broadcast %cst : f32 to vector<18x25x4xf32>
    %c0 = arith.constant 0 : index
    %c0_0 = arith.constant 0 : index
    %c0_1 = arith.constant 0 : index
    %1 = vector.load %arg9[%c0, %c0_0, %c0_1] : memref<18x25x4xf32, #tpu.memory_space<vmem>>, vector<18x25x4xf32>
    tpu.vector_store %arg9[%c0, %c0_0, %c0_1], %0 {strides = array<i32>} : memref<18x25x4xf32, #tpu.memory_space<vmem>>, vector<18x25x4xf32>,
    %c0_2 = arith.constant 0 : index
    %c0_3 = arith.constant 0 : index
    %c0_4 = arith.constant 0 : index
    %c0_5 = arith.constant 0 : index
    %2 = vector.load %arg1[%c0_2, %c0_3, %c0_4, %c0_5] : memref<1x16x16x4xf32, #tpu.memory_space<vmem>>, vector<1x16x16x4xf32>
    %3 = vector.shape_cast %2 : vector<1x16x16x4xf32> to vector<16x16x4xf32>
    %c1 = arith.constant 1 : index
    %c8 = arith.constant 8 : index
    %c0_6 = arith.constant 0 : index
    %4 = vector.load %arg9[%c1, %c8, %c0_6] : memref<18x25x4xf32, #tpu.memory_space<vmem>>, vector<16x16x4xf32>
    tpu.vector_store %arg9[%c1, %c8, %c0_6], %3 {strides = array<i32>} : memref<18x25x4xf32, #tpu.memory_space<vmem>>, vector<16x16x4xf32>,
    %c0_7 = arith.constant 0 : index
    %c0_8 = arith.constant 0 : index
    %c0_9 = arith.constant 0 : index
    %5 = vector.load %arg9[%c0_7, %c0_8, %c0_9] : memref<18x25x4xf32, #tpu.memory_space<vmem>>, vector<18x25x4xf32>
    %6 = vector.extract_strided_slice %5 {offsets = [0, 7, 0], sizes = [16, 16, 4], strides = [1, 1, 1]} : vector<18x25x4xf32> to vector<16x16x4xf32>
    %7 = vector.shape_cast %6 : vector<16x16x4xf32> to vector<256x4xf32>
    %8 = vector.extract_strided_slice %5 {offsets = [0, 8, 0], sizes = [16, 16, 4], strides = [1, 1, 1]} : vector<18x25x4xf32> to vector<16x16x4xf32>
    %9 = vector.shape_cast %8 : vector<16x16x4xf32> to vector<256x4xf32>
    %10 = vector.extract_strided_slice %5 {offsets = [0, 9, 0], sizes = [16, 16, 4], strides = [1, 1, 1]} : vector<18x25x4xf32> to vector<16x16x4xf32>
    %11 = vector.shape_cast %10 : vector<16x16x4xf32> to vector<256x4xf32>
    %12 = vector.extract_strided_slice %5 {offsets = [1, 7, 0], sizes = [16, 16, 4], strides = [1, 1, 1]} : vector<18x25x4xf32> to vector<16x16x4xf32>
    %13 = vector.shape_cast %12 : vector<16x16x4xf32> to vector<256x4xf32>
    %14 = vector.extract_strided_slice %5 {offsets = [1, 8, 0], sizes = [16, 16, 4], strides = [1, 1, 1]} : vector<18x25x4xf32> to vector<16x16x4xf32>
    %15 = vector.shape_cast %14 : vector<16x16x4xf32> to vector<256x4xf32>
    %16 = vector.extract_strided_slice %5 {offsets = [1, 9, 0], sizes = [16, 16, 4], strides = [1, 1, 1]} : vector<18x25x4xf32> to vector<16x16x4xf32>
    %17 = vector.shape_cast %16 : vector<16x16x4xf32> to vector<256x4xf32>
    %18 = vector.extract_strided_slice %5 {offsets = [2, 7, 0], sizes = [16, 16, 4], strides = [1, 1, 1]} : vector<18x25x4xf32> to vector<16x16x4xf32>
    %19 = vector.shape_cast %18 : vector<16x16x4xf32> to vector<256x4xf32>
    %20 = vector.extract_strided_slice %5 {offsets = [2, 8, 0], sizes = [16, 16, 4], strides = [1, 1, 1]} : vector<18x25x4xf32> to vector<16x16x4xf32>
    %21 = vector.shape_cast %20 : vector<16x16x4xf32> to vector<256x4xf32>
    %22 = vector.extract_strided_slice %5 {offsets = [2, 9, 0], sizes = [16, 16, 4], strides = [1, 1, 1]} : vector<18x25x4xf32> to vector<16x16x4xf32>
    %23 = vector.shape_cast %22 : vector<16x16x4xf32> to vector<256x4xf32>
    %24 = tpu.concatenate %7, %9, %11, %13, %15, %17, %19, %21, %23 in 1 : vector<256x4xf32>, vector<256x4xf32>, vector<256x4xf32>, vector<256x4xf32>, vector<256x4xf32>, vector<256x4xf32>, vector<256x4xf32>, vector<256x4xf32>, vector<256x4xf32> -> vector<256x36xf32>
    %c0_10 = arith.constant 0 : index
    %c0_11 = arith.constant 0 : index
    %25 = vector.load %arg2[%c0_10, %c0_11] : memref<36x8xf32, #tpu.memory_space<vmem>>, vector<36x8xf32>
    %cst_12 = arith.constant dense<0.000000e+00> : vector<256x8xf32>
    %26 = tpu.matmul %24, %25, %cst_12 {dimension_numbers = #tpu.dot_dimension_numbers<[1], [0], [0], [1], [0, 0, 1, 1], [], []>} : vector<256x36xf32>, vector<36x8xf32>, vector<256x8xf32> -> vector<256x8xf32>
    %c0_13 = arith.constant 0 : index
    %c0_14 = arith.constant 0 : index
    %27 = vector.load %arg3[%c0_13, %c0_14] : memref<1x8xf32, #tpu.memory_space<vmem>>, vector<1x8xf32>
    %28 = vector.shape_cast %27 : vector<1x8xf32> to vector<8xf32>
    %29 = vector.shape_cast %28 : vector<8xf32> to vector<1x8xf32>
    %30 = vector.broadcast %29 : vector<1x8xf32> to vector<256x8xf32>
    %31 = arith.mulf %26, %30 : vector<256x8xf32>
    %c0_15 = arith.constant 0 : index
    %c0_16 = arith.constant 0 : index
    %32 = vector.load %arg4[%c0_15, %c0_16] : memref<1x8xf32, #tpu.memory_space<vmem>>, vector<1x8xf32>
    %33 = vector.shape_cast %32 : vector<1x8xf32> to vector<8xf32>
    %34 = vector.shape_cast %33 : vector<8xf32> to vector<1x8xf32>
    %35 = vector.broadcast %34 : vector<1x8xf32> to vector<256x8xf32>
    %36 = arith.addf %31, %35 : vector<256x8xf32>
    %cst_17 = arith.constant 0.000000e+00 : f32
    %37 = vector.broadcast %cst_17 : f32 to vector<256x8xf32>
    %38 = arith.maximumf %36, %37 : vector<256x8xf32>
    %cst_18 = arith.constant 0.000000e+00 : f32
    %39 = vector.broadcast %cst_18 : f32 to vector<18x25x8xf32>
    %c0_19 = arith.constant 0 : index
    %c0_20 = arith.constant 0 : index
    %c0_21 = arith.constant 0 : index
    %40 = vector.load %arg10[%c0_19, %c0_20, %c0_21] : memref<18x25x8xf32, #tpu.memory_space<vmem>>, vector<18x25x8xf32>
    tpu.vector_store %arg10[%c0_19, %c0_20, %c0_21], %39 {strides = array<i32>} : memref<18x25x8xf32, #tpu.memory_space<vmem>>, vector<18x25x8xf32>,
    %41 = vector.shape_cast %38 : vector<256x8xf32> to vector<16x16x8xf32>
    %c1_22 = arith.constant 1 : index
    %c8_23 = arith.constant 8 : index
    %c0_24 = arith.constant 0 : index
    %42 = vector.load %arg10[%c1_22, %c8_23, %c0_24] : memref<18x25x8xf32, #tpu.memory_space<vmem>>, vector<16x16x8xf32>
    tpu.vector_store %arg10[%c1_22, %c8_23, %c0_24], %41 {strides = array<i32>} : memref<18x25x8xf32, #tpu.memory_space<vmem>>, vector<16x16x8xf32>,
    %c0_25 = arith.constant 0 : index
    %c0_26 = arith.constant 0 : index
    %c0_27 = arith.constant 0 : index
    %43 = vector.load %arg10[%c0_25, %c0_26, %c0_27] : memref<18x25x8xf32, #tpu.memory_space<vmem>>, vector<18x25x8xf32>
    %44 = vector.extract_strided_slice %43 {offsets = [0, 7, 0], sizes = [16, 16, 8], strides = [1, 1, 1]} : vector<18x25x8xf32> to vector<16x16x8xf32>
    %45 = vector.shape_cast %44 : vector<16x16x8xf32> to vector<256x8xf32>
    %46 = vector.extract_strided_slice %43 {offsets = [0, 8, 0], sizes = [16, 16, 8], strides = [1, 1, 1]} : vector<18x25x8xf32> to vector<16x16x8xf32>
    %47 = vector.shape_cast %46 : vector<16x16x8xf32> to vector<256x8xf32>
    %48 = vector.extract_strided_slice %43 {offsets = [0, 9, 0], sizes = [16, 16, 8], strides = [1, 1, 1]} : vector<18x25x8xf32> to vector<16x16x8xf32>
    %49 = vector.shape_cast %48 : vector<16x16x8xf32> to vector<256x8xf32>
    %50 = vector.extract_strided_slice %43 {offsets = [1, 7, 0], sizes = [16, 16, 8], strides = [1, 1, 1]} : vector<18x25x8xf32> to vector<16x16x8xf32>
    %51 = vector.shape_cast %50 : vector<16x16x8xf32> to vector<256x8xf32>
    %52 = vector.extract_strided_slice %43 {offsets = [1, 8, 0], sizes = [16, 16, 8], strides = [1, 1, 1]} : vector<18x25x8xf32> to vector<16x16x8xf32>
    %53 = vector.shape_cast %52 : vector<16x16x8xf32> to vector<256x8xf32>
    %54 = vector.extract_strided_slice %43 {offsets = [1, 9, 0], sizes = [16, 16, 8], strides = [1, 1, 1]} : vector<18x25x8xf32> to vector<16x16x8xf32>
    %55 = vector.shape_cast %54 : vector<16x16x8xf32> to vector<256x8xf32>
    %56 = vector.extract_strided_slice %43 {offsets = [2, 7, 0], sizes = [16, 16, 8], strides = [1, 1, 1]} : vector<18x25x8xf32> to vector<16x16x8xf32>
    %57 = vector.shape_cast %56 : vector<16x16x8xf32> to vector<256x8xf32>
    %58 = vector.extract_strided_slice %43 {offsets = [2, 8, 0], sizes = [16, 16, 8], strides = [1, 1, 1]} : vector<18x25x8xf32> to vector<16x16x8xf32>
    %59 = vector.shape_cast %58 : vector<16x16x8xf32> to vector<256x8xf32>
    %60 = vector.extract_strided_slice %43 {offsets = [2, 9, 0], sizes = [16, 16, 8], strides = [1, 1, 1]} : vector<18x25x8xf32> to vector<16x16x8xf32>
    %61 = vector.shape_cast %60 : vector<16x16x8xf32> to vector<256x8xf32>
    %62 = tpu.concatenate %45, %47, %49, %51, %53, %55, %57, %59, %61 in 1 : vector<256x8xf32>, vector<256x8xf32>, vector<256x8xf32>, vector<256x8xf32>, vector<256x8xf32>, vector<256x8xf32>, vector<256x8xf32>, vector<256x8xf32>, vector<256x8xf32> -> vector<256x72xf32>
    %c0_28 = arith.constant 0 : index
    %c0_29 = arith.constant 0 : index
    %63 = vector.load %arg5[%c0_28, %c0_29] : memref<72x8xf32, #tpu.memory_space<vmem>>, vector<72x8xf32>
    %cst_30 = arith.constant dense<0.000000e+00> : vector<256x8xf32>
    %64 = tpu.matmul %62, %63, %cst_30 {dimension_numbers = #tpu.dot_dimension_numbers<[1], [0], [0], [1], [0, 0, 1, 1], [], []>} : vector<256x72xf32>, vector<72x8xf32>, vector<256x8xf32> -> vector<256x8xf32>
    %c0_31 = arith.constant 0 : index
    %c0_32 = arith.constant 0 : index
    %65 = vector.load %arg6[%c0_31, %c0_32] : memref<1x8xf32, #tpu.memory_space<vmem>>, vector<1x8xf32>
    %66 = vector.shape_cast %65 : vector<1x8xf32> to vector<8xf32>
    %67 = vector.shape_cast %66 : vector<8xf32> to vector<1x8xf32>
    %68 = vector.broadcast %67 : vector<1x8xf32> to vector<256x8xf32>
    %69 = arith.mulf %64, %68 : vector<256x8xf32>
    %c0_33 = arith.constant 0 : index
    %c0_34 = arith.constant 0 : index
    %70 = vector.load %arg7[%c0_33, %c0_34] : memref<1x8xf32, #tpu.memory_space<vmem>>, vector<1x8xf32>
    %71 = vector.shape_cast %70 : vector<1x8xf32> to vector<8xf32>
    %72 = vector.shape_cast %71 : vector<8xf32> to vector<1x8xf32>
    %73 = vector.broadcast %72 : vector<1x8xf32> to vector<256x8xf32>
    %74 = arith.addf %69, %73 : vector<256x8xf32>
    %c0_35 = arith.constant 0 : index
    %c0_36 = arith.constant 0 : index
    %c0_37 = arith.constant 0 : index
    %75 = vector.load %arg8[%c0_35, %c0_36, %c0_37] : memref<1x256x8xf32, #tpu.memory_space<vmem>>, vector<1x256x8xf32>
    %76 = vector.shape_cast %75 : vector<1x256x8xf32> to vector<256x8xf32>
    %77 = vector.shape_cast %74 : vector<256x8xf32> to vector<1x256x8xf32>
    tpu.vector_store %arg8[%c0_35, %c0_36, %c0_37], %77 {strides = array<i32>} : memref<1x256x8xf32, #tpu.memory_space<vmem>>, vector<1x256x8xf32>,
    return
  }
  func.func @transform_0(%arg0: i32) -> (i32, i32, i32, i32) {
    %c0_i32 = arith.constant 0 : i32
    %c0_i32_0 = arith.constant 0 : i32
    %c0_i32_1 = arith.constant 0 : i32
    %c0_i32_2 = arith.constant 0 : i32
    return %arg0, %c0_i32, %c0_i32_0, %c0_i32_1 : i32, i32, i32, i32
  }
  func.func @transform_1(%arg0: i32) -> (i32, i32) {
    %c0_i32 = arith.constant 0 : i32
    %c0_i32_0 = arith.constant 0 : i32
    %c0_i32_1 = arith.constant 0 : i32
    return %c0_i32, %c0_i32_0 : i32, i32
  }
  func.func @transform_2(%arg0: i32) -> (i32, i32) {
    %c0_i32 = arith.constant 0 : i32
    %c0_i32_0 = arith.constant 0 : i32
    %c0_i32_1 = arith.constant 0 : i32
    return %c0_i32, %c0_i32_0 : i32, i32
  }
  func.func @transform_3(%arg0: i32) -> (i32, i32) {
    %c0_i32 = arith.constant 0 : i32
    %c0_i32_0 = arith.constant 0 : i32
    %c0_i32_1 = arith.constant 0 : i32
    return %c0_i32, %c0_i32_0 : i32, i32
  }
  func.func @transform_4(%arg0: i32) -> (i32, i32) {
    %c0_i32 = arith.constant 0 : i32
    %c0_i32_0 = arith.constant 0 : i32
    %c0_i32_1 = arith.constant 0 : i32
    return %c0_i32, %c0_i32_0 : i32, i32
  }
  func.func @transform_5(%arg0: i32) -> (i32, i32) {
    %c0_i32 = arith.constant 0 : i32
    %c0_i32_0 = arith.constant 0 : i32
    %c0_i32_1 = arith.constant 0 : i32
    return %c0_i32, %c0_i32_0 : i32, i32
  }
  func.func @transform_6(%arg0: i32) -> (i32, i32) {
    %c0_i32 = arith.constant 0 : i32
    %c0_i32_0 = arith.constant 0 : i32
    %c0_i32_1 = arith.constant 0 : i32
    return %c0_i32, %c0_i32_0 : i32, i32
  }
  func.func @transform_7(%arg0: i32) -> (i32, i32, i32) {
    %c0_i32 = arith.constant 0 : i32
    %c0_i32_0 = arith.constant 0 : i32
    %c0_i32_1 = arith.constant 0 : i32
    return %arg0, %c0_i32, %c0_i32_0 : i32, i32, i32
  }
}

</mosaic_0001>

<llo_original>
// kernel: tpu_custom_call.1
$region0: #{tpu_custom_call.1}
  #allocation0 [shape = 'u32[]', space=smem, size = 0x4, offset = 0x4, fixed_abs, tag = 'smem constant byte address 0x4 - core index']
  #allocation1 [shape = 'u32[144,128]{1,0:T(1,128)}', space=vmem, size = 0x12000, scoped, tag = 'internal scratch']
  #allocation2 [shape = 'f32[18,25,4]{2,1,0:T(8,128)}', space=vmem, size = 0x48000, scoped, tag = 'scratch operand']
  #allocation3 [shape = 'f32[18,25,8]{2,1,0:T(8,128)}', space=vmem, size = 0x48000, scoped, tag = 'scratch operand']
  %s0 = inlined_call_operand.vmem [shape: f32[2,16,16,4], index: 0, kind: input, shape index: {}]
  %s1 = inlined_call_operand.vmem [shape: f32[36,8], index: 1, kind: input, shape index: {}]
  %s2 = inlined_call_operand.vmem [shape: f32[1,8], index: 2, kind: input, shape index: {}]
  %s3 = inlined_call_operand.vmem [shape: f32[1,8], index: 3, kind: input, shape index: {}]
  %s4 = inlined_call_operand.vmem [shape: f32[72,8], index: 4, kind: input, shape index: {}]
  %s5 = inlined_call_operand.vmem [shape: f32[1,8], index: 5, kind: input, shape index: {}]
  %s6 = inlined_call_operand.vmem [shape: f32[1,8], index: 6, kind: input, shape index: {}]
  %s7 = inlined_call_operand.vmem [shape: f32[2,256,8], index: 7, kind: output, shape index: {}]
  %s8 = sld [smem:[#allocation0]]
  $region61: #{tpu_custom_call.1} parent=0
    _
  %s10 = ssub.s32 1, %s8
  %s11 = scalar_select 0, %s10, %s8
  loop: start=0, step=1, limit=4
  $region2: #{tpu_custom_call.1} parent=0 // loop_pre_header
    _
  $region3: #{tpu_custom_call.1} parent=0 // loop_header
    %s13 = sphi 0, %s17
    %p14 = scmp.ge.s32.totalorder %s13, 4
    %s23 = sphi 0, %s25
    %s26 = sphi 0, %s23
    %s27 = sphi 0, %s26
    %s43 = sphi 0, %s27
    %s47 = sphi 0, %s47
    %s49 = sphi 0, %s47
    %s50 = sphi 0, %s49
    %s64 = sphi 0, %s50
    %s68 = sphi 0, %s68
    %s70 = sphi 0, %s68
    %s71 = sphi 0, %s70
    %s85 = sphi 0, %s71
    %s89 = sphi 0, %s89
    %s91 = sphi 0, %s89
    %s92 = sphi 0, %s91
    %s106 = sphi 0, %s92
    %s110 = sphi 0, %s110
    %s112 = sphi 0, %s110
    %s113 = sphi 0, %s112
    %s127 = sphi 0, %s113
    %s131 = sphi 0, %s131
    %s133 = sphi 0, %s131
    %s134 = sphi 0, %s133
    %s148 = sphi 0, %s134
    %s152 = sphi 0, %s152
    %s154 = sphi 0, %s152
    %s155 = sphi 0, %s154
    %s169 = sphi 0, %s155
    %s175 = sphi 0, %s177
    %s178 = sphi 0, %s175
    %s179 = sphi 0, %s178
    %s195 = sphi 0, %s179
  $region4: #{tpu_custom_call.1} parent=0 // loop_header_branch
    %16 = sbr.rel (%p14) target = $region8
  $region5: #{tpu_custom_call.1} parent=0 // loop_body
    %s18 = ssub.s32 %s13, 1
    %s19 = ssub.s32 %s13, 2
    %s20 = sadd.s32 %s13, 1
    %s21 = ssub.s32 %s13, %s20
    %p22 = scmp.eq.s32.totalorder %s21, 0
    %s24 = sadd.s32 %s23, 1
    %s25 = scalar_select %p22, %s23, %s24
    %p28 = pneg %p22
    %p29 = scmp.eq.s32.totalorder %s13, 1
    %p30 = por %p28, %p29
    %p31 = scmp.ne.s32.totalorder %s23, %s26
    %p32 = scmp.eq.s32.totalorder %s13, 0
    %p33 = por %p31, %p32
    %p34 = scmp.ne.s32.totalorder %s23, %s26
    %p35 = scmp.eq.s32.totalorder %s18, 1
    %p36 = por %p34, %p35
    %p37 = scmp.ne.s32.totalorder %s26, %s27
    %p38 = scmp.eq.s32.totalorder %s18, 0
    %p39 = por %p37, %p38
    %p40 = scmp.ne.s32.totalorder %s26, %s27
    %p41 = scmp.eq.s32.totalorder %s19, 1
    %p42 = por %p40, %p41
    %p44 = scmp.ne.s32.totalorder %s27, %s43
    %p45 = scmp.eq.s32.totalorder %s19, 0
    %p46 = por %p44, %p45
    %s48 = sadd.s32 %s47, 1
    %p51 = scmp.eq.s32.totalorder %s13, 1
    %p52 = scmp.ne.s32.totalorder %s47, %s49
    %p53 = scmp.eq.s32.totalorder %s13, 0
    %p54 = por %p52, %p53
    %p55 = scmp.ne.s32.totalorder %s47, %s49
    %p56 = scmp.eq.s32.totalorder %s18, 1
    %p57 = por %p55, %p56
    %p58 = scmp.ne.s32.totalorder %s49, %s50
    %p59 = scmp.eq.s32.totalorder %s18, 0
    %p60 = por %p58, %p59
    %p61 = scmp.ne.s32.totalorder %s49, %s50
    %p62 = scmp.eq.s32.totalorder %s19, 1
    %p63 = por %p61, %p62
    %p65 = scmp.ne.s32.totalorder %s50, %s64
    %p66 = scmp.eq.s32.totalorder %s19, 0
    %p67 = por %p65, %p66
    %s69 = sadd.s32 %s68, 1
    %p72 = scmp.eq.s32.totalorder %s13, 1
    %p73 = scmp.ne.s32.totalorder %s68, %s70
    %p74 = scmp.eq.s32.totalorder %s13, 0
    %p75 = por %p73, %p74
    %p76 = scmp.ne.s32.totalorder %s68, %s70
    %p77 = scmp.eq.s32.totalorder %s18, 1
    %p78 = por %p76, %p77
    %p79 = scmp.ne.s32.totalorder %s70, %s71
    %p80 = scmp.eq.s32.totalorder %s18, 0
    %p81 = por %p79, %p80
    %p82 = scmp.ne.s32.totalorder %s70, %s71
    %p83 = scmp.eq.s32.totalorder %s19, 1
    %p84 = por %p82, %p83
    %p86 = scmp.ne.s32.totalorder %s71, %s85
    %p87 = scmp.eq.s32.totalorder %s19, 0
    %p88 = por %p86, %p87
    %s90 = sadd.s32 %s89, 1
    %p93 = scmp.eq.s32.totalorder %s13, 1
    %p94 = scmp.ne.s32.totalorder %s89, %s91
    %p95 = scmp.eq.s32.totalorder %s13, 0
    %p96 = por %p94, %p95
    %p97 = scmp.ne.s32.totalorder %s89, %s91
    %p98 = scmp.eq.s32.totalorder %s18, 1
    %p99 = por %p97, %p98
    %p100 = scmp.ne.s32.totalorder %s91, %s92
    %p101 = scmp.eq.s32.totalorder %s18, 0
    %p102 = por %p100, %p101
    %p103 = scmp.ne.s32.totalorder %s91, %s92
    %p104 = scmp.eq.s32.totalorder %s19, 1
    %p105 = por %p103, %p104
    %p107 = scmp.ne.s32.totalorder %s92, %s106
    %p108 = scmp.eq.s32.totalorder %s19, 0
    %p109 = por %p107, %p108
    %s111 = sadd.s32 %s110, 1
    %p114 = scmp.eq.s32.totalorder %s13, 1
    %p115 = scmp.ne.s32.totalorder %s110, %s112
    %p116 = scmp.eq.s32.totalorder %s13, 0
    %p117 = por %p115, %p116
    %p118 = scmp.ne.s32.totalorder %s110, %s112
    %p119 = scmp.eq.s32.totalorder %s18, 1
    %p120 = por %p118, %p119
    %p121 = scmp.ne.s32.totalorder %s112, %s113
    %p122 = scmp.eq.s32.totalorder %s18, 0
    %p123 = por %p121, %p122
    %p124 = scmp.ne.s32.totalorder %s112, %s113
    %p125 = scmp.eq.s32.totalorder %s19, 1
    %p126 = por %p124, %p125
    %p128 = scmp.ne.s32.totalorder %s113, %s127
    %p129 = scmp.eq.s32.totalorder %s19, 0
    %p130 = por %p128, %p129
    %s132 = sadd.s32 %s131, 1
    %p135 = scmp.eq.s32.totalorder %s13, 1
    %p136 = scmp.ne.s32.totalorder %s131, %s133
    %p137 = scmp.eq.s32.totalorder %s13, 0
    %p138 = por %p136, %p137
    %p139 = scmp.ne.s32.totalorder %s131, %s133
    %p140 = scmp.eq.s32.totalorder %s18, 1
    %p141 = por %p139, %p140
    %p142 = scmp.ne.s32.totalorder %s133, %s134
    %p143 = scmp.eq.s32.totalorder %s18, 0
    %p144 = por %p142, %p143
    %p145 = scmp.ne.s32.totalorder %s133, %s134
    %p146 = scmp.eq.s32.totalorder %s19, 1
    %p147 = por %p145, %p146
    %p149 = scmp.ne.s32.totalorder %s134, %s148
    %p150 = scmp.eq.s32.totalorder %s19, 0
    %p151 = por %p149, %p150
    %s153 = sadd.s32 %s152, 1
    %p156 = scmp.eq.s32.totalorder %s13, 1
    %p157 = scmp.ne.s32.totalorder %s152, %s154
    %p158 = scmp.eq.s32.totalorder %s13, 0
    %p159 = por %p157, %p158
    %p160 = scmp.ne.s32.totalorder %s152, %s154
    %p161 = scmp.eq.s32.totalorder %s18, 1
    %p162 = por %p160, %p161
    %p163 = scmp.ne.s32.totalorder %s154, %s155
    %p164 = scmp.eq.s32.totalorder %s18, 0
    %p165 = por %p163, %p164
    %p166 = scmp.ne.s32.totalorder %s154, %s155
    %p167 = scmp.eq.s32.totalorder %s19, 1
    %p168 = por %p166, %p167
    %p170 = scmp.ne.s32.totalorder %s155, %s169
    %p171 = scmp.eq.s32.totalorder %s19, 0
    %p172 = por %p170, %p171
    %s173 = ssub.s32 %s13, %s20
    %p174 = scmp.eq.s32.totalorder %s173, 0
    %s176 = sadd.s32 %s175, 1
    %s177 = scalar_select %p174, %s175, %s176
    %p180 = pneg %p174
    %p181 = scmp.eq.s32.totalorder %s13, 1
    %p182 = por %p180, %p181
    %p183 = scmp.ne.s32.totalorder %s175, %s178
    %p184 = scmp.eq.s32.totalorder %s13, 0
    %p185 = por %p183, %p184
    %p186 = scmp.ne.s32.totalorder %s175, %s178
    %p187 = scmp.eq.s32.totalorder %s18, 1
    %p188 = por %p186, %p187
    %p189 = scmp.ne.s32.totalorder %s178, %s179
    %p190 = scmp.eq.s32.totalorder %s18, 0
    %p191 = por %p189, %p190
    %p192 = scmp.ne.s32.totalorder %s178, %s179
    %p193 = scmp.eq.s32.totalorder %s19, 1
    %p194 = por %p192, %p193
    %p196 = scmp.ne.s32.totalorder %s179, %s195
    %p197 = scmp.eq.s32.totalorder %s19, 0
    %p198 = por %p196, %p197
    %p199 = scmp.le.s32.totalorder 1, %s13
    %p200 = scmp.lt.s32.totalorder %s13, 3
    %p201 = pnand %p199, %p200
    %p202 = pneg %p201
    // Predicated region
    $region9: #{tpu_custom_call.1} parent=5 // pred_check
      _
    $region10: #{tpu_custom_call.1} parent=5 // pred_check_branch
      %204 = sbr.rel (%p201) target = $region12
    $region11: #{tpu_custom_call.1} parent=5 // pred_region
      %s205 = ssub.s32 %s13, 1
      // Predicated region
      $region13: #{tpu_custom_call.1} parent=11 // pred_check
        %p206 = pneg %p60
      $region14: #{tpu_custom_call.1} parent=11 // pred_check_branch
        %208 = sbr.rel (%p206) target = $region16
      $region15: #{tpu_custom_call.1} parent=11 // pred_region
        _
      $region16: #{tpu_custom_call.1} parent=11 // pred_fallthru
        _
      // Predicated region
      $region17: #{tpu_custom_call.1} parent=11 // pred_check
        %p209 = pneg %p81
      $region18: #{tpu_custom_call.1} parent=11 // pred_check_branch
        %211 = sbr.rel (%p209) target = $region20
      $region19: #{tpu_custom_call.1} parent=11 // pred_region
        _
      $region20: #{tpu_custom_call.1} parent=11 // pred_fallthru
        _
      // Predicated region
      $region21: #{tpu_custom_call.1} parent=11 // pred_check
        %p212 = pneg %p102
      $region22: #{tpu_custom_call.1} parent=11 // pred_check_branch
        %214 = sbr.rel (%p212) target = $region24
      $region23: #{tpu_custom_call.1} parent=11 // pred_region
        _
      $region24: #{tpu_custom_call.1} parent=11 // pred_fallthru
        _
      // Predicated region
      $region25: #{tpu_custom_call.1} parent=11 // pred_check
        %p215 = pneg %p123
      $region26: #{tpu_custom_call.1} parent=11 // pred_check_branch
        %217 = sbr.rel (%p215) target = $region28
      $region27: #{tpu_custom_call.1} parent=11 // pred_region
        _
      $region28: #{tpu_custom_call.1} parent=11 // pred_fallthru
        _
      // Predicated region
      $region29: #{tpu_custom_call.1} parent=11 // pred_check
        %p218 = pneg %p144
      $region30: #{tpu_custom_call.1} parent=11 // pred_check_branch
        %220 = sbr.rel (%p218) target = $region32
      $region31: #{tpu_custom_call.1} parent=11 // pred_region
        _
      $region32: #{tpu_custom_call.1} parent=11 // pred_fallthru
        _
      // Predicated region
      $region33: #{tpu_custom_call.1} parent=11 // pred_check
        %p221 = pneg %p165
      $region34: #{tpu_custom_call.1} parent=11 // pred_check_branch
        %223 = sbr.rel (%p221) target = $region36
      $region35: #{tpu_custom_call.1} parent=11 // pred_region
        _
      $region36: #{tpu_custom_call.1} parent=11 // pred_fallthru
        _
    $region12: #{tpu_custom_call.1} parent=5 // pred_fallthru
      _
    %p224 = scmp.lt.s32.totalorder %s13, 2
    // Predicated region
    $region37: #{tpu_custom_call.1} parent=5 // pred_check
      %p225 = pneg %p224
    $region38: #{tpu_custom_call.1} parent=5 // pred_check_branch
      %227 = sbr.rel (%p225) target = $region40
    $region39: #{tpu_custom_call.1} parent=5 // pred_region
      // Predicated region
      $region41: #{tpu_custom_call.1} parent=39 // pred_check
        %p228 = pneg %p33
      $region42: #{tpu_custom_call.1} parent=39 // pred_check_branch
        %230 = sbr.rel (%p228) target = $region44
      $region43: #{tpu_custom_call.1} parent=39 // pred_region
        %p231 = scmp.lt.s32.totalorder %s13, 1
        %s232 = scalar_select %p231, %s13, 1
        %s233 = smul.addr %s232, 32
        %s234 = smul.addr %s233, 8
        %s235 = scalar_lea.vmem %s0, %s234
      $region44: #{tpu_custom_call.1} parent=39 // pred_fallthru
        _
    $region40: #{tpu_custom_call.1} parent=5 // pred_fallthru
      _
    %p236 = scmp.le.s32.totalorder 1, %s13
    %p237 = scmp.lt.s32.totalorder %s13, 3
    %p238 = pnand %p236, %p237
    %p239 = pneg %p238
    // Predicated region
    $region45: #{tpu_custom_call.1} parent=5 // pred_check
      _
    $region46: #{tpu_custom_call.1} parent=5 // pred_check_branch
      %241 = sbr.rel (%p238) target = $region48
    $region47: #{tpu_custom_call.1} parent=5 // pred_region
      %s242 = ssub.s32 %s13, 1
      %p243 = scmp.lt.s32.totalorder %s18, 1
      %s244 = scalar_select %p243, %s18, 1
      %s245 = smul.addr %s244, 32
      %s246 = smul.addr %s245, 8
      %s247 = scalar_lea.vmem %s0, %s246
      %p248 = pneg %p39
      %p249 = pneg %p36
      %p250 = pneg %p60
      %p251 = pneg %p57
      %p252 = pneg %p81
      %p253 = pneg %p78
      %p254 = pneg %p102
      %p255 = pneg %p99
      %p256 = pneg %p123
      %p257 = pneg %p120
      %p258 = pneg %p144
      %p259 = pneg %p141
      %p260 = pneg %p165
      %p261 = pneg %p162
      %p262 = pneg %p191
      %p263 = pneg %p188
      %p264 = scmp.lt.s32.totalorder %s18, 1
      %s265 = scalar_select %p264, %s18, 1
      %s266 = smul.addr %s265, 32
      %s267 = smul.addr %s266, 8
      %s268 = scalar_lea.vmem %s7, %s267
      %p269 = scmp.lt.s32.totalorder %s18, 1
      %s270 = scalar_select %p269, %s18, 1
      %s271 = smul.addr %s270, 32
      %s272 = smul.addr %s271, 8
      %s273 = scalar_lea.vmem %s0, %s272
      %p274 = scmp.lt.s32.totalorder %s18, 1
      %s275 = scalar_select %p274, %s18, 1
      %s276 = smul.addr %s275, 32
      %s277 = smul.addr %s276, 8
      %s278 = scalar_lea.vmem %s7, %s277
      %vm279 = vcmask 31744
      %280 = vst.msk [vmem:[#allocation2] sm:$0xff] %vm279, 0.0
      %281 = vst.msk [vmem:[#allocation2 + $0x8] sm:$0xff] %vm279, 0.0
      %282 = vst.msk [vmem:[#allocation2 + $0x10] sm:$0xff] %vm279, 0.0
      %vm283 = vcmask 24576
      %284 = vst.msk [vmem:[#allocation2 + $0x18] sm:$0x1] %vm283, 0.0
      %285 = vst.msk [vmem:[#allocation2 + $0x20] sm:$0xff] %vm279, 0.0
      %286 = vst.msk [vmem:[#allocation2 + $0x28] sm:$0xff] %vm279, 0.0
      %287 = vst.msk [vmem:[#allocation2 + $0x30] sm:$0xff] %vm279, 0.0
      %288 = vst.msk [vmem:[#allocation2 + $0x38] sm:$0x1] %vm283, 0.0
      %289 = vst.msk [vmem:[#allocation2 + $0x40] sm:$0xff] %vm279, 0.0
      %290 = vst.msk [vmem:[#allocation2 + $0x48] sm:$0xff] %vm279, 0.0
      %291 = vst.msk [vmem:[#allocation2 + $0x50] sm:$0xff] %vm279, 0.0
      %292 = vst.msk [vmem:[#allocation2 + $0x58] sm:$0x1] %vm283, 0.0
      %293 = vst.msk [vmem:[#allocation2 + $0x60] sm:$0xff] %vm279, 0.0
      %294 = vst.msk [vmem:[#allocation2 + $0x68] sm:$0xff] %vm279, 0.0
      %295 = vst.msk [vmem:[#allocation2 + $0x70] sm:$0xff] %vm279, 0.0
      %296 = vst.msk [vmem:[#allocation2 + $0x78] sm:$0x1] %vm283, 0.0
      %297 = vst.msk [vmem:[#allocation2 + $0x80] sm:$0xff] %vm279, 0.0
      %298 = vst.msk [vmem:[#allocation2 + $0x88] sm:$0xff] %vm279, 0.0
      %299 = vst.msk [vmem:[#allocation2 + $0x90] sm:$0xff] %vm279, 0.0
      %300 = vst.msk [vmem:[#allocation2 + $0x98] sm:$0x1] %vm283, 0.0
      %301 = vst.msk [vmem:[#allocation2 + $0xa0] sm:$0xff] %vm279, 0.0
      %302 = vst.msk [vmem:[#allocation2 + $0xa8] sm:$0xff] %vm279, 0.0
      %303 = vst.msk [vmem:[#allocation2 + $0xb0] sm:$0xff] %vm279, 0.0
      %304 = vst.msk [vmem:[#allocation2 + $0xb8] sm:$0x1] %vm283, 0.0
      %305 = vst.msk [vmem:[#allocation2 + $0xc0] sm:$0xff] %vm279, 0.0
      %306 = vst.msk [vmem:[#allocation2 + $0xc8] sm:$0xff] %vm279, 0.0
      %307 = vst.msk [vmem:[#allocation2 + $0xd0] sm:$0xff] %vm279, 0.0
      %308 = vst.msk [vmem:[#allocation2 + $0xd8] sm:$0x1] %vm283, 0.0
      %309 = vst.msk [vmem:[#allocation2 + $0xe0] sm:$0xff] %vm279, 0.0
      %310 = vst.msk [vmem:[#allocation2 + $0xe8] sm:$0xff] %vm279, 0.0
      %311 = vst.msk [vmem:[#allocation2 + $0xf0] sm:$0xff] %vm279, 0.0
      %312 = vst.msk [vmem:[#allocation2 + $0xf8] sm:$0x1] %vm283, 0.0
      %313 = vst.msk [vmem:[#allocation2 + $0x100] sm:$0xff] %vm279, 0.0
      %314 = vst.msk [vmem:[#allocation2 + $0x108] sm:$0xff] %vm279, 0.0
      %315 = vst.msk [vmem:[#allocation2 + $0x110] sm:$0xff] %vm279, 0.0
      %316 = vst.msk [vmem:[#allocation2 + $0x118] sm:$0x1] %vm283, 0.0
      %317 = vst.msk [vmem:[#allocation2 + $0x120] sm:$0xff] %vm279, 0.0
      %318 = vst.msk [vmem:[#allocation2 + $0x128] sm:$0xff] %vm279, 0.0
      %319 = vst.msk [vmem:[#allocation2 + $0x130] sm:$0xff] %vm279, 0.0
      %320 = vst.msk [vmem:[#allocation2 + $0x138] sm:$0x1] %vm283, 0.0
      %321 = vst.msk [vmem:[#allocation2 + $0x140] sm:$0xff] %vm279, 0.0
      %322 = vst.msk [vmem:[#allocation2 + $0x148] sm:$0xff] %vm279, 0.0
      %323 = vst.msk [vmem:[#allocation2 + $0x150] sm:$0xff] %vm279, 0.0
      %324 = vst.msk [vmem:[#allocation2 + $0x158] sm:$0x1] %vm283, 0.0
      %325 = vst.msk [vmem:[#allocation2 + $0x160] sm:$0xff] %vm279, 0.0
      %326 = vst.msk [vmem:[#allocation2 + $0x168] sm:$0xff] %vm279, 0.0
      %327 = vst.msk [vmem:[#allocation2 + $0x170] sm:$0xff] %vm279, 0.0
      %328 = vst.msk [vmem:[#allocation2 + $0x178] sm:$0x1] %vm283, 0.0
      %329 = vst.msk [vmem:[#allocation2 + $0x180] sm:$0xff] %vm279, 0.0
      %330 = vst.msk [vmem:[#allocation2 + $0x188] sm:$0xff] %vm279, 0.0
      %331 = vst.msk [vmem:[#allocation2 + $0x190] sm:$0xff] %vm279, 0.0
      %332 = vst.msk [vmem:[#allocation2 + $0x198] sm:$0x1] %vm283, 0.0
      %333 = vst.msk [vmem:[#allocation2 + $0x1a0] sm:$0xff] %vm279, 0.0
      %334 = vst.msk [vmem:[#allocation2 + $0x1a8] sm:$0xff] %vm279, 0.0
      %335 = vst.msk [vmem:[#allocation2 + $0x1b0] sm:$0xff] %vm279, 0.0
      %336 = vst.msk [vmem:[#allocation2 + $0x1b8] sm:$0x1] %vm283, 0.0
      %337 = vst.msk [vmem:[#allocation2 + $0x1c0] sm:$0xff] %vm279, 0.0
      %338 = vst.msk [vmem:[#allocation2 + $0x1c8] sm:$0xff] %vm279, 0.0
      %339 = vst.msk [vmem:[#allocation2 + $0x1d0] sm:$0xff] %vm279, 0.0
      %340 = vst.msk [vmem:[#allocation2 + $0x1d8] sm:$0x1] %vm283, 0.0
      %341 = vst.msk [vmem:[#allocation2 + $0x1e0] sm:$0xff] %vm279, 0.0
      %342 = vst.msk [vmem:[#allocation2 + $0x1e8] sm:$0xff] %vm279, 0.0
      %343 = vst.msk [vmem:[#allocation2 + $0x1f0] sm:$0xff] %vm279, 0.0
      %344 = vst.msk [vmem:[#allocation2 + $0x1f8] sm:$0x1] %vm283, 0.0
      %345 = vst.msk [vmem:[#allocation2 + $0x200] sm:$0xff] %vm279, 0.0
      %346 = vst.msk [vmem:[#allocation2 + $0x208] sm:$0xff] %vm279, 0.0
      %347 = vst.msk [vmem:[#allocation2 + $0x210] sm:$0xff] %vm279, 0.0
      %348 = vst.msk [vmem:[#allocation2 + $0x218] sm:$0x1] %vm283, 0.0
      %349 = vst.msk [vmem:[#allocation2 + $0x220] sm:$0xff] %vm279, 0.0
      %350 = vst.msk [vmem:[#allocation2 + $0x228] sm:$0xff] %vm279, 0.0
      %351 = vst.msk [vmem:[#allocation2 + $0x230] sm:$0xff] %vm279, 0.0
      %352 = vst.msk [vmem:[#allocation2 + $0x238] sm:$0x1] %vm283, 0.0
      %v353 = vld [vmem:[%s273] sm:$0xff]
      %v354 = vld [vmem:[%s273 + $0x8] sm:$0xff]
      %v355 = vld [vmem:[%s273 + $0x10] sm:$0xff]
      %v356 = vld [vmem:[%s273 + $0x18] sm:$0xff]
      %v357 = vld [vmem:[%s273 + $0x20] sm:$0xff]
      %v358 = vld [vmem:[%s273 + $0x28] sm:$0xff]
      %v359 = vld [vmem:[%s273 + $0x30] sm:$0xff]
      %v360 = vld [vmem:[%s273 + $0x38] sm:$0xff]
      %v361 = vld [vmem:[%s273 + $0x40] sm:$0xff]
      %v362 = vld [vmem:[%s273 + $0x48] sm:$0xff]
      %v363 = vld [vmem:[%s273 + $0x50] sm:$0xff]
      %v364 = vld [vmem:[%s273 + $0x58] sm:$0xff]
      %v365 = vld [vmem:[%s273 + $0x60] sm:$0xff]
      %v366 = vld [vmem:[%s273 + $0x68] sm:$0xff]
      %v367 = vld [vmem:[%s273 + $0x70] sm:$0xff]
      %v368 = vld [vmem:[%s273 + $0x78] sm:$0xff]
      %v369 = vld [vmem:[%s273 + $0x80] sm:$0xff]
      %v370 = vld [vmem:[%s273 + $0x88] sm:$0xff]
      %v371 = vld [vmem:[%s273 + $0x90] sm:$0xff]
      %v372 = vld [vmem:[%s273 + $0x98] sm:$0xff]
      %v373 = vld [vmem:[%s273 + $0xa0] sm:$0xff]
      %v374 = vld [vmem:[%s273 + $0xa8] sm:$0xff]
      %v375 = vld [vmem:[%s273 + $0xb0] sm:$0xff]
      %v376 = vld [vmem:[%s273 + $0xb8] sm:$0xff]
      %v377 = vld [vmem:[%s273 + $0xc0] sm:$0xff]
      %v378 = vld [vmem:[%s273 + $0xc8] sm:$0xff]
      %v379 = vld [vmem:[%s273 + $0xd0] sm:$0xff]
      %v380 = vld [vmem:[%s273 + $0xd8] sm:$0xff]
      %v381 = vld [vmem:[%s273 + $0xe0] sm:$0xff]
      %v382 = vld [vmem:[%s273 + $0xe8] sm:$0xff]
      %v383 = vld [vmem:[%s273 + $0xf0] sm:$0xff]
      %v384 = vld [vmem:[%s273 + $0xf8] sm:$0xff]
      %s385 = scalar_lea.vmem [#allocation2], 32
      %386 = vst.msk [vmem:[%s385 + $0x8] sm:$0xff] %vm279, %v353
      %387 = vst.msk [vmem:[%s385 + $0x10] sm:$0xff] %vm279, %v354
      %388 = vst.msk [vmem:[%s385 + $0x28] sm:$0xff] %vm279, %v355
      %389 = vst.msk [vmem:[%s385 + $0x30] sm:$0xff] %vm279, %v356
      %390 = vst.msk [vmem:[%s385 + $0x48] sm:$0xff] %vm279, %v357
      %391 = vst.msk [vmem:[%s385 + $0x50] sm:$0xff] %vm279, %v358
      %392 = vst.msk [vmem:[%s385 + $0x68] sm:$0xff] %vm279, %v359
      %393 = vst.msk [vmem:[%s385 + $0x70] sm:$0xff] %vm279, %v360
      %394 = vst.msk [vmem:[%s385 + $0x88] sm:$0xff] %vm279, %v361
      %395 = vst.msk [vmem:[%s385 + $0x90] sm:$0xff] %vm279, %v362
      %396 = vst.msk [vmem:[%s385 + $0xa8] sm:$0xff] %vm279, %v363
      %397 = vst.msk [vmem:[%s385 + $0xb0] sm:$0xff] %vm279, %v364
      %398 = vst.msk [vmem:[%s385 + $0xc8] sm:$0xff] %vm279, %v365
      %399 = vst.msk [vmem:[%s385 + $0xd0] sm:$0xff] %vm279, %v366
      %400 = vst.msk [vmem:[%s385 + $0xe8] sm:$0xff] %vm279, %v367
      %401 = vst.msk [vmem:[%s385 + $0xf0] sm:$0xff] %vm279, %v368
      %402 = vst.msk [vmem:[%s385 + $0x108] sm:$0xff] %vm279, %v369
      %403 = vst.msk [vmem:[%s385 + $0x110] sm:$0xff] %vm279, %v370
      %404 = vst.msk [vmem:[%s385 + $0x128] sm:$0xff] %vm279, %v371
      %405 = vst.msk [vmem:[%s385 + $0x130] sm:$0xff] %vm279, %v372
      %406 = vst.msk [vmem:[%s385 + $0x148] sm:$0xff] %vm279, %v373
      %407 = vst.msk [vmem:[%s385 + $0x150] sm:$0xff] %vm279, %v374
      %408 = vst.msk [vmem:[%s385 + $0x168] sm:$0xff] %vm279, %v375
      %409 = vst.msk [vmem:[%s385 + $0x170] sm:$0xff] %vm279, %v376
      %410 = vst.msk [vmem:[%s385 + $0x188] sm:$0xff] %vm279, %v377
      %411 = vst.msk [vmem:[%s385 + $0x190] sm:$0xff] %vm279, %v378
      %412 = vst.msk [vmem:[%s385 + $0x1a8] sm:$0xff] %vm279, %v379
      %413 = vst.msk [vmem:[%s385 + $0x1b0] sm:$0xff] %vm279, %v380
      %414 = vst.msk [vmem:[%s385 + $0x1c8] sm:$0xff] %vm279, %v381
      %415 = vst.msk [vmem:[%s385 + $0x1d0] sm:$0xff] %vm279, %v382
      %416 = vst.msk [vmem:[%s385 + $0x1e8] sm:$0xff] %vm279, %v383
      %417 = vst.msk [vmem:[%s385 + $0x1f0] sm:$0xff] %vm279, %v384
      %v418 = vld [vmem:[#allocation2] sm:$0xff]
      %v419 = vld [vmem:[#allocation2 + $0x8] sm:$0xff]
      %v420 = vld [vmem:[#allocation2 + $0x10] sm:$0xff]
      %v421 = vld [vmem:[#allocation2 + $0x18] sm:$0x1]
      %v422 = vld [vmem:[#allocation2 + $0x20] sm:$0xff]
      %v423 = vld [vmem:[#allocation2 + $0x28] sm:$0xff]
      %v424 = vld [vmem:[#allocation2 + $0x30] sm:$0xff]
      %v425 = vld [vmem:[#allocation2 + $0x38] sm:$0x1]
      %v426 = vld [vmem:[#allocation2 + $0x40] sm:$0xff]
      %v427 = vld [vmem:[#allocation2 + $0x48] sm:$0xff]
      %v428 = vld [vmem:[#allocation2 + $0x50] sm:$0xff]
      %v429 = vld [vmem:[#allocation2 + $0x58] sm:$0x1]
      %v430 = vld [vmem:[#allocation2 + $0x60] sm:$0xff]
      %v431 = vld [vmem:[#allocation2 + $0x68] sm:$0xff]
      %v432 = vld [vmem:[#allocation2 + $0x70] sm:$0xff]
      %v433 = vld [vmem:[#allocation2 + $0x78] sm:$0x1]
      %v434 = vld [vmem:[#allocation2 + $0x80] sm:$0xff]
      %v435 = vld [vmem:[#allocation2 + $0x88] sm:$0xff]
      %v436 = vld [vmem:[#allocation2 + $0x90] sm:$0xff]
      %v437 = vld [vmem:[#allocation2 + $0x98] sm:$0x1]
      %v438 = vld [vmem:[#allocation2 + $0xa0] sm:$0xff]
      %v439 = vld [vmem:[#allocation2 + $0xa8] sm:$0xff]
      %v440 = vld [vmem:[#allocation2 + $0xb0] sm:$0xff]
      %v441 = vld [vmem:[#allocation2 + $0xb8] sm:$0x1]
      %v442 = vld [vmem:[#allocation2 + $0xc0] sm:$0xff]
      %v443 = vld [vmem:[#allocation2 + $0xc8] sm:$0xff]
      %v444 = vld [vmem:[#allocation2 + $0xd0] sm:$0xff]
      %v445 = vld [vmem:[#allocation2 + $0xd8] sm:$0x1]
      %v446 = vld [vmem:[#allocation2 + $0xe0] sm:$0xff]
      %v447 = vld [vmem:[#allocation2 + $0xe8] sm:$0xff]
      %v448 = vld [vmem:[#allocation2 + $0xf0] sm:$0xff]
      %v449 = vld [vmem:[#allocation2 + $0xf8] sm:$0x1]
      %v450 = vld [vmem:[#allocation2 + $0x100] sm:$0xff]
      %v451 = vld [vmem:[#allocation2 + $0x108] sm:$0xff]
      %v452 = vld [vmem:[#allocation2 + $0x110] sm:$0xff]
      %v453 = vld [vmem:[#allocation2 + $0x118] sm:$0x1]
      %v454 = vld [vmem:[#allocation2 + $0x120] sm:$0xff]
      %v455 = vld [vmem:[#allocation2 + $0x128] sm:$0xff]
      %v456 = vld [vmem:[#allocation2 + $0x130] sm:$0xff]
      %v457 = vld [vmem:[#allocation2 + $0x138] sm:$0x1]
      %v458 = vld [vmem:[#allocation2 + $0x140] sm:$0xff]
      %v459 = vld [vmem:[#allocation2 + $0x148] sm:$0xff]
      %v460 = vld [vmem:[#allocation2 + $0x150] sm:$0xff]
      %v461 = vld [vmem:[#allocation2 + $0x158] sm:$0x1]
      %v462 = vld [vmem:[#allocation2 + $0x160] sm:$0xff]
      %v463 = vld [vmem:[#allocation2 + $0x168] sm:$0xff]
      %v464 = vld [vmem:[#allocation2 + $0x170] sm:$0xff]
      %v465 = vld [vmem:[#allocation2 + $0x178] sm:$0x1]
      %v466 = vld [vmem:[#allocation2 + $0x180] sm:$0xff]
      %v467 = vld [vmem:[#allocation2 + $0x188] sm:$0xff]
      %v468 = vld [vmem:[#allocation2 + $0x190] sm:$0xff]
      %v469 = vld [vmem:[#allocation2 + $0x198] sm:$0x1]
      %v470 = vld [vmem:[#allocation2 + $0x1a0] sm:$0xff]
      %v471 = vld [vmem:[#allocation2 + $0x1a8] sm:$0xff]
      %v472 = vld [vmem:[#allocation2 + $0x1b0] sm:$0xff]
      %v473 = vld [vmem:[#allocation2 + $0x1b8] sm:$0x1]
      %v474 = vld [vmem:[#allocation2 + $0x1c0] sm:$0xff]
      %v475 = vld [vmem:[#allocation2 + $0x1c8] sm:$0xff]
      %v476 = vld [vmem:[#allocation2 + $0x1d0] sm:$0xff]
      %v477 = vld [vmem:[#allocation2 + $0x1d8] sm:$0x1]
      %v478 = vld [vmem:[#allocation2 + $0x1e0] sm:$0xff]
      %v479 = vld [vmem:[#allocation2 + $0x1e8] sm:$0xff]
      %v480 = vld [vmem:[#allocation2 + $0x1f0] sm:$0xff]
      %v481 = vld [vmem:[#allocation2 + $0x1f8] sm:$0x1]
      %v482 = vld [vmem:[#allocation2 + $0x200] sm:$0xff]
      %v483 = vld [vmem:[#allocation2 + $0x208] sm:$0xff]
      %v484 = vld [vmem:[#allocation2 + $0x210] sm:$0xff]
      %v485 = vld [vmem:[#allocation2 + $0x218] sm:$0x1]
      %v486 = vld [vmem:[#allocation2 + $0x220] sm:$0xff]
      %v487 = vld [vmem:[#allocation2 + $0x228] sm:$0xff]
      %v488 = vld [vmem:[#allocation2 + $0x230] sm:$0xff]
      %v489 = vld [vmem:[#allocation2 + $0x238] sm:$0x1]
      %vm538 = vcmask 1040384
      %v539 = vrot.slane %v418, 7
      %v540 = vrot.slane %v419, 7
      %v541 = vsel %vm538, %v539, %v540
      %v542 = vrot.slane %v420, 7
      %v543 = vsel %vm538, %v540, %v542
      %v544 = vrot.slane %v422, 7
      %v545 = vrot.slane %v423, 7
      %v546 = vsel %vm538, %v544, %v545
      %v547 = vrot.slane %v424, 7
      %v548 = vsel %vm538, %v545, %v547
      %v549 = vrot.slane %v426, 7
      %v550 = vrot.slane %v427, 7
      %v551 = vsel %vm538, %v549, %v550
      %v552 = vrot.slane %v428, 7
      %v553 = vsel %vm538, %v550, %v552
      %v554 = vrot.slane %v430, 7
      %v555 = vrot.slane %v431, 7
      %v556 = vsel %vm538, %v554, %v555
      %v557 = vrot.slane %v432, 7
      %v558 = vsel %vm538, %v555, %v557
      %v559 = vrot.slane %v434, 7
      %v560 = vrot.slane %v435, 7
      %v561 = vsel %vm538, %v559, %v560
      %v562 = vrot.slane %v436, 7
      %v563 = vsel %vm538, %v560, %v562
      %v564 = vrot.slane %v438, 7
      %v565 = vrot.slane %v439, 7
      %v566 = vsel %vm538, %v564, %v565
      %v567 = vrot.slane %v440, 7
      %v568 = vsel %vm538, %v565, %v567
      %v569 = vrot.slane %v442, 7
      %v570 = vrot.slane %v443, 7
      %v571 = vsel %vm538, %v569, %v570
      %v572 = vrot.slane %v444, 7
      %v573 = vsel %vm538, %v570, %v572
      %v574 = vrot.slane %v446, 7
      %v575 = vrot.slane %v447, 7
      %v576 = vsel %vm538, %v574, %v575
      %v577 = vrot.slane %v448, 7
      %v578 = vsel %vm538, %v575, %v577
      %v579 = vrot.slane %v450, 7
      %v580 = vrot.slane %v451, 7
      %v581 = vsel %vm538, %v579, %v580
      %v582 = vrot.slane %v452, 7
      %v583 = vsel %vm538, %v580, %v582
      %v584 = vrot.slane %v454, 7
      %v585 = vrot.slane %v455, 7
      %v586 = vsel %vm538, %v584, %v585
      %v587 = vrot.slane %v456, 7
      %v588 = vsel %vm538, %v585, %v587
      %v589 = vrot.slane %v458, 7
      %v590 = vrot.slane %v459, 7
      %v591 = vsel %vm538, %v589, %v590
      %v592 = vrot.slane %v460, 7
      %v593 = vsel %vm538, %v590, %v592
      %v594 = vrot.slane %v462, 7
      %v595 = vrot.slane %v463, 7
      %v596 = vsel %vm538, %v594, %v595
      %v597 = vrot.slane %v464, 7
      %v598 = vsel %vm538, %v595, %v597
      %v599 = vrot.slane %v466, 7
      %v600 = vrot.slane %v467, 7
      %v601 = vsel %vm538, %v599, %v600
      %v602 = vrot.slane %v468, 7
      %v603 = vsel %vm538, %v600, %v602
      %v604 = vrot.slane %v470, 7
      %v605 = vrot.slane %v471, 7
      %v606 = vsel %vm538, %v604, %v605
      %v607 = vrot.slane %v472, 7
      %v608 = vsel %vm538, %v605, %v607
      %v609 = vrot.slane %v474, 7
      %v610 = vrot.slane %v475, 7
      %v611 = vsel %vm538, %v609, %v610
      %v612 = vrot.slane %v476, 7
      %v613 = vsel %vm538, %v610, %v612
      %v614 = vrot.slane %v478, 7
      %v615 = vrot.slane %v479, 7
      %v616 = vsel %vm538, %v614, %v615
      %v617 = vrot.slane %v480, 7
      %v618 = vsel %vm538, %v615, %v617
      %vm667 = vcmask 1046528
      %v668 = vrot.slane %v419, 1
      %v669 = vrot.slane %v420, 1
      %v670 = vsel %vm667, %v668, %v669
      %v671 = vrot.slane %v421, 1
      %v672 = vsel %vm667, %v669, %v671
      %v673 = vrot.slane %v423, 1
      %v674 = vrot.slane %v424, 1
      %v675 = vsel %vm667, %v673, %v674
      %v676 = vrot.slane %v425, 1
      %v677 = vsel %vm667, %v674, %v676
      %v678 = vrot.slane %v427, 1
      %v679 = vrot.slane %v428, 1
      %v680 = vsel %vm667, %v678, %v679
      %v681 = vrot.slane %v429, 1
      %v682 = vsel %vm667, %v679, %v681
      %v683 = vrot.slane %v431, 1
      %v684 = vrot.slane %v432, 1
      %v685 = vsel %vm667, %v683, %v684
      %v686 = vrot.slane %v433, 1
      %v687 = vsel %vm667, %v684, %v686
      %v688 = vrot.slane %v435, 1
      %v689 = vrot.slane %v436, 1
      %v690 = vsel %vm667, %v688, %v689
      %v691 = vrot.slane %v437, 1
      %v692 = vsel %vm667, %v689, %v691
      %v693 = vrot.slane %v439, 1
      %v694 = vrot.slane %v440, 1
      %v695 = vsel %vm667, %v693, %v694
      %v696 = vrot.slane %v441, 1
      %v697 = vsel %vm667, %v694, %v696
      %v698 = vrot.slane %v443, 1
      %v699 = vrot.slane %v444, 1
      %v700 = vsel %vm667, %v698, %v699
      %v701 = vrot.slane %v445, 1
      %v702 = vsel %vm667, %v699, %v701
      %v703 = vrot.slane %v447, 1
      %v704 = vrot.slane %v448, 1
      %v705 = vsel %vm667, %v703, %v704
      %v706 = vrot.slane %v449, 1
      %v707 = vsel %vm667, %v704, %v706
      %v708 = vrot.slane %v451, 1
      %v709 = vrot.slane %v452, 1
      %v710 = vsel %vm667, %v708, %v709
      %v711 = vrot.slane %v453, 1
      %v712 = vsel %vm667, %v709, %v711
      %v713 = vrot.slane %v455, 1
      %v714 = vrot.slane %v456, 1
      %v715 = vsel %vm667, %v713, %v714
      %v716 = vrot.slane %v457, 1
      %v717 = vsel %vm667, %v714, %v716
      %v718 = vrot.slane %v459, 1
      %v719 = vrot.slane %v460, 1
      %v720 = vsel %vm667, %v718, %v719
      %v721 = vrot.slane %v461, 1
      %v722 = vsel %vm667, %v719, %v721
      %v723 = vrot.slane %v463, 1
      %v724 = vrot.slane %v464, 1
      %v725 = vsel %vm667, %v723, %v724
      %v726 = vrot.slane %v465, 1
      %v727 = vsel %vm667, %v724, %v726
      %v728 = vrot.slane %v467, 1
      %v729 = vrot.slane %v468, 1
      %v730 = vsel %vm667, %v728, %v729
      %v731 = vrot.slane %v469, 1
      %v732 = vsel %vm667, %v729, %v731
      %v733 = vrot.slane %v471, 1
      %v734 = vrot.slane %v472, 1
      %v735 = vsel %vm667, %v733, %v734
      %v736 = vrot.slane %v473, 1
      %v737 = vsel %vm667, %v734, %v736
      %v738 = vrot.slane %v475, 1
      %v739 = vrot.slane %v476, 1
      %v740 = vsel %vm667, %v738, %v739
      %v741 = vrot.slane %v477, 1
      %v742 = vsel %vm667, %v739, %v741
      %v743 = vrot.slane %v479, 1
      %v744 = vrot.slane %v480, 1
      %v745 = vsel %vm667, %v743, %v744
      %v746 = vrot.slane %v481, 1
      %v747 = vsel %vm667, %v744, %v746
      %v751 = vrot.slane %v482, 7
      %v752 = vrot.slane %v483, 7
      %v753 = vsel %vm538, %v751, %v752
      %v754 = vrot.slane %v484, 7
      %v755 = vsel %vm538, %v752, %v754
      %v757 = vrot.slane %v483, 1
      %v758 = vrot.slane %v484, 1
      %v759 = vsel %vm667, %v757, %v758
      %v760 = vrot.slane %v485, 1
      %v761 = vsel %vm667, %v758, %v760
      %v765 = vrot.slane %v486, 7
      %v766 = vrot.slane %v487, 7
      %v767 = vsel %vm538, %v765, %v766
      %v768 = vrot.slane %v488, 7
      %v769 = vsel %vm538, %v766, %v768
      %v771 = vrot.slane %v487, 1
      %v772 = vrot.slane %v488, 1
      %v773 = vsel %vm667, %v771, %v772
      %v774 = vrot.slane %v489, 1
      %v775 = vsel %vm667, %v772, %v774
      %776 = vrot.lane.b32.xlu0 %v419, 4
      %v777 = vpop.permute.xlu0 %776
      %778 = vrot.lane.b32.xlu0 %v420, 4
      %v779 = vpop.permute.xlu0 %778
      %780 = vrot.lane.b32.xlu0 %v423, 4
      %v781 = vpop.permute.xlu0 %780
      %782 = vrot.lane.b32.xlu0 %v424, 4
      %v783 = vpop.permute.xlu0 %782
      %784 = vrot.lane.b32.xlu0 %v427, 4
      %v785 = vpop.permute.xlu0 %784
      %786 = vrot.lane.b32.xlu0 %v428, 4
      %v787 = vpop.permute.xlu0 %786
      %788 = vrot.lane.b32.xlu0 %v431, 4
      %v789 = vpop.permute.xlu0 %788
      %790 = vrot.lane.b32.xlu0 %v432, 4
      %v791 = vpop.permute.xlu0 %790
      %792 = vrot.lane.b32.xlu0 %v435, 4
      %v793 = vpop.permute.xlu0 %792
      %794 = vrot.lane.b32.xlu0 %v436, 4
      %v795 = vpop.permute.xlu0 %794
      %796 = vrot.lane.b32.xlu0 %v439, 4
      %v797 = vpop.permute.xlu0 %796
      %798 = vrot.lane.b32.xlu0 %v440, 4
      %v799 = vpop.permute.xlu0 %798
      %800 = vrot.lane.b32.xlu0 %v443, 4
      %v801 = vpop.permute.xlu0 %800
      %802 = vrot.lane.b32.xlu0 %v444, 4
      %v803 = vpop.permute.xlu0 %802
      %804 = vrot.lane.b32.xlu0 %v447, 4
      %v805 = vpop.permute.xlu0 %804
      %806 = vrot.lane.b32.xlu0 %v448, 4
      %v807 = vpop.permute.xlu0 %806
      %808 = vrot.lane.b32.xlu0 %v451, 4
      %v809 = vpop.permute.xlu0 %808
      %810 = vrot.lane.b32.xlu0 %v452, 4
      %v811 = vpop.permute.xlu0 %810
      %812 = vrot.lane.b32.xlu0 %v455, 4
      %v813 = vpop.permute.xlu0 %812
      %814 = vrot.lane.b32.xlu0 %v456, 4
      %v815 = vpop.permute.xlu0 %814
      %816 = vrot.lane.b32.xlu0 %v459, 4
      %v817 = vpop.permute.xlu0 %816
      %818 = vrot.lane.b32.xlu0 %v460, 4
      %v819 = vpop.permute.xlu0 %818
      %820 = vrot.lane.b32.xlu0 %v463, 4
      %v821 = vpop.permute.xlu0 %820
      %822 = vrot.lane.b32.xlu0 %v464, 4
      %v823 = vpop.permute.xlu0 %822
      %824 = vrot.lane.b32.xlu0 %v467, 4
      %v825 = vpop.permute.xlu0 %824
      %826 = vrot.lane.b32.xlu0 %v468, 4
      %v827 = vpop.permute.xlu0 %826
      %828 = vrot.lane.b32.xlu0 %v471, 4
      %v829 = vpop.permute.xlu0 %828
      %830 = vrot.lane.b32.xlu0 %v472, 4
      %v831 = vpop.permute.xlu0 %830
      %832 = vrot.lane.b32.xlu0 %v475, 4
      %v833 = vpop.permute.xlu0 %832
      %834 = vrot.lane.b32.xlu0 %v476, 4
      %v835 = vpop.permute.xlu0 %834
      %836 = vrot.lane.b32.xlu0 %v479, 4
      %v837 = vpop.permute.xlu0 %836
      %838 = vrot.lane.b32.xlu0 %v480, 4
      %v839 = vpop.permute.xlu0 %838
      %872 = vrot.lane.b32.xlu0 %v670, 8
      %v873 = vpop.permute.xlu0 %872
      %874 = vrot.lane.b32.xlu0 %v672, 8
      %v875 = vpop.permute.xlu0 %874
      %876 = vrot.lane.b32.xlu0 %v675, 8
      %v877 = vpop.permute.xlu0 %876
      %878 = vrot.lane.b32.xlu0 %v677, 8
      %v879 = vpop.permute.xlu0 %878
      %880 = vrot.lane.b32.xlu0 %v680, 8
      %v881 = vpop.permute.xlu0 %880
      %882 = vrot.lane.b32.xlu0 %v682, 8
      %v883 = vpop.permute.xlu0 %882
      %884 = vrot.lane.b32.xlu0 %v685, 8
      %v885 = vpop.permute.xlu0 %884
      %886 = vrot.lane.b32.xlu0 %v687, 8
      %v887 = vpop.permute.xlu0 %886
      %888 = vrot.lane.b32.xlu0 %v690, 8
      %v889 = vpop.permute.xlu0 %888
      %890 = vrot.lane.b32.xlu0 %v692, 8
      %v891 = vpop.permute.xlu0 %890
      %892 = vrot.lane.b32.xlu0 %v695, 8
      %v893 = vpop.permute.xlu0 %892
      %894 = vrot.lane.b32.xlu0 %v697, 8
      %v895 = vpop.permute.xlu0 %894
      %896 = vrot.lane.b32.xlu0 %v700, 8
      %v897 = vpop.permute.xlu0 %896
      %898 = vrot.lane.b32.xlu0 %v702, 8
      %v899 = vpop.permute.xlu0 %898
      %900 = vrot.lane.b32.xlu0 %v705, 8
      %v901 = vpop.permute.xlu0 %900
      %902 = vrot.lane.b32.xlu0 %v707, 8
      %v903 = vpop.permute.xlu0 %902
      %904 = vrot.lane.b32.xlu0 %v710, 8
      %v905 = vpop.permute.xlu0 %904
      %906 = vrot.lane.b32.xlu0 %v712, 8
      %v907 = vpop.permute.xlu0 %906
      %908 = vrot.lane.b32.xlu0 %v715, 8
      %v909 = vpop.permute.xlu0 %908
      %910 = vrot.lane.b32.xlu0 %v717, 8
      %v911 = vpop.permute.xlu0 %910
      %912 = vrot.lane.b32.xlu0 %v720, 8
      %v913 = vpop.permute.xlu0 %912
      %914 = vrot.lane.b32.xlu0 %v722, 8
      %v915 = vpop.permute.xlu0 %914
      %916 = vrot.lane.b32.xlu0 %v725, 8
      %v917 = vpop.permute.xlu0 %916
      %918 = vrot.lane.b32.xlu0 %v727, 8
      %v919 = vpop.permute.xlu0 %918
      %920 = vrot.lane.b32.xlu0 %v730, 8
      %v921 = vpop.permute.xlu0 %920
      %922 = vrot.lane.b32.xlu0 %v732, 8
      %v923 = vpop.permute.xlu0 %922
      %924 = vrot.lane.b32.xlu0 %v735, 8
      %v925 = vpop.permute.xlu0 %924
      %926 = vrot.lane.b32.xlu0 %v737, 8
      %v927 = vpop.permute.xlu0 %926
      %928 = vrot.lane.b32.xlu0 %v740, 8
      %v929 = vpop.permute.xlu0 %928
      %930 = vrot.lane.b32.xlu0 %v742, 8
      %v931 = vpop.permute.xlu0 %930
      %932 = vrot.lane.b32.xlu0 %v745, 8
      %v933 = vpop.permute.xlu0 %932
      %934 = vrot.lane.b32.xlu0 %v747, 8
      %v935 = vpop.permute.xlu0 %934
      %968 = vrot.lane.b32.xlu0 %v546, 12
      %v969 = vpop.permute.xlu0 %968
      %970 = vrot.lane.b32.xlu0 %v548, 12
      %v971 = vpop.permute.xlu0 %970
      %972 = vrot.lane.b32.xlu0 %v551, 12
      %v973 = vpop.permute.xlu0 %972
      %974 = vrot.lane.b32.xlu0 %v553, 12
      %v975 = vpop.permute.xlu0 %974
      %976 = vrot.lane.b32.xlu0 %v556, 12
      %v977 = vpop.permute.xlu0 %976
      %978 = vrot.lane.b32.xlu0 %v558, 12
      %v979 = vpop.permute.xlu0 %978
      %980 = vrot.lane.b32.xlu0 %v561, 12
      %v981 = vpop.permute.xlu0 %980
      %982 = vrot.lane.b32.xlu0 %v563, 12
      %v983 = vpop.permute.xlu0 %982
      %984 = vrot.lane.b32.xlu0 %v566, 12
      %v985 = vpop.permute.xlu0 %984
      %986 = vrot.lane.b32.xlu0 %v568, 12
      %v987 = vpop.permute.xlu0 %986
      %988 = vrot.lane.b32.xlu0 %v571, 12
      %v989 = vpop.permute.xlu0 %988
      %990 = vrot.lane.b32.xlu0 %v573, 12
      %v991 = vpop.permute.xlu0 %990
      %992 = vrot.lane.b32.xlu0 %v576, 12
      %v993 = vpop.permute.xlu0 %992
      %994 = vrot.lane.b32.xlu0 %v578, 12
      %v995 = vpop.permute.xlu0 %994
      %996 = vrot.lane.b32.xlu0 %v581, 12
      %v997 = vpop.permute.xlu0 %996
      %998 = vrot.lane.b32.xlu0 %v583, 12
      %v999 = vpop.permute.xlu0 %998
      %1000 = vrot.lane.b32.xlu0 %v586, 12
      %v1001 = vpop.permute.xlu0 %1000
      %1002 = vrot.lane.b32.xlu0 %v588, 12
      %v1003 = vpop.permute.xlu0 %1002
      %1004 = vrot.lane.b32.xlu0 %v591, 12
      %v1005 = vpop.permute.xlu0 %1004
      %1006 = vrot.lane.b32.xlu0 %v593, 12
      %v1007 = vpop.permute.xlu0 %1006
      %1008 = vrot.lane.b32.xlu0 %v596, 12
      %v1009 = vpop.permute.xlu0 %1008
      %1010 = vrot.lane.b32.xlu0 %v598, 12
      %v1011 = vpop.permute.xlu0 %1010
      %1012 = vrot.lane.b32.xlu0 %v601, 12
      %v1013 = vpop.permute.xlu0 %1012
      %1014 = vrot.lane.b32.xlu0 %v603, 12
      %v1015 = vpop.permute.xlu0 %1014
      %1016 = vrot.lane.b32.xlu0 %v606, 12
      %v1017 = vpop.permute.xlu0 %1016
      %1018 = vrot.lane.b32.xlu0 %v608, 12
      %v1019 = vpop.permute.xlu0 %1018
      %1020 = vrot.lane.b32.xlu0 %v611, 12
      %v1021 = vpop.permute.xlu0 %1020
      %1022 = vrot.lane.b32.xlu0 %v613, 12
      %v1023 = vpop.permute.xlu0 %1022
      %1024 = vrot.lane.b32.xlu0 %v616, 12
      %v1025 = vpop.permute.xlu0 %1024
      %1026 = vrot.lane.b32.xlu0 %v618, 12
      %v1027 = vpop.permute.xlu0 %1026
      %1028 = vrot.lane.b32.xlu0 %v753, 12
      %v1029 = vpop.permute.xlu0 %1028
      %1030 = vrot.lane.b32.xlu0 %v755, 12
      %v1031 = vpop.permute.xlu0 %1030
      %1064 = vrot.lane.b32.xlu0 %v423, 16
      %v1065 = vpop.permute.xlu0 %1064
      %1066 = vrot.lane.b32.xlu0 %v424, 16
      %v1067 = vpop.permute.xlu0 %1066
      %1068 = vrot.lane.b32.xlu0 %v427, 16
      %v1069 = vpop.permute.xlu0 %1068
      %1070 = vrot.lane.b32.xlu0 %v428, 16
      %v1071 = vpop.permute.xlu0 %1070
      %1072 = vrot.lane.b32.xlu0 %v431, 16
      %v1073 = vpop.permute.xlu0 %1072
      %1074 = vrot.lane.b32.xlu0 %v432, 16
      %v1075 = vpop.permute.xlu0 %1074
      %1076 = vrot.lane.b32.xlu0 %v435, 16
      %v1077 = vpop.permute.xlu0 %1076
      %1078 = vrot.lane.b32.xlu0 %v436, 16
      %v1079 = vpop.permute.xlu0 %1078
      %1080 = vrot.lane.b32.xlu0 %v439, 16
      %v1081 = vpop.permute.xlu0 %1080
      %1082 = vrot.lane.b32.xlu0 %v440, 16
      %v1083 = vpop.permute.xlu0 %1082
      %1084 = vrot.lane.b32.xlu0 %v443, 16
      %v1085 = vpop.permute.xlu0 %1084
      %1086 = vrot.lane.b32.xlu0 %v444, 16
      %v1087 = vpop.permute.xlu0 %1086
      %1088 = vrot.lane.b32.xlu0 %v447, 16
      %v1089 = vpop.permute.xlu0 %1088
      %1090 = vrot.lane.b32.xlu0 %v448, 16
      %v1091 = vpop.permute.xlu0 %1090
      %1092 = vrot.lane.b32.xlu0 %v451, 16
      %v1093 = vpop.permute.xlu0 %1092
      %1094 = vrot.lane.b32.xlu0 %v452, 16
      %v1095 = vpop.permute.xlu0 %1094
      %1096 = vrot.lane.b32.xlu0 %v455, 16
      %v1097 = vpop.permute.xlu0 %1096
      %1098 = vrot.lane.b32.xlu0 %v456, 16
      %v1099 = vpop.permute.xlu0 %1098
      %1100 = vrot.lane.b32.xlu0 %v459, 16
      %v1101 = vpop.permute.xlu0 %1100
      %1102 = vrot.lane.b32.xlu0 %v460, 16
      %v1103 = vpop.permute.xlu0 %1102
      %1104 = vrot.lane.b32.xlu0 %v463, 16
      %v1105 = vpop.permute.xlu0 %1104
      %1106 = vrot.lane.b32.xlu0 %v464, 16
      %v1107 = vpop.permute.xlu0 %1106
      %1108 = vrot.lane.b32.xlu0 %v467, 16
      %v1109 = vpop.permute.xlu0 %1108
      %1110 = vrot.lane.b32.xlu0 %v468, 16
      %v1111 = vpop.permute.xlu0 %1110
      %1112 = vrot.lane.b32.xlu0 %v471, 16
      %v1113 = vpop.permute.xlu0 %1112
      %1114 = vrot.lane.b32.xlu0 %v472, 16
      %v1115 = vpop.permute.xlu0 %1114
      %1116 = vrot.lane.b32.xlu0 %v475, 16
      %v1117 = vpop.permute.xlu0 %1116
      %1118 = vrot.lane.b32.xlu0 %v476, 16
      %v1119 = vpop.permute.xlu0 %1118
      %1120 = vrot.lane.b32.xlu0 %v479, 16
      %v1121 = vpop.permute.xlu0 %1120
      %1122 = vrot.lane.b32.xlu0 %v480, 16
      %v1123 = vpop.permute.xlu0 %1122
      %1124 = vrot.lane.b32.xlu0 %v483, 16
      %v1125 = vpop.permute.xlu0 %1124
      %1126 = vrot.lane.b32.xlu0 %v484, 16
      %v1127 = vpop.permute.xlu0 %1126
      %1160 = vrot.lane.b32.xlu0 %v675, 20
      %v1161 = vpop.permute.xlu0 %1160
      %1162 = vrot.lane.b32.xlu0 %v677, 20
      %v1163 = vpop.permute.xlu0 %1162
      %1164 = vrot.lane.b32.xlu0 %v680, 20
      %v1165 = vpop.permute.xlu0 %1164
      %1166 = vrot.lane.b32.xlu0 %v682, 20
      %v1167 = vpop.permute.xlu0 %1166
      %1168 = vrot.lane.b32.xlu0 %v685, 20
      %v1169 = vpop.permute.xlu0 %1168
      %1170 = vrot.lane.b32.xlu0 %v687, 20
      %v1171 = vpop.permute.xlu0 %1170
      %1172 = vrot.lane.b32.xlu0 %v690, 20
      %v1173 = vpop.permute.xlu0 %1172
      %1174 = vrot.lane.b32.xlu0 %v692, 20
      %v1175 = vpop.permute.xlu0 %1174
      %1176 = vrot.lane.b32.xlu0 %v695, 20
      %v1177 = vpop.permute.xlu0 %1176
      %1178 = vrot.lane.b32.xlu0 %v697, 20
      %v1179 = vpop.permute.xlu0 %1178
      %1180 = vrot.lane.b32.xlu0 %v700, 20
      %v1181 = vpop.permute.xlu0 %1180
      %1182 = vrot.lane.b32.xlu0 %v702, 20
      %v1183 = vpop.permute.xlu0 %1182
      %1184 = vrot.lane.b32.xlu0 %v705, 20
      %v1185 = vpop.permute.xlu0 %1184
      %1186 = vrot.lane.b32.xlu0 %v707, 20
      %v1187 = vpop.permute.xlu0 %1186
      %1188 = vrot.lane.b32.xlu0 %v710, 20
      %v1189 = vpop.permute.xlu0 %1188
      %1190 = vrot.lane.b32.xlu0 %v712, 20
      %v1191 = vpop.permute.xlu0 %1190
      %1192 = vrot.lane.b32.xlu0 %v715, 20
      %v1193 = vpop.permute.xlu0 %1192
      %1194 = vrot.lane.b32.xlu0 %v717, 20
      %v1195 = vpop.permute.xlu0 %1194
      %1196 = vrot.lane.b32.xlu0 %v720, 20
      %v1197 = vpop.permute.xlu0 %1196
      %1198 = vrot.lane.b32.xlu0 %v722, 20
      %v1199 = vpop.permute.xlu0 %1198
      %1200 = vrot.lane.b32.xlu0 %v725, 20
      %v1201 = vpop.permute.xlu0 %1200
      %1202 = vrot.lane.b32.xlu0 %v727, 20
      %v1203 = vpop.permute.xlu0 %1202
      %1204 = vrot.lane.b32.xlu0 %v730, 20
      %v1205 = vpop.permute.xlu0 %1204
      %1206 = vrot.lane.b32.xlu0 %v732, 20
      %v1207 = vpop.permute.xlu0 %1206
      %1208 = vrot.lane.b32.xlu0 %v735, 20
      %v1209 = vpop.permute.xlu0 %1208
      %1210 = vrot.lane.b32.xlu0 %v737, 20
      %v1211 = vpop.permute.xlu0 %1210
      %1212 = vrot.lane.b32.xlu0 %v740, 20
      %v1213 = vpop.permute.xlu0 %1212
      %1214 = vrot.lane.b32.xlu0 %v742, 20
      %v1215 = vpop.permute.xlu0 %1214
      %1216 = vrot.lane.b32.xlu0 %v745, 20
      %v1217 = vpop.permute.xlu0 %1216
      %1218 = vrot.lane.b32.xlu0 %v747, 20
      %v1219 = vpop.permute.xlu0 %1218
      %1220 = vrot.lane.b32.xlu0 %v759, 20
      %v1221 = vpop.permute.xlu0 %1220
      %1222 = vrot.lane.b32.xlu0 %v761, 20
      %v1223 = vpop.permute.xlu0 %1222
      %1256 = vrot.lane.b32.xlu0 %v551, 24
      %v1257 = vpop.permute.xlu0 %1256
      %1258 = vrot.lane.b32.xlu0 %v553, 24
      %v1259 = vpop.permute.xlu0 %1258
      %1260 = vrot.lane.b32.xlu0 %v556, 24
      %v1261 = vpop.permute.xlu0 %1260
      %1262 = vrot.lane.b32.xlu0 %v558, 24
      %v1263 = vpop.permute.xlu0 %1262
      %1264 = vrot.lane.b32.xlu0 %v561, 24
      %v1265 = vpop.permute.xlu0 %1264
      %1266 = vrot.lane.b32.xlu0 %v563, 24
      %v1267 = vpop.permute.xlu0 %1266
      %1268 = vrot.lane.b32.xlu0 %v566, 24
      %v1269 = vpop.permute.xlu0 %1268
      %1270 = vrot.lane.b32.xlu0 %v568, 24
      %v1271 = vpop.permute.xlu0 %1270
      %1272 = vrot.lane.b32.xlu0 %v571, 24
      %v1273 = vpop.permute.xlu0 %1272
      %1274 = vrot.lane.b32.xlu0 %v573, 24
      %v1275 = vpop.permute.xlu0 %1274
      %1276 = vrot.lane.b32.xlu0 %v576, 24
      %v1277 = vpop.permute.xlu0 %1276
      %1278 = vrot.lane.b32.xlu0 %v578, 24
      %v1279 = vpop.permute.xlu0 %1278
      %1280 = vrot.lane.b32.xlu0 %v581, 24
      %v1281 = vpop.permute.xlu0 %1280
      %1282 = vrot.lane.b32.xlu0 %v583, 24
      %v1283 = vpop.permute.xlu0 %1282
      %1284 = vrot.lane.b32.xlu0 %v586, 24
      %v1285 = vpop.permute.xlu0 %1284
      %1286 = vrot.lane.b32.xlu0 %v588, 24
      %v1287 = vpop.permute.xlu0 %1286
      %1288 = vrot.lane.b32.xlu0 %v591, 24
      %v1289 = vpop.permute.xlu0 %1288
      %1290 = vrot.lane.b32.xlu0 %v593, 24
      %v1291 = vpop.permute.xlu0 %1290
      %1292 = vrot.lane.b32.xlu0 %v596, 24
      %v1293 = vpop.permute.xlu0 %1292
      %1294 = vrot.lane.b32.xlu0 %v598, 24
      %v1295 = vpop.permute.xlu0 %1294
      %1296 = vrot.lane.b32.xlu0 %v601, 24
      %v1297 = vpop.permute.xlu0 %1296
      %1298 = vrot.lane.b32.xlu0 %v603, 24
      %v1299 = vpop.permute.xlu0 %1298
      %1300 = vrot.lane.b32.xlu0 %v606, 24
      %v1301 = vpop.permute.xlu0 %1300
      %1302 = vrot.lane.b32.xlu0 %v608, 24
      %v1303 = vpop.permute.xlu0 %1302
      %1304 = vrot.lane.b32.xlu0 %v611, 24
      %v1305 = vpop.permute.xlu0 %1304
      %1306 = vrot.lane.b32.xlu0 %v613, 24
      %v1307 = vpop.permute.xlu0 %1306
      %1308 = vrot.lane.b32.xlu0 %v616, 24
      %v1309 = vpop.permute.xlu0 %1308
      %1310 = vrot.lane.b32.xlu0 %v618, 24
      %v1311 = vpop.permute.xlu0 %1310
      %1312 = vrot.lane.b32.xlu0 %v753, 24
      %v1313 = vpop.permute.xlu0 %1312
      %1314 = vrot.lane.b32.xlu0 %v755, 24
      %v1315 = vpop.permute.xlu0 %1314
      %1316 = vrot.lane.b32.xlu0 %v767, 24
      %v1317 = vpop.permute.xlu0 %1316
      %1318 = vrot.lane.b32.xlu0 %v769, 24
      %v1319 = vpop.permute.xlu0 %1318
      %1352 = vrot.lane.b32.xlu0 %v427, 28
      %v1353 = vpop.permute.xlu0 %1352
      %1354 = vrot.lane.b32.xlu0 %v428, 28
      %v1355 = vpop.permute.xlu0 %1354
      %1356 = vrot.lane.b32.xlu0 %v431, 28
      %v1357 = vpop.permute.xlu0 %1356
      %1358 = vrot.lane.b32.xlu0 %v432, 28
      %v1359 = vpop.permute.xlu0 %1358
      %1360 = vrot.lane.b32.xlu0 %v435, 28
      %v1361 = vpop.permute.xlu0 %1360
      %1362 = vrot.lane.b32.xlu0 %v436, 28
      %v1363 = vpop.permute.xlu0 %1362
      %1364 = vrot.lane.b32.xlu0 %v439, 28
      %v1365 = vpop.permute.xlu0 %1364
      %1366 = vrot.lane.b32.xlu0 %v440, 28
      %v1367 = vpop.permute.xlu0 %1366
      %1368 = vrot.lane.b32.xlu0 %v443, 28
      %v1369 = vpop.permute.xlu0 %1368
      %1370 = vrot.lane.b32.xlu0 %v444, 28
      %v1371 = vpop.permute.xlu0 %1370
      %1372 = vrot.lane.b32.xlu0 %v447, 28
      %v1373 = vpop.permute.xlu0 %1372
      %1374 = vrot.lane.b32.xlu0 %v448, 28
      %v1375 = vpop.permute.xlu0 %1374
      %1376 = vrot.lane.b32.xlu0 %v451, 28
      %v1377 = vpop.permute.xlu0 %1376
      %1378 = vrot.lane.b32.xlu0 %v452, 28
      %v1379 = vpop.permute.xlu0 %1378
      %1380 = vrot.lane.b32.xlu0 %v455, 28
      %v1381 = vpop.permute.xlu0 %1380
      %1382 = vrot.lane.b32.xlu0 %v456, 28
      %v1383 = vpop.permute.xlu0 %1382
      %1384 = vrot.lane.b32.xlu0 %v459, 28
      %v1385 = vpop.permute.xlu0 %1384
      %1386 = vrot.lane.b32.xlu0 %v460, 28
      %v1387 = vpop.permute.xlu0 %1386
      %1388 = vrot.lane.b32.xlu0 %v463, 28
      %v1389 = vpop.permute.xlu0 %1388
      %1390 = vrot.lane.b32.xlu0 %v464, 28
      %v1391 = vpop.permute.xlu0 %1390
      %1392 = vrot.lane.b32.xlu0 %v467, 28
      %v1393 = vpop.permute.xlu0 %1392
      %1394 = vrot.lane.b32.xlu0 %v468, 28
      %v1395 = vpop.permute.xlu0 %1394
      %1396 = vrot.lane.b32.xlu0 %v471, 28
      %v1397 = vpop.permute.xlu0 %1396
      %1398 = vrot.lane.b32.xlu0 %v472, 28
      %v1399 = vpop.permute.xlu0 %1398
      %1400 = vrot.lane.b32.xlu0 %v475, 28
      %v1401 = vpop.permute.xlu0 %1400
      %1402 = vrot.lane.b32.xlu0 %v476, 28
      %v1403 = vpop.permute.xlu0 %1402
      %1404 = vrot.lane.b32.xlu0 %v479, 28
      %v1405 = vpop.permute.xlu0 %1404
      %1406 = vrot.lane.b32.xlu0 %v480, 28
      %v1407 = vpop.permute.xlu0 %1406
      %1408 = vrot.lane.b32.xlu0 %v483, 28
      %v1409 = vpop.permute.xlu0 %1408
      %1410 = vrot.lane.b32.xlu0 %v484, 28
      %v1411 = vpop.permute.xlu0 %1410
      %1412 = vrot.lane.b32.xlu0 %v487, 28
      %v1413 = vpop.permute.xlu0 %1412
      %1414 = vrot.lane.b32.xlu0 %v488, 28
      %v1415 = vpop.permute.xlu0 %1414
      %1448 = vrot.lane.b32.xlu0 %v680, 32
      %v1449 = vpop.permute.xlu0 %1448
      %1450 = vrot.lane.b32.xlu0 %v682, 32
      %v1451 = vpop.permute.xlu0 %1450
      %1452 = vrot.lane.b32.xlu0 %v685, 32
      %v1453 = vpop.permute.xlu0 %1452
      %1454 = vrot.lane.b32.xlu0 %v687, 32
      %v1455 = vpop.permute.xlu0 %1454
      %1456 = vrot.lane.b32.xlu0 %v690, 32
      %v1457 = vpop.permute.xlu0 %1456
      %1458 = vrot.lane.b32.xlu0 %v692, 32
      %v1459 = vpop.permute.xlu0 %1458
      %1460 = vrot.lane.b32.xlu0 %v695, 32
      %v1461 = vpop.permute.xlu0 %1460
      %1462 = vrot.lane.b32.xlu0 %v697, 32
      %v1463 = vpop.permute.xlu0 %1462
      %1464 = vrot.lane.b32.xlu0 %v700, 32
      %v1465 = vpop.permute.xlu0 %1464
      %1466 = vrot.lane.b32.xlu0 %v702, 32
      %v1467 = vpop.permute.xlu0 %1466
      %1468 = vrot.lane.b32.xlu0 %v705, 32
      %v1469 = vpop.permute.xlu0 %1468
      %1470 = vrot.lane.b32.xlu0 %v707, 32
      %v1471 = vpop.permute.xlu0 %1470
      %1472 = vrot.lane.b32.xlu0 %v710, 32
      %v1473 = vpop.permute.xlu0 %1472
      %1474 = vrot.lane.b32.xlu0 %v712, 32
      %v1475 = vpop.permute.xlu0 %1474
      %1476 = vrot.lane.b32.xlu0 %v715, 32
      %v1477 = vpop.permute.xlu0 %1476
      %1478 = vrot.lane.b32.xlu0 %v717, 32
      %v1479 = vpop.permute.xlu0 %1478
      %1480 = vrot.lane.b32.xlu0 %v720, 32
      %v1481 = vpop.permute.xlu0 %1480
      %1482 = vrot.lane.b32.xlu0 %v722, 32
      %v1483 = vpop.permute.xlu0 %1482
      %1484 = vrot.lane.b32.xlu0 %v725, 32
      %v1485 = vpop.permute.xlu0 %1484
      %1486 = vrot.lane.b32.xlu0 %v727, 32
      %v1487 = vpop.permute.xlu0 %1486
      %1488 = vrot.lane.b32.xlu0 %v730, 32
      %v1489 = vpop.permute.xlu0 %1488
      %1490 = vrot.lane.b32.xlu0 %v732, 32
      %v1491 = vpop.permute.xlu0 %1490
      %1492 = vrot.lane.b32.xlu0 %v735, 32
      %v1493 = vpop.permute.xlu0 %1492
      %1494 = vrot.lane.b32.xlu0 %v737, 32
      %v1495 = vpop.permute.xlu0 %1494
      %1496 = vrot.lane.b32.xlu0 %v740, 32
      %v1497 = vpop.permute.xlu0 %1496
      %1498 = vrot.lane.b32.xlu0 %v742, 32
      %v1499 = vpop.permute.xlu0 %1498
      %1500 = vrot.lane.b32.xlu0 %v745, 32
      %v1501 = vpop.permute.xlu0 %1500
      %1502 = vrot.lane.b32.xlu0 %v747, 32
      %v1503 = vpop.permute.xlu0 %1502
      %1504 = vrot.lane.b32.xlu0 %v759, 32
      %v1505 = vpop.permute.xlu0 %1504
      %1506 = vrot.lane.b32.xlu0 %v761, 32
      %v1507 = vpop.permute.xlu0 %1506
      %1508 = vrot.lane.b32.xlu0 %v773, 32
      %v1509 = vpop.permute.xlu0 %1508
      %1510 = vrot.lane.b32.xlu0 %v775, 32
      %v1511 = vpop.permute.xlu0 %1510
      %v1544 = vsel %vm279, %v541, %v777
      %v1545 = vsel %vm279, %v543, %v779
      %v1546 = vsel %vm279, %v546, %v781
      %v1547 = vsel %vm279, %v548, %v783
      %v1548 = vsel %vm279, %v551, %v785
      %v1549 = vsel %vm279, %v553, %v787
      %v1550 = vsel %vm279, %v556, %v789
      %v1551 = vsel %vm279, %v558, %v791
      %v1552 = vsel %vm279, %v561, %v793
      %v1553 = vsel %vm279, %v563, %v795
      %v1554 = vsel %vm279, %v566, %v797
      %v1555 = vsel %vm279, %v568, %v799
      %v1556 = vsel %vm279, %v571, %v801
      %v1557 = vsel %vm279, %v573, %v803
      %v1558 = vsel %vm279, %v576, %v805
      %v1559 = vsel %vm279, %v578, %v807
      %v1560 = vsel %vm279, %v581, %v809
      %v1561 = vsel %vm279, %v583, %v811
      %v1562 = vsel %vm279, %v586, %v813
      %v1563 = vsel %vm279, %v588, %v815
      %v1564 = vsel %vm279, %v591, %v817
      %v1565 = vsel %vm279, %v593, %v819
      %v1566 = vsel %vm279, %v596, %v821
      %v1567 = vsel %vm279, %v598, %v823
      %v1568 = vsel %vm279, %v601, %v825
      %v1569 = vsel %vm279, %v603, %v827
      %v1570 = vsel %vm279, %v606, %v829
      %v1571 = vsel %vm279, %v608, %v831
      %v1572 = vsel %vm279, %v611, %v833
      %v1573 = vsel %vm279, %v613, %v835
      %v1574 = vsel %vm279, %v616, %v837
      %v1575 = vsel %vm279, %v618, %v839
      %vm1576 = vcmask 64512
      %v1577 = vsel %vm1576, %v1544, %v873
      %v1578 = vsel %vm1576, %v1545, %v875
      %v1579 = vsel %vm1576, %v1546, %v877
      %v1580 = vsel %vm1576, %v1547, %v879
      %v1581 = vsel %vm1576, %v1548, %v881
      %v1582 = vsel %vm1576, %v1549, %v883
      %v1583 = vsel %vm1576, %v1550, %v885
      %v1584 = vsel %vm1576, %v1551, %v887
      %v1585 = vsel %vm1576, %v1552, %v889
      %v1586 = vsel %vm1576, %v1553, %v891
      %v1587 = vsel %vm1576, %v1554, %v893
      %v1588 = vsel %vm1576, %v1555, %v895
      %v1589 = vsel %vm1576, %v1556, %v897
      %v1590 = vsel %vm1576, %v1557, %v899
      %v1591 = vsel %vm1576, %v1558, %v901
      %v1592 = vsel %vm1576, %v1559, %v903
      %v1593 = vsel %vm1576, %v1560, %v905
      %v1594 = vsel %vm1576, %v1561, %v907
      %v1595 = vsel %vm1576, %v1562, %v909
      %v1596 = vsel %vm1576, %v1563, %v911
      %v1597 = vsel %vm1576, %v1564, %v913
      %v1598 = vsel %vm1576, %v1565, %v915
      %v1599 = vsel %vm1576, %v1566, %v917
      %v1600 = vsel %vm1576, %v1567, %v919
      %v1601 = vsel %vm1576, %v1568, %v921
      %v1602 = vsel %vm1576, %v1569, %v923
      %v1603 = vsel %vm1576, %v1570, %v925
      %v1604 = vsel %vm1576, %v1571, %v927
      %v1605 = vsel %vm1576, %v1572, %v929
      %v1606 = vsel %vm1576, %v1573, %v931
      %v1607 = vsel %vm1576, %v1574, %v933
      %v1608 = vsel %vm1576, %v1575, %v935
      %vm1609 = vcmask 97280
      %v1610 = vsel %vm1609, %v1577, %v969
      %v1611 = vsel %vm1609, %v1578, %v971
      %v1612 = vsel %vm1609, %v1579, %v973
      %v1613 = vsel %vm1609, %v1580, %v975
      %v1614 = vsel %vm1609, %v1581, %v977
      %v1615 = vsel %vm1609, %v1582, %v979
      %v1616 = vsel %vm1609, %v1583, %v981
      %v1617 = vsel %vm1609, %v1584, %v983
      %v1618 = vsel %vm1609, %v1585, %v985
      %v1619 = vsel %vm1609, %v1586, %v987
      %v1620 = vsel %vm1609, %v1587, %v989
      %v1621 = vsel %vm1609, %v1588, %v991
      %v1622 = vsel %vm1609, %v1589, %v993
      %v1623 = vsel %vm1609, %v1590, %v995
      %v1624 = vsel %vm1609, %v1591, %v997
      %v1625 = vsel %vm1609, %v1592, %v999
      %v1626 = vsel %vm1609, %v1593, %v1001
      %v1627 = vsel %vm1609, %v1594, %v1003
      %v1628 = vsel %vm1609, %v1595, %v1005
      %v1629 = vsel %vm1609, %v1596, %v1007
      %v1630 = vsel %vm1609, %v1597, %v1009
      %v1631 = vsel %vm1609, %v1598, %v1011
      %v1632 = vsel %vm1609, %v1599, %v1013
      %v1633 = vsel %vm1609, %v1600, %v1015
      %v1634 = vsel %vm1609, %v1601, %v1017
      %v1635 = vsel %vm1609, %v1602, %v1019
      %v1636 = vsel %vm1609, %v1603, %v1021
      %v1637 = vsel %vm1609, %v1604, %v1023
      %v1638 = vsel %vm1609, %v1605, %v1025
      %v1639 = vsel %vm1609, %v1606, %v1027
      %v1640 = vsel %vm1609, %v1607, %v1029
      %v1641 = vsel %vm1609, %v1608, %v1031
      %vm1642 = vcmask 130048
      %v1643 = vsel %vm1642, %v1610, %v1065
      %v1644 = vsel %vm1642, %v1611, %v1067
      %v1645 = vsel %vm1642, %v1612, %v1069
      %v1646 = vsel %vm1642, %v1613, %v1071
      %v1647 = vsel %vm1642, %v1614, %v1073
      %v1648 = vsel %vm1642, %v1615, %v1075
      %v1649 = vsel %vm1642, %v1616, %v1077
      %v1650 = vsel %vm1642, %v1617, %v1079
      %v1651 = vsel %vm1642, %v1618, %v1081
      %v1652 = vsel %vm1642, %v1619, %v1083
      %v1653 = vsel %vm1642, %v1620, %v1085
      %v1654 = vsel %vm1642, %v1621, %v1087
      %v1655 = vsel %vm1642, %v1622, %v1089
      %v1656 = vsel %vm1642, %v1623, %v1091
      %v1657 = vsel %vm1642, %v1624, %v1093
      %v1658 = vsel %vm1642, %v1625, %v1095
      %v1659 = vsel %vm1642, %v1626, %v1097
      %v1660 = vsel %vm1642, %v1627, %v1099
      %v1661 = vsel %vm1642, %v1628, %v1101
      %v1662 = vsel %vm1642, %v1629, %v1103
      %v1663 = vsel %vm1642, %v1630, %v1105
      %v1664 = vsel %vm1642, %v1631, %v1107
      %v1665 = vsel %vm1642, %v1632, %v1109
      %v1666 = vsel %vm1642, %v1633, %v1111
      %v1667 = vsel %vm1642, %v1634, %v1113
      %v1668 = vsel %vm1642, %v1635, %v1115
      %v1669 = vsel %vm1642, %v1636, %v1117
      %v1670 = vsel %vm1642, %v1637, %v1119
      %v1671 = vsel %vm1642, %v1638, %v1121
      %v1672 = vsel %vm1642, %v1639, %v1123
      %v1673 = vsel %vm1642, %v1640, %v1125
      %v1674 = vsel %vm1642, %v1641, %v1127
      %vm1675 = vcmask 162816
      %v1676 = vsel %vm1675, %v1643, %v1161
      %v1677 = vsel %vm1675, %v1644, %v1163
      %v1678 = vsel %vm1675, %v1645, %v1165
      %v1679 = vsel %vm1675, %v1646, %v1167
      %v1680 = vsel %vm1675, %v1647, %v1169
      %v1681 = vsel %vm1675, %v1648, %v1171
      %v1682 = vsel %vm1675, %v1649, %v1173
      %v1683 = vsel %vm1675, %v1650, %v1175
      %v1684 = vsel %vm1675, %v1651, %v1177
      %v1685 = vsel %vm1675, %v1652, %v1179
      %v1686 = vsel %vm1675, %v1653, %v1181
      %v1687 = vsel %vm1675, %v1654, %v1183
      %v1688 = vsel %vm1675, %v1655, %v1185
      %v1689 = vsel %vm1675, %v1656, %v1187
      %v1690 = vsel %vm1675, %v1657, %v1189
      %v1691 = vsel %vm1675, %v1658, %v1191
      %v1692 = vsel %vm1675, %v1659, %v1193
      %v1693 = vsel %vm1675, %v1660, %v1195
      %v1694 = vsel %vm1675, %v1661, %v1197
      %v1695 = vsel %vm1675, %v1662, %v1199
      %v1696 = vsel %vm1675, %v1663, %v1201
      %v1697 = vsel %vm1675, %v1664, %v1203
      %v1698 = vsel %vm1675, %v1665, %v1205
      %v1699 = vsel %vm1675, %v1666, %v1207
      %v1700 = vsel %vm1675, %v1667, %v1209
      %v1701 = vsel %vm1675, %v1668, %v1211
      %v1702 = vsel %vm1675, %v1669, %v1213
      %v1703 = vsel %vm1675, %v1670, %v1215
      %v1704 = vsel %vm1675, %v1671, %v1217
      %v1705 = vsel %vm1675, %v1672, %v1219
      %v1706 = vsel %vm1675, %v1673, %v1221
      %v1707 = vsel %vm1675, %v1674, %v1223
      %vm1708 = vcmask 195584
      %v1709 = vsel %vm1708, %v1676, %v1257
      %v1710 = vsel %vm1708, %v1677, %v1259
      %v1711 = vsel %vm1708, %v1678, %v1261
      %v1712 = vsel %vm1708, %v1679, %v1263
      %v1713 = vsel %vm1708, %v1680, %v1265
      %v1714 = vsel %vm1708, %v1681, %v1267
      %v1715 = vsel %vm1708, %v1682, %v1269
      %v1716 = vsel %vm1708, %v1683, %v1271
      %v1717 = vsel %vm1708, %v1684, %v1273
      %v1718 = vsel %vm1708, %v1685, %v1275
      %v1719 = vsel %vm1708, %v1686, %v1277
      %v1720 = vsel %vm1708, %v1687, %v1279
      %v1721 = vsel %vm1708, %v1688, %v1281
      %v1722 = vsel %vm1708, %v1689, %v1283
      %v1723 = vsel %vm1708, %v1690, %v1285
      %v1724 = vsel %vm1708, %v1691, %v1287
      %v1725 = vsel %vm1708, %v1692, %v1289
      %v1726 = vsel %vm1708, %v1693, %v1291
      %v1727 = vsel %vm1708, %v1694, %v1293
      %v1728 = vsel %vm1708, %v1695, %v1295
      %v1729 = vsel %vm1708, %v1696, %v1297
      %v1730 = vsel %vm1708, %v1697, %v1299
      %v1731 = vsel %vm1708, %v1698, %v1301
      %v1732 = vsel %vm1708, %v1699, %v1303
      %v1733 = vsel %vm1708, %v1700, %v1305
      %v1734 = vsel %vm1708, %v1701, %v1307
      %v1735 = vsel %vm1708, %v1702, %v1309
      %v1736 = vsel %vm1708, %v1703, %v1311
      %v1737 = vsel %vm1708, %v1704, %v1313
      %v1738 = vsel %vm1708, %v1705, %v1315
      %v1739 = vsel %vm1708, %v1706, %v1317
      %v1740 = vsel %vm1708, %v1707, %v1319
      %vm1741 = vcmask 228352
      %v1742 = vsel %vm1741, %v1709, %v1353
      %v1743 = vsel %vm1741, %v1710, %v1355
      %v1744 = vsel %vm1741, %v1711, %v1357
      %v1745 = vsel %vm1741, %v1712, %v1359
      %v1746 = vsel %vm1741, %v1713, %v1361
      %v1747 = vsel %vm1741, %v1714, %v1363
      %v1748 = vsel %vm1741, %v1715, %v1365
      %v1749 = vsel %vm1741, %v1716, %v1367
      %v1750 = vsel %vm1741, %v1717, %v1369
      %v1751 = vsel %vm1741, %v1718, %v1371
      %v1752 = vsel %vm1741, %v1719, %v1373
      %v1753 = vsel %vm1741, %v1720, %v1375
      %v1754 = vsel %vm1741, %v1721, %v1377
      %v1755 = vsel %vm1741, %v1722, %v1379
      %v1756 = vsel %vm1741, %v1723, %v1381
      %v1757 = vsel %vm1741, %v1724, %v1383
      %v1758 = vsel %vm1741, %v1725, %v1385
      %v1759 = vsel %vm1741, %v1726, %v1387
      %v1760 = vsel %vm1741, %v1727, %v1389
      %v1761 = vsel %vm1741, %v1728, %v1391
      %v1762 = vsel %vm1741, %v1729, %v1393
      %v1763 = vsel %vm1741, %v1730, %v1395
      %v1764 = vsel %vm1741, %v1731, %v1397
      %v1765 = vsel %vm1741, %v1732, %v1399
      %v1766 = vsel %vm1741, %v1733, %v1401
      %v1767 = vsel %vm1741, %v1734, %v1403
      %v1768 = vsel %vm1741, %v1735, %v1405
      %v1769 = vsel %vm1741, %v1736, %v1407
      %v1770 = vsel %vm1741, %v1737, %v1409
      %v1771 = vsel %vm1741, %v1738, %v1411
      %v1772 = vsel %vm1741, %v1739, %v1413
      %v1773 = vsel %vm1741, %v1740, %v1415
      %vm1774 = vcmask 261120
      %v1775 = vsel %vm1774, %v1742, %v1449
      %v1776 = vsel %vm1774, %v1743, %v1451
      %v1777 = vsel %vm1774, %v1744, %v1453
      %v1778 = vsel %vm1774, %v1745, %v1455
      %v1779 = vsel %vm1774, %v1746, %v1457
      %v1780 = vsel %vm1774, %v1747, %v1459
      %v1781 = vsel %vm1774, %v1748, %v1461
      %v1782 = vsel %vm1774, %v1749, %v1463
      %v1783 = vsel %vm1774, %v1750, %v1465
      %v1784 = vsel %vm1774, %v1751, %v1467
      %v1785 = vsel %vm1774, %v1752, %v1469
      %v1786 = vsel %vm1774, %v1753, %v1471
      %v1787 = vsel %vm1774, %v1754, %v1473
      %v1788 = vsel %vm1774, %v1755, %v1475
      %v1789 = vsel %vm1774, %v1756, %v1477
      %v1790 = vsel %vm1774, %v1757, %v1479
      %v1791 = vsel %vm1774, %v1758, %v1481
      %v1792 = vsel %vm1774, %v1759, %v1483
      %v1793 = vsel %vm1774, %v1760, %v1485
      %v1794 = vsel %vm1774, %v1761, %v1487
      %v1795 = vsel %vm1774, %v1762, %v1489
      %v1796 = vsel %vm1774, %v1763, %v1491
      %v1797 = vsel %vm1774, %v1764, %v1493
      %v1798 = vsel %vm1774, %v1765, %v1495
      %v1799 = vsel %vm1774, %v1766, %v1497
      %v1800 = vsel %vm1774, %v1767, %v1499
      %v1801 = vsel %vm1774, %v1768, %v1501
      %v1802 = vsel %vm1774, %v1769, %v1503
      %v1803 = vsel %vm1774, %v1770, %v1505
      %v1804 = vsel %vm1774, %v1771, %v1507
      %v1805 = vsel %vm1774, %v1772, %v1509
      %v1806 = vsel %vm1774, %v1773, %v1511
      %v1807 = vld [vmem:[%s1] sm:$0xff]
      %v1808 = vld [vmem:[%s1 + $0x8] sm:$0xff]
      %v1809 = vld [vmem:[%s1 + $0x10] sm:$0xff]
      %v1810 = vld [vmem:[%s1 + $0x18] sm:$0xff]
      %v1811 = vld [vmem:[%s1 + $0x20] sm:$0xf]
      %vm1812 = vcmask 293888
      %v1814 = vsel %vm1812, %v1775, 0
      %v1817 = vsel %vm1812, %v1776, 0
      %v1820 = vsel %vm1812, %v1777, 0
      %v1823 = vsel %vm1812, %v1778, 0
      %v1826 = vsel %vm1812, %v1779, 0
      %v1829 = vsel %vm1812, %v1780, 0
      %v1832 = vsel %vm1812, %v1781, 0
      %v1835 = vsel %vm1812, %v1782, 0
      %v1838 = vsel %vm1812, %v1783, 0
      %v1841 = vsel %vm1812, %v1784, 0
      %v1844 = vsel %vm1812, %v1785, 0
      %v1847 = vsel %vm1812, %v1786, 0
      %v1850 = vsel %vm1812, %v1787, 0
      %v1853 = vsel %vm1812, %v1788, 0
      %v1856 = vsel %vm1812, %v1789, 0
      %v1859 = vsel %vm1812, %v1790, 0
      %v1862 = vsel %vm1812, %v1791, 0
      %v1865 = vsel %vm1812, %v1792, 0
      %v1868 = vsel %vm1812, %v1793, 0
      %v1871 = vsel %vm1812, %v1794, 0
      %v1874 = vsel %vm1812, %v1795, 0
      %v1877 = vsel %vm1812, %v1796, 0
      %v1880 = vsel %vm1812, %v1797, 0
      %v1883 = vsel %vm1812, %v1798, 0
      %v1886 = vsel %vm1812, %v1799, 0
      %v1889 = vsel %vm1812, %v1800, 0
      %v1892 = vsel %vm1812, %v1801, 0
      %v1895 = vsel %vm1812, %v1802, 0
      %v1898 = vsel %vm1812, %v1803, 0
      %v1901 = vsel %vm1812, %v1804, 0
      %v1904 = vsel %vm1812, %v1805, 0
      %v1907 = vsel %vm1812, %v1806, 0
      %vm1909 = vcmask 1043456
      %v1911 = vsel %vm1909, %v1811, 0
      %1913 = vmatprep.subr.mxu0 0.0
      %1914 = vmatpush1.msra.mxu0 0.0
      %1915 = vmatprep.subr.mxu0 0.0
      %1916 = vmatpush1.msra.mxu0 0.0
      %1917 = vmatprep.subr.mxu0 0.0
      %1918 = vmatpush1.msra.mxu0 0.0
      %1919 = vmatprep.subr.mxu0 0.0
      %1920 = vmatpush1.msra.mxu0 0.0
      %1921 = vmatprep.subr.mxu0 0.0
      %1922 = vmatpush1.msra.mxu0 0.0
      %1923 = vmatprep.subr.mxu0 0.0
      %1924 = vmatpush1.msra.mxu0 0.0
      %1925 = vmatprep.subr.mxu0 0.0
      %1926 = vmatpush1.msra.mxu0 0.0
      %1927 = vmatprep.subr.mxu0 0.0
      %1928 = vmatpush1.msra.mxu0 0.0
      %1929 = vmatprep.subr.mxu0 0.0
      %1930 = vmatpush1.msra.mxu0 0.0
      %1931 = vmatprep.subr.mxu0 0.0
      %1932 = vmatpush1.msra.mxu0 0.0
      %1933 = vmatprep.subr.mxu0 0.0
      %1934 = vmatpush1.msra.mxu0 0.0
      %1935 = vmatprep.subr.mxu0 0.0
      %1936 = vmatpush1.msra.mxu0 %v1911
      %1937 = vmatprep.subr.mxu0 0.0
      %1938 = vmatpush1.msra.mxu0 %v1810
      %1939 = vmatprep.subr.mxu0 0.0
      %1940 = vmatpush1.msra.mxu0 %v1809
      %1941 = vmatprep.subr.mxu0 0.0
      %1942 = vmatpush1.msra.mxu0 %v1808
      %1943 = vmatprep.subr.mxu0 0.0
      %1944 = vmatpush1.msra.mxu0 %v1807
      %1945 = vmatprep.subr.mxu0 0.0
      %1946 = vmatpush2.msra.mxu0 0.0
      %1947 = vmatprep.subr.mxu0 0.0
      %1948 = vmatpush2.msra.mxu0 0.0
      %1949 = vmatprep.subr.mxu0 0.0
      %1950 = vmatpush2.msra.mxu0 0.0
      %1951 = vmatprep.subr.mxu0 0.0
      %1952 = vmatpush2.msra.mxu0 0.0
      %1953 = vmatprep.subr.mxu0 0.0
      %1954 = vmatpush2.msra.mxu0 0.0
      %1955 = vmatprep.subr.mxu0 0.0
      %1956 = vmatpush2.msra.mxu0 0.0
      %1957 = vmatprep.subr.mxu0 0.0
      %1958 = vmatpush2.msra.mxu0 0.0
      %1959 = vmatprep.subr.mxu0 0.0
      %1960 = vmatpush2.msra.mxu0 0.0
      %1961 = vmatprep.subr.mxu0 0.0
      %1962 = vmatpush2.msra.mxu0 0.0
      %1963 = vmatprep.subr.mxu0 0.0
      %1964 = vmatpush2.msra.mxu0 0.0
      %1965 = vmatprep.subr.mxu0 0.0
      %1966 = vmatpush2.msra.mxu0 0.0
      %1967 = vmatprep.subr.mxu0 0.0
      %1968 = vmatpush2.msra.mxu0 0.0
      %1969 = vmatprep.subr.mxu0 0.0
      %1970 = vmatpush2.msra.mxu0 0.0
      %1971 = vmatprep.subr.mxu0 0.0
      %1972 = vmatpush2.msra.mxu0 0.0
      %1973 = vmatprep.subr.mxu0 0.0
      %1974 = vmatpush2.msra.mxu0 0.0
      %1975 = vmatprep.subr.mxu0 0.0
      %1976 = vmatpush2.msra.mxu0 0.0
      %1977 = vmatprep.mubr.f32.mxu0 0.0
      %1978 = vmatmul.mubr.f32.gmra.mxu0 %v1814
      %v1979 = vpop.f32.mrf.mxu0
      %v1980 = vadd.f32 0.0, %v1979
      %v1981 = vpop.f32.mrf.mxu0
      %1982 = vmatprep.mubr.f32.mxu0 0.0
      %1983 = vmatmul.mubr.f32.gmra.mxu0 %v1817
      %v1984 = vpop.f32.mrf.mxu0
      %v1985 = vadd.f32 0.0, %v1984
      %v1986 = vpop.f32.mrf.mxu0
      %1987 = vmatprep.mubr.f32.mxu0 0.0
      %1988 = vmatmul.mubr.f32.gmra.mxu0 %v1820
      %v1989 = vpop.f32.mrf.mxu0
      %v1990 = vadd.f32 0.0, %v1989
      %v1991 = vpop.f32.mrf.mxu0
      %1992 = vmatprep.mubr.f32.mxu0 0.0
      %1993 = vmatmul.mubr.f32.gmra.mxu0 %v1823
      %v1994 = vpop.f32.mrf.mxu0
      %v1995 = vadd.f32 0.0, %v1994
      %v1996 = vpop.f32.mrf.mxu0
      %1997 = vmatprep.mubr.f32.mxu0 0.0
      %1998 = vmatmul.mubr.f32.gmra.mxu0 %v1826
      %v1999 = vpop.f32.mrf.mxu0
      %v2000 = vadd.f32 0.0, %v1999
      %v2001 = vpop.f32.mrf.mxu0
      %2002 = vmatprep.mubr.f32.mxu0 0.0
      %2003 = vmatmul.mubr.f32.gmra.mxu0 %v1829
      %v2004 = vpop.f32.mrf.mxu0
      %v2005 = vadd.f32 0.0, %v2004
      %v2006 = vpop.f32.mrf.mxu0
      %2007 = vmatprep.mubr.f32.mxu0 0.0
      %2008 = vmatmul.mubr.f32.gmra.mxu0 %v1832
      %v2009 = vpop.f32.mrf.mxu0
      %v2010 = vadd.f32 0.0, %v2009
      %v2011 = vpop.f32.mrf.mxu0
      %2012 = vmatprep.mubr.f32.mxu0 0.0
      %2013 = vmatmul.mubr.f32.gmra.mxu0 %v1835
      %v2014 = vpop.f32.mrf.mxu0
      %v2015 = vadd.f32 0.0, %v2014
      %v2016 = vpop.f32.mrf.mxu0
      %2017 = vmatprep.mubr.f32.mxu0 0.0
      %2018 = vmatmul.mubr.f32.gmra.mxu0 %v1838
      %v2019 = vpop.f32.mrf.mxu0
      %v2020 = vadd.f32 0.0, %v2019
      %v2021 = vpop.f32.mrf.mxu0
      %2022 = vmatprep.mubr.f32.mxu0 0.0
      %2023 = vmatmul.mubr.f32.gmra.mxu0 %v1841
      %v2024 = vpop.f32.mrf.mxu0
      %v2025 = vadd.f32 0.0, %v2024
      %v2026 = vpop.f32.mrf.mxu0
      %2027 = vmatprep.mubr.f32.mxu0 0.0
      %2028 = vmatmul.mubr.f32.gmra.mxu0 %v1844
      %v2029 = vpop.f32.mrf.mxu0
      %v2030 = vadd.f32 0.0, %v2029
      %v2031 = vpop.f32.mrf.mxu0
      %2032 = vmatprep.mubr.f32.mxu0 0.0
      %2033 = vmatmul.mubr.f32.gmra.mxu0 %v1847
      %v2034 = vpop.f32.mrf.mxu0
      %v2035 = vadd.f32 0.0, %v2034
      %v2036 = vpop.f32.mrf.mxu0
      %2037 = vmatprep.mubr.f32.mxu0 0.0
      %2038 = vmatmul.mubr.f32.gmra.mxu0 %v1850
      %v2039 = vpop.f32.mrf.mxu0
      %v2040 = vadd.f32 0.0, %v2039
      %v2041 = vpop.f32.mrf.mxu0
      %2042 = vmatprep.mubr.f32.mxu0 0.0
      %2043 = vmatmul.mubr.f32.gmra.mxu0 %v1853
      %v2044 = vpop.f32.mrf.mxu0
      %v2045 = vadd.f32 0.0, %v2044
      %v2046 = vpop.f32.mrf.mxu0
      %2047 = vmatprep.mubr.f32.mxu0 0.0
      %2048 = vmatmul.mubr.f32.gmra.mxu0 %v1856
      %v2049 = vpop.f32.mrf.mxu0
      %v2050 = vadd.f32 0.0, %v2049
      %v2051 = vpop.f32.mrf.mxu0
      %2052 = vmatprep.mubr.f32.mxu0 0.0
      %2053 = vmatmul.mubr.f32.gmra.mxu0 %v1859
      %v2054 = vpop.f32.mrf.mxu0
      %v2055 = vadd.f32 0.0, %v2054
      %v2056 = vpop.f32.mrf.mxu0
      %2057 = vmatprep.mubr.f32.mxu0 0.0
      %2058 = vmatmul.mubr.f32.gmra.mxu0 %v1862
      %v2059 = vpop.f32.mrf.mxu0
      %v2060 = vadd.f32 0.0, %v2059
      %v2061 = vpop.f32.mrf.mxu0
      %2062 = vmatprep.mubr.f32.mxu0 0.0
      %2063 = vmatmul.mubr.f32.gmra.mxu0 %v1865
      %v2064 = vpop.f32.mrf.mxu0
      %v2065 = vadd.f32 0.0, %v2064
      %v2066 = vpop.f32.mrf.mxu0
      %2067 = vmatprep.mubr.f32.mxu0 0.0
      %2068 = vmatmul.mubr.f32.gmra.mxu0 %v1868
      %v2069 = vpop.f32.mrf.mxu0
      %v2070 = vadd.f32 0.0, %v2069
      %v2071 = vpop.f32.mrf.mxu0
      %2072 = vmatprep.mubr.f32.mxu0 0.0
      %2073 = vmatmul.mubr.f32.gmra.mxu0 %v1871
      %v2074 = vpop.f32.mrf.mxu0
      %v2075 = vadd.f32 0.0, %v2074
      %v2076 = vpop.f32.mrf.mxu0
      %2077 = vmatprep.mubr.f32.mxu0 0.0
      %2078 = vmatmul.mubr.f32.gmra.mxu0 %v1874
      %v2079 = vpop.f32.mrf.mxu0
      %v2080 = vadd.f32 0.0, %v2079
      %v2081 = vpop.f32.mrf.mxu0
      %2082 = vmatprep.mubr.f32.mxu0 0.0
      %2083 = vmatmul.mubr.f32.gmra.mxu0 %v1877
      %v2084 = vpop.f32.mrf.mxu0
      %v2085 = vadd.f32 0.0, %v2084
      %v2086 = vpop.f32.mrf.mxu0
      %2087 = vmatprep.mubr.f32.mxu0 0.0
      %2088 = vmatmul.mubr.f32.gmra.mxu0 %v1880
      %v2089 = vpop.f32.mrf.mxu0
      %v2090 = vadd.f32 0.0, %v2089
      %v2091 = vpop.f32.mrf.mxu0
      %2092 = vmatprep.mubr.f32.mxu0 0.0
      %2093 = vmatmul.mubr.f32.gmra.mxu0 %v1883
      %v2094 = vpop.f32.mrf.mxu0
      %v2095 = vadd.f32 0.0, %v2094
      %v2096 = vpop.f32.mrf.mxu0
      %2097 = vmatprep.mubr.f32.mxu0 0.0
      %2098 = vmatmul.mubr.f32.gmra.mxu0 %v1886
      %v2099 = vpop.f32.mrf.mxu0
      %v2100 = vadd.f32 0.0, %v2099
      %v2101 = vpop.f32.mrf.mxu0
      %2102 = vmatprep.mubr.f32.mxu0 0.0
      %2103 = vmatmul.mubr.f32.gmra.mxu0 %v1889
      %v2104 = vpop.f32.mrf.mxu0
      %v2105 = vadd.f32 0.0, %v2104
      %v2106 = vpop.f32.mrf.mxu0
      %2107 = vmatprep.mubr.f32.mxu0 0.0
      %2108 = vmatmul.mubr.f32.gmra.mxu0 %v1892
      %v2109 = vpop.f32.mrf.mxu0
      %v2110 = vadd.f32 0.0, %v2109
      %v2111 = vpop.f32.mrf.mxu0
      %2112 = vmatprep.mubr.f32.mxu0 0.0
      %2113 = vmatmul.mubr.f32.gmra.mxu0 %v1895
      %v2114 = vpop.f32.mrf.mxu0
      %v2115 = vadd.f32 0.0, %v2114
      %v2116 = vpop.f32.mrf.mxu0
      %2117 = vmatprep.mubr.f32.mxu0 0.0
      %2118 = vmatmul.mubr.f32.gmra.mxu0 %v1898
      %v2119 = vpop.f32.mrf.mxu0
      %v2120 = vadd.f32 0.0, %v2119
      %v2121 = vpop.f32.mrf.mxu0
      %2122 = vmatprep.mubr.f32.mxu0 0.0
      %2123 = vmatmul.mubr.f32.gmra.mxu0 %v1901
      %v2124 = vpop.f32.mrf.mxu0
      %v2125 = vadd.f32 0.0, %v2124
      %v2126 = vpop.f32.mrf.mxu0
      %2127 = vmatprep.mubr.f32.mxu0 0.0
      %2128 = vmatmul.mubr.f32.gmra.mxu0 %v1904
      %v2129 = vpop.f32.mrf.mxu0
      %v2130 = vadd.f32 0.0, %v2129
      %v2131 = vpop.f32.mrf.mxu0
      %2132 = vmatprep.mubr.f32.mxu0 0.0
      %2133 = vmatmul.mubr.f32.gmra.mxu0 %v1907
      %v2134 = vpop.f32.mrf.mxu0
      %v2135 = vadd.f32 0.0, %v2134
      %v2136 = vpop.f32.mrf.mxu0
      %2137 = vdwg.mxu0
      %v2138 = vld [vmem:[%s2] sm:$0x1]
      %v2140 = vlaneseq
      %v2141 = vshrl.u32 %v2140, 7
      %v2142 = vsub.s32 0, %v2141
      %v2143 = vrot.slane %v2138, %v2142
      %v2145 = vmul.f32 %v1980, %v2143
      %v2146 = vmul.f32 %v1985, %v2143
      %v2147 = vmul.f32 %v1990, %v2143
      %v2148 = vmul.f32 %v1995, %v2143
      %v2149 = vmul.f32 %v2000, %v2143
      %v2150 = vmul.f32 %v2005, %v2143
      %v2151 = vmul.f32 %v2010, %v2143
      %v2152 = vmul.f32 %v2015, %v2143
      %v2153 = vmul.f32 %v2020, %v2143
      %v2154 = vmul.f32 %v2025, %v2143
      %v2155 = vmul.f32 %v2030, %v2143
      %v2156 = vmul.f32 %v2035, %v2143
      %v2157 = vmul.f32 %v2040, %v2143
      %v2158 = vmul.f32 %v2045, %v2143
      %v2159 = vmul.f32 %v2050, %v2143
      %v2160 = vmul.f32 %v2055, %v2143
      %v2161 = vmul.f32 %v2060, %v2143
      %v2162 = vmul.f32 %v2065, %v2143
      %v2163 = vmul.f32 %v2070, %v2143
      %v2164 = vmul.f32 %v2075, %v2143
      %v2165 = vmul.f32 %v2080, %v2143
      %v2166 = vmul.f32 %v2085, %v2143
      %v2167 = vmul.f32 %v2090, %v2143
      %v2168 = vmul.f32 %v2095, %v2143
      %v2169 = vmul.f32 %v2100, %v2143
      %v2170 = vmul.f32 %v2105, %v2143
      %v2171 = vmul.f32 %v2110, %v2143
      %v2172 = vmul.f32 %v2115, %v2143
      %v2173 = vmul.f32 %v2120, %v2143
      %v2174 = vmul.f32 %v2125, %v2143
      %v2175 = vmul.f32 %v2130, %v2143
      %v2176 = vmul.f32 %v2135, %v2143
      %v2177 = vld [vmem:[%s3] sm:$0x1]
      %v2179 = vlaneseq
      %v2180 = vshrl.u32 %v2179, 7
      %v2181 = vsub.s32 0, %v2180
      %v2182 = vrot.slane %v2177, %v2181
      %v2184 = vadd.f32 %v2145, %v2182
      %v2185 = vadd.f32 %v2146, %v2182
      %v2186 = vadd.f32 %v2147, %v2182
      %v2187 = vadd.f32 %v2148, %v2182
      %v2188 = vadd.f32 %v2149, %v2182
      %v2189 = vadd.f32 %v2150, %v2182
      %v2190 = vadd.f32 %v2151, %v2182
      %v2191 = vadd.f32 %v2152, %v2182
      %v2192 = vadd.f32 %v2153, %v2182
      %v2193 = vadd.f32 %v2154, %v2182
      %v2194 = vadd.f32 %v2155, %v2182
      %v2195 = vadd.f32 %v2156, %v2182
      %v2196 = vadd.f32 %v2157, %v2182
      %v2197 = vadd.f32 %v2158, %v2182
      %v2198 = vadd.f32 %v2159, %v2182
      %v2199 = vadd.f32 %v2160, %v2182
      %v2200 = vadd.f32 %v2161, %v2182
      %v2201 = vadd.f32 %v2162, %v2182
      %v2202 = vadd.f32 %v2163, %v2182
      %v2203 = vadd.f32 %v2164, %v2182
      %v2204 = vadd.f32 %v2165, %v2182
      %v2205 = vadd.f32 %v2166, %v2182
      %v2206 = vadd.f32 %v2167, %v2182
      %v2207 = vadd.f32 %v2168, %v2182
      %v2208 = vadd.f32 %v2169, %v2182
      %v2209 = vadd.f32 %v2170, %v2182
      %v2210 = vadd.f32 %v2171, %v2182
      %v2211 = vadd.f32 %v2172, %v2182
      %v2212 = vadd.f32 %v2173, %v2182
      %v2213 = vadd.f32 %v2174, %v2182
      %v2214 = vadd.f32 %v2175, %v2182
      %v2215 = vadd.f32 %v2176, %v2182
      %v2216 = vmax.f32 %v2184, 0.0
      %v2217 = vmax.f32 %v2185, 0.0
      %v2218 = vmax.f32 %v2186, 0.0
      %v2219 = vmax.f32 %v2187, 0.0
      %v2220 = vmax.f32 %v2188, 0.0
      %v2221 = vmax.f32 %v2189, 0.0
      %v2222 = vmax.f32 %v2190, 0.0
      %v2223 = vmax.f32 %v2191, 0.0
      %v2224 = vmax.f32 %v2192, 0.0
      %v2225 = vmax.f32 %v2193, 0.0
      %v2226 = vmax.f32 %v2194, 0.0
      %v2227 = vmax.f32 %v2195, 0.0
      %v2228 = vmax.f32 %v2196, 0.0
      %v2229 = vmax.f32 %v2197, 0.0
      %v2230 = vmax.f32 %v2198, 0.0
      %v2231 = vmax.f32 %v2199, 0.0
      %v2232 = vmax.f32 %v2200, 0.0
      %v2233 = vmax.f32 %v2201, 0.0
      %v2234 = vmax.f32 %v2202, 0.0
      %v2235 = vmax.f32 %v2203, 0.0
      %v2236 = vmax.f32 %v2204, 0.0
      %v2237 = vmax.f32 %v2205, 0.0
      %v2238 = vmax.f32 %v2206, 0.0
      %v2239 = vmax.f32 %v2207, 0.0
      %v2240 = vmax.f32 %v2208, 0.0
      %v2241 = vmax.f32 %v2209, 0.0
      %v2242 = vmax.f32 %v2210, 0.0
      %v2243 = vmax.f32 %v2211, 0.0
      %v2244 = vmax.f32 %v2212, 0.0
      %v2245 = vmax.f32 %v2213, 0.0
      %v2246 = vmax.f32 %v2214, 0.0
      %v2247 = vmax.f32 %v2215, 0.0
      %2248 = vst.msk [vmem:[#allocation3] sm:$0xff] %vm1576, 0.0
      %2249 = vst.msk [vmem:[#allocation3 + $0x8] sm:$0xff] %vm1576, 0.0
      %2250 = vst.msk [vmem:[#allocation3 + $0x10] sm:$0xff] %vm1576, 0.0
      %vm2251 = vcmask 57344
      %2252 = vst.msk [vmem:[#allocation3 + $0x18] sm:$0x1] %vm2251, 0.0
      %2253 = vst.msk [vmem:[#allocation3 + $0x20] sm:$0xff] %vm1576, 0.0
      %2254 = vst.msk [vmem:[#allocation3 + $0x28] sm:$0xff] %vm1576, 0.0
      %2255 = vst.msk [vmem:[#allocation3 + $0x30] sm:$0xff] %vm1576, 0.0
      %2256 = vst.msk [vmem:[#allocation3 + $0x38] sm:$0x1] %vm2251, 0.0
      %2257 = vst.msk [vmem:[#allocation3 + $0x40] sm:$0xff] %vm1576, 0.0
      %2258 = vst.msk [vmem:[#allocation3 + $0x48] sm:$0xff] %vm1576, 0.0
      %2259 = vst.msk [vmem:[#allocation3 + $0x50] sm:$0xff] %vm1576, 0.0
      %2260 = vst.msk [vmem:[#allocation3 + $0x58] sm:$0x1] %vm2251, 0.0
      %2261 = vst.msk [vmem:[#allocation3 + $0x60] sm:$0xff] %vm1576, 0.0
      %2262 = vst.msk [vmem:[#allocation3 + $0x68] sm:$0xff] %vm1576, 0.0
      %2263 = vst.msk [vmem:[#allocation3 + $0x70] sm:$0xff] %vm1576, 0.0
      %2264 = vst.msk [vmem:[#allocation3 + $0x78] sm:$0x1] %vm2251, 0.0
      %2265 = vst.msk [vmem:[#allocation3 + $0x80] sm:$0xff] %vm1576, 0.0
      %2266 = vst.msk [vmem:[#allocation3 + $0x88] sm:$0xff] %vm1576, 0.0
      %2267 = vst.msk [vmem:[#allocation3 + $0x90] sm:$0xff] %vm1576, 0.0
      %2268 = vst.msk [vmem:[#allocation3 + $0x98] sm:$0x1] %vm2251, 0.0
      %2269 = vst.msk [vmem:[#allocation3 + $0xa0] sm:$0xff] %vm1576, 0.0
      %2270 = vst.msk [vmem:[#allocation3 + $0xa8] sm:$0xff] %vm1576, 0.0
      %2271 = vst.msk [vmem:[#allocation3 + $0xb0] sm:$0xff] %vm1576, 0.0
      %2272 = vst.msk [vmem:[#allocation3 + $0xb8] sm:$0x1] %vm2251, 0.0
      %2273 = vst.msk [vmem:[#allocation3 + $0xc0] sm:$0xff] %vm1576, 0.0
      %2274 = vst.msk [vmem:[#allocation3 + $0xc8] sm:$0xff] %vm1576, 0.0
      %2275 = vst.msk [vmem:[#allocation3 + $0xd0] sm:$0xff] %vm1576, 0.0
      %2276 = vst.msk [vmem:[#allocation3 + $0xd8] sm:$0x1] %vm2251, 0.0
      %2277 = vst.msk [vmem:[#allocation3 + $0xe0] sm:$0xff] %vm1576, 0.0
      %2278 = vst.msk [vmem:[#allocation3 + $0xe8] sm:$0xff] %vm1576, 0.0
      %2279 = vst.msk [vmem:[#allocation3 + $0xf0] sm:$0xff] %vm1576, 0.0
      %2280 = vst.msk [vmem:[#allocation3 + $0xf8] sm:$0x1] %vm2251, 0.0
      %2281 = vst.msk [vmem:[#allocation3 + $0x100] sm:$0xff] %vm1576, 0.0
      %2282 = vst.msk [vmem:[#allocation3 + $0x108] sm:$0xff] %vm1576, 0.0
      %2283 = vst.msk [vmem:[#allocation3 + $0x110] sm:$0xff] %vm1576, 0.0
      %2284 = vst.msk [vmem:[#allocation3 + $0x118] sm:$0x1] %vm2251, 0.0
      %2285 = vst.msk [vmem:[#allocation3 + $0x120] sm:$0xff] %vm1576, 0.0
      %2286 = vst.msk [vmem:[#allocation3 + $0x128] sm:$0xff] %vm1576, 0.0
      %2287 = vst.msk [vmem:[#allocation3 + $0x130] sm:$0xff] %vm1576, 0.0
      %2288 = vst.msk [vmem:[#allocation3 + $0x138] sm:$0x1] %vm2251, 0.0
      %2289 = vst.msk [vmem:[#allocation3 + $0x140] sm:$0xff] %vm1576, 0.0
      %2290 = vst.msk [vmem:[#allocation3 + $0x148] sm:$0xff] %vm1576, 0.0
      %2291 = vst.msk [vmem:[#allocation3 + $0x150] sm:$0xff] %vm1576, 0.0
      %2292 = vst.msk [vmem:[#allocation3 + $0x158] sm:$0x1] %vm2251, 0.0
      %2293 = vst.msk [vmem:[#allocation3 + $0x160] sm:$0xff] %vm1576, 0.0
      %2294 = vst.msk [vmem:[#allocation3 + $0x168] sm:$0xff] %vm1576, 0.0
      %2295 = vst.msk [vmem:[#allocation3 + $0x170] sm:$0xff] %vm1576, 0.0
      %2296 = vst.msk [vmem:[#allocation3 + $0x178] sm:$0x1] %vm2251, 0.0
      %2297 = vst.msk [vmem:[#allocation3 + $0x180] sm:$0xff] %vm1576, 0.0
      %2298 = vst.msk [vmem:[#allocation3 + $0x188] sm:$0xff] %vm1576, 0.0
      %2299 = vst.msk [vmem:[#allocation3 + $0x190] sm:$0xff] %vm1576, 0.0
      %2300 = vst.msk [vmem:[#allocation3 + $0x198] sm:$0x1] %vm2251, 0.0
      %2301 = vst.msk [vmem:[#allocation3 + $0x1a0] sm:$0xff] %vm1576, 0.0
      %2302 = vst.msk [vmem:[#allocation3 + $0x1a8] sm:$0xff] %vm1576, 0.0
      %2303 = vst.msk [vmem:[#allocation3 + $0x1b0] sm:$0xff] %vm1576, 0.0
      %2304 = vst.msk [vmem:[#allocation3 + $0x1b8] sm:$0x1] %vm2251, 0.0
      %2305 = vst.msk [vmem:[#allocation3 + $0x1c0] sm:$0xff] %vm1576, 0.0
      %2306 = vst.msk [vmem:[#allocation3 + $0x1c8] sm:$0xff] %vm1576, 0.0
      %2307 = vst.msk [vmem:[#allocation3 + $0x1d0] sm:$0xff] %vm1576, 0.0
      %2308 = vst.msk [vmem:[#allocation3 + $0x1d8] sm:$0x1] %vm2251, 0.0
      %2309 = vst.msk [vmem:[#allocation3 + $0x1e0] sm:$0xff] %vm1576, 0.0
      %2310 = vst.msk [vmem:[#allocation3 + $0x1e8] sm:$0xff] %vm1576, 0.0
      %2311 = vst.msk [vmem:[#allocation3 + $0x1f0] sm:$0xff] %vm1576, 0.0
      %2312 = vst.msk [vmem:[#allocation3 + $0x1f8] sm:$0x1] %vm2251, 0.0
      %2313 = vst.msk [vmem:[#allocation3 + $0x200] sm:$0xff] %vm1576, 0.0
      %2314 = vst.msk [vmem:[#allocation3 + $0x208] sm:$0xff] %vm1576, 0.0
      %2315 = vst.msk [vmem:[#allocation3 + $0x210] sm:$0xff] %vm1576, 0.0
      %2316 = vst.msk [vmem:[#allocation3 + $0x218] sm:$0x1] %vm2251, 0.0
      %2317 = vst.msk [vmem:[#allocation3 + $0x220] sm:$0xff] %vm1576, 0.0
      %2318 = vst.msk [vmem:[#allocation3 + $0x228] sm:$0xff] %vm1576, 0.0
      %2319 = vst.msk [vmem:[#allocation3 + $0x230] sm:$0xff] %vm1576, 0.0
      %2320 = vst.msk [vmem:[#allocation3 + $0x238] sm:$0x1] %vm2251, 0.0
      %s2321 = scalar_lea.vmem [#allocation3], 32
      %2322 = vst.msk [vmem:[%s2321 + $0x8] sm:$0xff] %vm1576, %v2216
      %2323 = vst.msk [vmem:[%s2321 + $0x10] sm:$0xff] %vm1576, %v2217
      %2324 = vst.msk [vmem:[%s2321 + $0x28] sm:$0xff] %vm1576, %v2218
      %2325 = vst.msk [vmem:[%s2321 + $0x30] sm:$0xff] %vm1576, %v2219
      %2326 = vst.msk [vmem:[%s2321 + $0x48] sm:$0xff] %vm1576, %v2220
      %2327 = vst.msk [vmem:[%s2321 + $0x50] sm:$0xff] %vm1576, %v2221
      %2328 = vst.msk [vmem:[%s2321 + $0x68] sm:$0xff] %vm1576, %v2222
      %2329 = vst.msk [vmem:[%s2321 + $0x70] sm:$0xff] %vm1576, %v2223
      %2330 = vst.msk [vmem:[%s2321 + $0x88] sm:$0xff] %vm1576, %v2224
      %2331 = vst.msk [vmem:[%s2321 + $0x90] sm:$0xff] %vm1576, %v2225
      %2332 = vst.msk [vmem:[%s2321 + $0xa8] sm:$0xff] %vm1576, %v2226
      %2333 = vst.msk [vmem:[%s2321 + $0xb0] sm:$0xff] %vm1576, %v2227
      %2334 = vst.msk [vmem:[%s2321 + $0xc8] sm:$0xff] %vm1576, %v2228
      %2335 = vst.msk [vmem:[%s2321 + $0xd0] sm:$0xff] %vm1576, %v2229
      %2336 = vst.msk [vmem:[%s2321 + $0xe8] sm:$0xff] %vm1576, %v2230
      %2337 = vst.msk [vmem:[%s2321 + $0xf0] sm:$0xff] %vm1576, %v2231
      %2338 = vst.msk [vmem:[%s2321 + $0x108] sm:$0xff] %vm1576, %v2232
      %2339 = vst.msk [vmem:[%s2321 + $0x110] sm:$0xff] %vm1576, %v2233
      %2340 = vst.msk [vmem:[%s2321 + $0x128] sm:$0xff] %vm1576, %v2234
      %2341 = vst.msk [vmem:[%s2321 + $0x130] sm:$0xff] %vm1576, %v2235
      %2342 = vst.msk [vmem:[%s2321 + $0x148] sm:$0xff] %vm1576, %v2236
      %2343 = vst.msk [vmem:[%s2321 + $0x150] sm:$0xff] %vm1576, %v2237
      %2344 = vst.msk [vmem:[%s2321 + $0x168] sm:$0xff] %vm1576, %v2238
      %2345 = vst.msk [vmem:[%s2321 + $0x170] sm:$0xff] %vm1576, %v2239
      %2346 = vst.msk [vmem:[%s2321 + $0x188] sm:$0xff] %vm1576, %v2240
      %2347 = vst.msk [vmem:[%s2321 + $0x190] sm:$0xff] %vm1576, %v2241
      %2348 = vst.msk [vmem:[%s2321 + $0x1a8] sm:$0xff] %vm1576, %v2242
      %2349 = vst.msk [vmem:[%s2321 + $0x1b0] sm:$0xff] %vm1576, %v2243
      %2350 = vst.msk [vmem:[%s2321 + $0x1c8] sm:$0xff] %vm1576, %v2244
      %2351 = vst.msk [vmem:[%s2321 + $0x1d0] sm:$0xff] %vm1576, %v2245
      %2352 = vst.msk [vmem:[%s2321 + $0x1e8] sm:$0xff] %vm1576, %v2246
      %2353 = vst.msk [vmem:[%s2321 + $0x1f0] sm:$0xff] %vm1576, %v2247
      %v2354 = vld [vmem:[#allocation3] sm:$0xff]
      %v2355 = vld [vmem:[#allocation3 + $0x8] sm:$0xff]
      %v2356 = vld [vmem:[#allocation3 + $0x10] sm:$0xff]
      %v2357 = vld [vmem:[#allocation3 + $0x18] sm:$0x1]
      %v2358 = vld [vmem:[#allocation3 + $0x20] sm:$0xff]
      %v2359 = vld [vmem:[#allocation3 + $0x28] sm:$0xff]
      %v2360 = vld [vmem:[#allocation3 + $0x30] sm:$0xff]
      %v2361 = vld [vmem:[#allocation3 + $0x38] sm:$0x1]
      %v2362 = vld [vmem:[#allocation3 + $0x40] sm:$0xff]
      %v2363 = vld [vmem:[#allocation3 + $0x48] sm:$0xff]
      %v2364 = vld [vmem:[#allocation3 + $0x50] sm:$0xff]
      %v2365 = vld [vmem:[#allocation3 + $0x58] sm:$0x1]
      %v2366 = vld [vmem:[#allocation3 + $0x60] sm:$0xff]
      %v2367 = vld [vmem:[#allocation3 + $0x68] sm:$0xff]
      %v2368 = vld [vmem:[#allocation3 + $0x70] sm:$0xff]
      %v2369 = vld [vmem:[#allocation3 + $0x78] sm:$0x1]
      %v2370 = vld [vmem:[#allocation3 + $0x80] sm:$0xff]
      %v2371 = vld [vmem:[#allocation3 + $0x88] sm:$0xff]
      %v2372 = vld [vmem:[#allocation3 + $0x90] sm:$0xff]
      %v2373 = vld [vmem:[#allocation3 + $0x98] sm:$0x1]
      %v2374 = vld [vmem:[#allocation3 + $0xa0] sm:$0xff]
      %v2375 = vld [vmem:[#allocation3 + $0xa8] sm:$0xff]
      %v2376 = vld [vmem:[#allocation3 + $0xb0] sm:$0xff]
      %v2377 = vld [vmem:[#allocation3 + $0xb8] sm:$0x1]
      %v2378 = vld [vmem:[#allocation3 + $0xc0] sm:$0xff]
      %v2379 = vld [vmem:[#allocation3 + $0xc8] sm:$0xff]
      %v2380 = vld [vmem:[#allocation3 + $0xd0] sm:$0xff]
      %v2381 = vld [vmem:[#allocation3 + $0xd8] sm:$0x1]
      %v2382 = vld [vmem:[#allocation3 + $0xe0] sm:$0xff]
      %v2383 = vld [vmem:[#allocation3 + $0xe8] sm:$0xff]
      %v2384 = vld [vmem:[#allocation3 + $0xf0] sm:$0xff]
      %v2385 = vld [vmem:[#allocation3 + $0xf8] sm:$0x1]
      %v2386 = vld [vmem:[#allocation3 + $0x100] sm:$0xff]
      %v2387 = vld [vmem:[#allocation3 + $0x108] sm:$0xff]
      %v2388 = vld [vmem:[#allocation3 + $0x110] sm:$0xff]
      %v2389 = vld [vmem:[#allocation3 + $0x118] sm:$0x1]
      %v2390 = vld [vmem:[#allocation3 + $0x120] sm:$0xff]
      %v2391 = vld [vmem:[#allocation3 + $0x128] sm:$0xff]
      %v2392 = vld [vmem:[#allocation3 + $0x130] sm:$0xff]
      %v2393 = vld [vmem:[#allocation3 + $0x138] sm:$0x1]
      %v2394 = vld [vmem:[#allocation3 + $0x140] sm:$0xff]
      %v2395 = vld [vmem:[#allocation3 + $0x148] sm:$0xff]
      %v2396 = vld [vmem:[#allocation3 + $0x150] sm:$0xff]
      %v2397 = vld [vmem:[#allocation3 + $0x158] sm:$0x1]
      %v2398 = vld [vmem:[#allocation3 + $0x160] sm:$0xff]
      %v2399 = vld [vmem:[#allocation3 + $0x168] sm:$0xff]
      %v2400 = vld [vmem:[#allocation3 + $0x170] sm:$0xff]
      %v2401 = vld [vmem:[#allocation3 + $0x178] sm:$0x1]
      %v2402 = vld [vmem:[#allocation3 + $0x180] sm:$0xff]
      %v2403 = vld [vmem:[#allocation3 + $0x188] sm:$0xff]
      %v2404 = vld [vmem:[#allocation3 + $0x190] sm:$0xff]
      %v2405 = vld [vmem:[#allocation3 + $0x198] sm:$0x1]
      %v2406 = vld [vmem:[#allocation3 + $0x1a0] sm:$0xff]
      %v2407 = vld [vmem:[#allocation3 + $0x1a8] sm:$0xff]
      %v2408 = vld [vmem:[#allocation3 + $0x1b0] sm:$0xff]
      %v2409 = vld [vmem:[#allocation3 + $0x1b8] sm:$0x1]
      %v2410 = vld [vmem:[#allocation3 + $0x1c0] sm:$0xff]
      %v2411 = vld [vmem:[#allocation3 + $0x1c8] sm:$0xff]
      %v2412 = vld [vmem:[#allocation3 + $0x1d0] sm:$0xff]
      %v2413 = vld [vmem:[#allocation3 + $0x1d8] sm:$0x1]
      %v2414 = vld [vmem:[#allocation3 + $0x1e0] sm:$0xff]
      %v2415 = vld [vmem:[#allocation3 + $0x1e8] sm:$0xff]
      %v2416 = vld [vmem:[#allocation3 + $0x1f0] sm:$0xff]
      %v2417 = vld [vmem:[#allocation3 + $0x1f8] sm:$0x1]
      %v2418 = vld [vmem:[#allocation3 + $0x200] sm:$0xff]
      %v2419 = vld [vmem:[#allocation3 + $0x208] sm:$0xff]
      %v2420 = vld [vmem:[#allocation3 + $0x210] sm:$0xff]
      %v2421 = vld [vmem:[#allocation3 + $0x218] sm:$0x1]
      %v2422 = vld [vmem:[#allocation3 + $0x220] sm:$0xff]
      %v2423 = vld [vmem:[#allocation3 + $0x228] sm:$0xff]
      %v2424 = vld [vmem:[#allocation3 + $0x230] sm:$0xff]
      %v2425 = vld [vmem:[#allocation3 + $0x238] sm:$0x1]
      %v2474 = vrot.slane %v2354, 7
      %v2475 = vrot.slane %v2355, 7
      %v2476 = vsel %vm538, %v2474, %v2475
      %v2477 = vrot.slane %v2356, 7
      %v2478 = vsel %vm538, %v2475, %v2477
      %v2479 = vrot.slane %v2358, 7
      %v2480 = vrot.slane %v2359, 7
      %v2481 = vsel %vm538, %v2479, %v2480
      %v2482 = vrot.slane %v2360, 7
      %v2483 = vsel %vm538, %v2480, %v2482
      %v2484 = vrot.slane %v2362, 7
      %v2485 = vrot.slane %v2363, 7
      %v2486 = vsel %vm538, %v2484, %v2485
      %v2487 = vrot.slane %v2364, 7
      %v2488 = vsel %vm538, %v2485, %v2487
      %v2489 = vrot.slane %v2366, 7
      %v2490 = vrot.slane %v2367, 7
      %v2491 = vsel %vm538, %v2489, %v2490
      %v2492 = vrot.slane %v2368, 7
      %v2493 = vsel %vm538, %v2490, %v2492
      %v2494 = vrot.slane %v2370, 7
      %v2495 = vrot.slane %v2371, 7
      %v2496 = vsel %vm538, %v2494, %v2495
      %v2497 = vrot.slane %v2372, 7
      %v2498 = vsel %vm538, %v2495, %v2497
      %v2499 = vrot.slane %v2374, 7
      %v2500 = vrot.slane %v2375, 7
      %v2501 = vsel %vm538, %v2499, %v2500
      %v2502 = vrot.slane %v2376, 7
      %v2503 = vsel %vm538, %v2500, %v2502
      %v2504 = vrot.slane %v2378, 7
      %v2505 = vrot.slane %v2379, 7
      %v2506 = vsel %vm538, %v2504, %v2505
      %v2507 = vrot.slane %v2380, 7
      %v2508 = vsel %vm538, %v2505, %v2507
      %v2509 = vrot.slane %v2382, 7
      %v2510 = vrot.slane %v2383, 7
      %v2511 = vsel %vm538, %v2509, %v2510
      %v2512 = vrot.slane %v2384, 7
      %v2513 = vsel %vm538, %v2510, %v2512
      %v2514 = vrot.slane %v2386, 7
      %v2515 = vrot.slane %v2387, 7
      %v2516 = vsel %vm538, %v2514, %v2515
      %v2517 = vrot.slane %v2388, 7
      %v2518 = vsel %vm538, %v2515, %v2517
      %v2519 = vrot.slane %v2390, 7
      %v2520 = vrot.slane %v2391, 7
      %v2521 = vsel %vm538, %v2519, %v2520
      %v2522 = vrot.slane %v2392, 7
      %v2523 = vsel %vm538, %v2520, %v2522
      %v2524 = vrot.slane %v2394, 7
      %v2525 = vrot.slane %v2395, 7
      %v2526 = vsel %vm538, %v2524, %v2525
      %v2527 = vrot.slane %v2396, 7
      %v2528 = vsel %vm538, %v2525, %v2527
      %v2529 = vrot.slane %v2398, 7
      %v2530 = vrot.slane %v2399, 7
      %v2531 = vsel %vm538, %v2529, %v2530
      %v2532 = vrot.slane %v2400, 7
      %v2533 = vsel %vm538, %v2530, %v2532
      %v2534 = vrot.slane %v2402, 7
      %v2535 = vrot.slane %v2403, 7
      %v2536 = vsel %vm538, %v2534, %v2535
      %v2537 = vrot.slane %v2404, 7
      %v2538 = vsel %vm538, %v2535, %v2537
      %v2539 = vrot.slane %v2406, 7
      %v2540 = vrot.slane %v2407, 7
      %v2541 = vsel %vm538, %v2539, %v2540
      %v2542 = vrot.slane %v2408, 7
      %v2543 = vsel %vm538, %v2540, %v2542
      %v2544 = vrot.slane %v2410, 7
      %v2545 = vrot.slane %v2411, 7
      %v2546 = vsel %vm538, %v2544, %v2545
      %v2547 = vrot.slane %v2412, 7
      %v2548 = vsel %vm538, %v2545, %v2547
      %v2549 = vrot.slane %v2414, 7
      %v2550 = vrot.slane %v2415, 7
      %v2551 = vsel %vm538, %v2549, %v2550
      %v2552 = vrot.slane %v2416, 7
      %v2553 = vsel %vm538, %v2550, %v2552
      %v2602 = vrot.slane %v2355, 1
      %v2603 = vrot.slane %v2356, 1
      %v2604 = vsel %vm667, %v2602, %v2603
      %v2605 = vrot.slane %v2357, 1
      %v2606 = vsel %vm667, %v2603, %v2605
      %v2607 = vrot.slane %v2359, 1
      %v2608 = vrot.slane %v2360, 1
      %v2609 = vsel %vm667, %v2607, %v2608
      %v2610 = vrot.slane %v2361, 1
      %v2611 = vsel %vm667, %v2608, %v2610
      %v2612 = vrot.slane %v2363, 1
      %v2613 = vrot.slane %v2364, 1
      %v2614 = vsel %vm667, %v2612, %v2613
      %v2615 = vrot.slane %v2365, 1
      %v2616 = vsel %vm667, %v2613, %v2615
      %v2617 = vrot.slane %v2367, 1
      %v2618 = vrot.slane %v2368, 1
      %v2619 = vsel %vm667, %v2617, %v2618
      %v2620 = vrot.slane %v2369, 1
      %v2621 = vsel %vm667, %v2618, %v2620
      %v2622 = vrot.slane %v2371, 1
      %v2623 = vrot.slane %v2372, 1
      %v2624 = vsel %vm667, %v2622, %v2623
      %v2625 = vrot.slane %v2373, 1
      %v2626 = vsel %vm667, %v2623, %v2625
      %v2627 = vrot.slane %v2375, 1
      %v2628 = vrot.slane %v2376, 1
      %v2629 = vsel %vm667, %v2627, %v2628
      %v2630 = vrot.slane %v2377, 1
      %v2631 = vsel %vm667, %v2628, %v2630
      %v2632 = vrot.slane %v2379, 1
      %v2633 = vrot.slane %v2380, 1
      %v2634 = vsel %vm667, %v2632, %v2633
      %v2635 = vrot.slane %v2381, 1
      %v2636 = vsel %vm667, %v2633, %v2635
      %v2637 = vrot.slane %v2383, 1
      %v2638 = vrot.slane %v2384, 1
      %v2639 = vsel %vm667, %v2637, %v2638
      %v2640 = vrot.slane %v2385, 1
      %v2641 = vsel %vm667, %v2638, %v2640
      %v2642 = vrot.slane %v2387, 1
      %v2643 = vrot.slane %v2388, 1
      %v2644 = vsel %vm667, %v2642, %v2643
      %v2645 = vrot.slane %v2389, 1
      %v2646 = vsel %vm667, %v2643, %v2645
      %v2647 = vrot.slane %v2391, 1
      %v2648 = vrot.slane %v2392, 1
      %v2649 = vsel %vm667, %v2647, %v2648
      %v2650 = vrot.slane %v2393, 1
      %v2651 = vsel %vm667, %v2648, %v2650
      %v2652 = vrot.slane %v2395, 1
      %v2653 = vrot.slane %v2396, 1
      %v2654 = vsel %vm667, %v2652, %v2653
      %v2655 = vrot.slane %v2397, 1
      %v2656 = vsel %vm667, %v2653, %v2655
      %v2657 = vrot.slane %v2399, 1
      %v2658 = vrot.slane %v2400, 1
      %v2659 = vsel %vm667, %v2657, %v2658
      %v2660 = vrot.slane %v2401, 1
      %v2661 = vsel %vm667, %v2658, %v2660
      %v2662 = vrot.slane %v2403, 1
      %v2663 = vrot.slane %v2404, 1
      %v2664 = vsel %vm667, %v2662, %v2663
      %v2665 = vrot.slane %v2405, 1
      %v2666 = vsel %vm667, %v2663, %v2665
      %v2667 = vrot.slane %v2407, 1
      %v2668 = vrot.slane %v2408, 1
      %v2669 = vsel %vm667, %v2667, %v2668
      %v2670 = vrot.slane %v2409, 1
      %v2671 = vsel %vm667, %v2668, %v2670
      %v2672 = vrot.slane %v2411, 1
      %v2673 = vrot.slane %v2412, 1
      %v2674 = vsel %vm667, %v2672, %v2673
      %v2675 = vrot.slane %v2413, 1
      %v2676 = vsel %vm667, %v2673, %v2675
      %v2677 = vrot.slane %v2415, 1
      %v2678 = vrot.slane %v2416, 1
      %v2679 = vsel %vm667, %v2677, %v2678
      %v2680 = vrot.slane %v2417, 1
      %v2681 = vsel %vm667, %v2678, %v2680
      %v2685 = vrot.slane %v2418, 7
      %v2686 = vrot.slane %v2419, 7
      %v2687 = vsel %vm538, %v2685, %v2686
      %v2688 = vrot.slane %v2420, 7
      %v2689 = vsel %vm538, %v2686, %v2688
      %v2691 = vrot.slane %v2419, 1
      %v2692 = vrot.slane %v2420, 1
      %v2693 = vsel %vm667, %v2691, %v2692
      %v2694 = vrot.slane %v2421, 1
      %v2695 = vsel %vm667, %v2692, %v2694
      %v2699 = vrot.slane %v2422, 7
      %v2700 = vrot.slane %v2423, 7
      %v2701 = vsel %vm538, %v2699, %v2700
      %v2702 = vrot.slane %v2424, 7
      %v2703 = vsel %vm538, %v2700, %v2702
      %v2705 = vrot.slane %v2423, 1
      %v2706 = vrot.slane %v2424, 1
      %v2707 = vsel %vm667, %v2705, %v2706
      %v2708 = vrot.slane %v2425, 1
      %v2709 = vsel %vm667, %v2706, %v2708
      %2710 = vrot.lane.b32.xlu0 %v2355, 8
      %v2711 = vpop.permute.xlu0 %2710
      %2712 = vrot.lane.b32.xlu0 %v2356, 8
      %v2713 = vpop.permute.xlu0 %2712
      %2714 = vrot.lane.b32.xlu0 %v2359, 8
      %v2715 = vpop.permute.xlu0 %2714
      %2716 = vrot.lane.b32.xlu0 %v2360, 8
      %v2717 = vpop.permute.xlu0 %2716
      %2718 = vrot.lane.b32.xlu0 %v2363, 8
      %v2719 = vpop.permute.xlu0 %2718
      %2720 = vrot.lane.b32.xlu0 %v2364, 8
      %v2721 = vpop.permute.xlu0 %2720
      %2722 = vrot.lane.b32.xlu0 %v2367, 8
      %v2723 = vpop.permute.xlu0 %2722
      %2724 = vrot.lane.b32.xlu0 %v2368, 8
      %v2725 = vpop.permute.xlu0 %2724
      %2726 = vrot.lane.b32.xlu0 %v2371, 8
      %v2727 = vpop.permute.xlu0 %2726
      %2728 = vrot.lane.b32.xlu0 %v2372, 8
      %v2729 = vpop.permute.xlu0 %2728
      %2730 = vrot.lane.b32.xlu0 %v2375, 8
      %v2731 = vpop.permute.xlu0 %2730
      %2732 = vrot.lane.b32.xlu0 %v2376, 8
      %v2733 = vpop.permute.xlu0 %2732
      %2734 = vrot.lane.b32.xlu0 %v2379, 8
      %v2735 = vpop.permute.xlu0 %2734
      %2736 = vrot.lane.b32.xlu0 %v2380, 8
      %v2737 = vpop.permute.xlu0 %2736
      %2738 = vrot.lane.b32.xlu0 %v2383, 8
      %v2739 = vpop.permute.xlu0 %2738
      %2740 = vrot.lane.b32.xlu0 %v2384, 8
      %v2741 = vpop.permute.xlu0 %2740
      %2742 = vrot.lane.b32.xlu0 %v2387, 8
      %v2743 = vpop.permute.xlu0 %2742
      %2744 = vrot.lane.b32.xlu0 %v2388, 8
      %v2745 = vpop.permute.xlu0 %2744
      %2746 = vrot.lane.b32.xlu0 %v2391, 8
      %v2747 = vpop.permute.xlu0 %2746
      %2748 = vrot.lane.b32.xlu0 %v2392, 8
      %v2749 = vpop.permute.xlu0 %2748
      %2750 = vrot.lane.b32.xlu0 %v2395, 8
      %v2751 = vpop.permute.xlu0 %2750
      %2752 = vrot.lane.b32.xlu0 %v2396, 8
      %v2753 = vpop.permute.xlu0 %2752
      %2754 = vrot.lane.b32.xlu0 %v2399, 8
      %v2755 = vpop.permute.xlu0 %2754
      %2756 = vrot.lane.b32.xlu0 %v2400, 8
      %v2757 = vpop.permute.xlu0 %2756
      %2758 = vrot.lane.b32.xlu0 %v2403, 8
      %v2759 = vpop.permute.xlu0 %2758
      %2760 = vrot.lane.b32.xlu0 %v2404, 8
      %v2761 = vpop.permute.xlu0 %2760
      %2762 = vrot.lane.b32.xlu0 %v2407, 8
      %v2763 = vpop.permute.xlu0 %2762
      %2764 = vrot.lane.b32.xlu0 %v2408, 8
      %v2765 = vpop.permute.xlu0 %2764
      %2766 = vrot.lane.b32.xlu0 %v2411, 8
      %v2767 = vpop.permute.xlu0 %2766
      %2768 = vrot.lane.b32.xlu0 %v2412, 8
      %v2769 = vpop.permute.xlu0 %2768
      %2770 = vrot.lane.b32.xlu0 %v2415, 8
      %v2771 = vpop.permute.xlu0 %2770
      %2772 = vrot.lane.b32.xlu0 %v2416, 8
      %v2773 = vpop.permute.xlu0 %2772
      %2806 = vrot.lane.b32.xlu0 %v2604, 16
      %v2807 = vpop.permute.xlu0 %2806
      %2808 = vrot.lane.b32.xlu0 %v2606, 16
      %v2809 = vpop.permute.xlu0 %2808
      %2810 = vrot.lane.b32.xlu0 %v2609, 16
      %v2811 = vpop.permute.xlu0 %2810
      %2812 = vrot.lane.b32.xlu0 %v2611, 16
      %v2813 = vpop.permute.xlu0 %2812
      %2814 = vrot.lane.b32.xlu0 %v2614, 16
      %v2815 = vpop.permute.xlu0 %2814
      %2816 = vrot.lane.b32.xlu0 %v2616, 16
      %v2817 = vpop.permute.xlu0 %2816
      %2818 = vrot.lane.b32.xlu0 %v2619, 16
      %v2819 = vpop.permute.xlu0 %2818
      %2820 = vrot.lane.b32.xlu0 %v2621, 16
      %v2821 = vpop.permute.xlu0 %2820
      %2822 = vrot.lane.b32.xlu0 %v2624, 16
      %v2823 = vpop.permute.xlu0 %2822
      %2824 = vrot.lane.b32.xlu0 %v2626, 16
      %v2825 = vpop.permute.xlu0 %2824
      %2826 = vrot.lane.b32.xlu0 %v2629, 16
      %v2827 = vpop.permute.xlu0 %2826
      %2828 = vrot.lane.b32.xlu0 %v2631, 16
      %v2829 = vpop.permute.xlu0 %2828
      %2830 = vrot.lane.b32.xlu0 %v2634, 16
      %v2831 = vpop.permute.xlu0 %2830
      %2832 = vrot.lane.b32.xlu0 %v2636, 16
      %v2833 = vpop.permute.xlu0 %2832
      %2834 = vrot.lane.b32.xlu0 %v2639, 16
      %v2835 = vpop.permute.xlu0 %2834
      %2836 = vrot.lane.b32.xlu0 %v2641, 16
      %v2837 = vpop.permute.xlu0 %2836
      %2838 = vrot.lane.b32.xlu0 %v2644, 16
      %v2839 = vpop.permute.xlu0 %2838
      %2840 = vrot.lane.b32.xlu0 %v2646, 16
      %v2841 = vpop.permute.xlu0 %2840
      %2842 = vrot.lane.b32.xlu0 %v2649, 16
      %v2843 = vpop.permute.xlu0 %2842
      %2844 = vrot.lane.b32.xlu0 %v2651, 16
      %v2845 = vpop.permute.xlu0 %2844
      %2846 = vrot.lane.b32.xlu0 %v2654, 16
      %v2847 = vpop.permute.xlu0 %2846
      %2848 = vrot.lane.b32.xlu0 %v2656, 16
      %v2849 = vpop.permute.xlu0 %2848
      %2850 = vrot.lane.b32.xlu0 %v2659, 16
      %v2851 = vpop.permute.xlu0 %2850
      %2852 = vrot.lane.b32.xlu0 %v2661, 16
      %v2853 = vpop.permute.xlu0 %2852
      %2854 = vrot.lane.b32.xlu0 %v2664, 16
      %v2855 = vpop.permute.xlu0 %2854
      %2856 = vrot.lane.b32.xlu0 %v2666, 16
      %v2857 = vpop.permute.xlu0 %2856
      %2858 = vrot.lane.b32.xlu0 %v2669, 16
      %v2859 = vpop.permute.xlu0 %2858
      %2860 = vrot.lane.b32.xlu0 %v2671, 16
      %v2861 = vpop.permute.xlu0 %2860
      %2862 = vrot.lane.b32.xlu0 %v2674, 16
      %v2863 = vpop.permute.xlu0 %2862
      %2864 = vrot.lane.b32.xlu0 %v2676, 16
      %v2865 = vpop.permute.xlu0 %2864
      %2866 = vrot.lane.b32.xlu0 %v2679, 16
      %v2867 = vpop.permute.xlu0 %2866
      %2868 = vrot.lane.b32.xlu0 %v2681, 16
      %v2869 = vpop.permute.xlu0 %2868
      %2902 = vrot.lane.b32.xlu0 %v2481, 24
      %v2903 = vpop.permute.xlu0 %2902
      %2904 = vrot.lane.b32.xlu0 %v2483, 24
      %v2905 = vpop.permute.xlu0 %2904
      %2906 = vrot.lane.b32.xlu0 %v2486, 24
      %v2907 = vpop.permute.xlu0 %2906
      %2908 = vrot.lane.b32.xlu0 %v2488, 24
      %v2909 = vpop.permute.xlu0 %2908
      %2910 = vrot.lane.b32.xlu0 %v2491, 24
      %v2911 = vpop.permute.xlu0 %2910
      %2912 = vrot.lane.b32.xlu0 %v2493, 24
      %v2913 = vpop.permute.xlu0 %2912
      %2914 = vrot.lane.b32.xlu0 %v2496, 24
      %v2915 = vpop.permute.xlu0 %2914
      %2916 = vrot.lane.b32.xlu0 %v2498, 24
      %v2917 = vpop.permute.xlu0 %2916
      %2918 = vrot.lane.b32.xlu0 %v2501, 24
      %v2919 = vpop.permute.xlu0 %2918
      %2920 = vrot.lane.b32.xlu0 %v2503, 24
      %v2921 = vpop.permute.xlu0 %2920
      %2922 = vrot.lane.b32.xlu0 %v2506, 24
      %v2923 = vpop.permute.xlu0 %2922
      %2924 = vrot.lane.b32.xlu0 %v2508, 24
      %v2925 = vpop.permute.xlu0 %2924
      %2926 = vrot.lane.b32.xlu0 %v2511, 24
      %v2927 = vpop.permute.xlu0 %2926
      %2928 = vrot.lane.b32.xlu0 %v2513, 24
      %v2929 = vpop.permute.xlu0 %2928
      %2930 = vrot.lane.b32.xlu0 %v2516, 24
      %v2931 = vpop.permute.xlu0 %2930
      %2932 = vrot.lane.b32.xlu0 %v2518, 24
      %v2933 = vpop.permute.xlu0 %2932
      %2934 = vrot.lane.b32.xlu0 %v2521, 24
      %v2935 = vpop.permute.xlu0 %2934
      %2936 = vrot.lane.b32.xlu0 %v2523, 24
      %v2937 = vpop.permute.xlu0 %2936
      %2938 = vrot.lane.b32.xlu0 %v2526, 24
      %v2939 = vpop.permute.xlu0 %2938
      %2940 = vrot.lane.b32.xlu0 %v2528, 24
      %v2941 = vpop.permute.xlu0 %2940
      %2942 = vrot.lane.b32.xlu0 %v2531, 24
      %v2943 = vpop.permute.xlu0 %2942
      %2944 = vrot.lane.b32.xlu0 %v2533, 24
      %v2945 = vpop.permute.xlu0 %2944
      %2946 = vrot.lane.b32.xlu0 %v2536, 24
      %v2947 = vpop.permute.xlu0 %2946
      %2948 = vrot.lane.b32.xlu0 %v2538, 24
      %v2949 = vpop.permute.xlu0 %2948
      %2950 = vrot.lane.b32.xlu0 %v2541, 24
      %v2951 = vpop.permute.xlu0 %2950
      %2952 = vrot.lane.b32.xlu0 %v2543, 24
      %v2953 = vpop.permute.xlu0 %2952
      %2954 = vrot.lane.b32.xlu0 %v2546, 24
      %v2955 = vpop.permute.xlu0 %2954
      %2956 = vrot.lane.b32.xlu0 %v2548, 24
      %v2957 = vpop.permute.xlu0 %2956
      %2958 = vrot.lane.b32.xlu0 %v2551, 24
      %v2959 = vpop.permute.xlu0 %2958
      %2960 = vrot.lane.b32.xlu0 %v2553, 24
      %v2961 = vpop.permute.xlu0 %2960
      %2962 = vrot.lane.b32.xlu0 %v2687, 24
      %v2963 = vpop.permute.xlu0 %2962
      %2964 = vrot.lane.b32.xlu0 %v2689, 24
      %v2965 = vpop.permute.xlu0 %2964
      %2998 = vrot.lane.b32.xlu0 %v2359, 32
      %v2999 = vpop.permute.xlu0 %2998
      %3000 = vrot.lane.b32.xlu0 %v2360, 32
      %v3001 = vpop.permute.xlu0 %3000
      %3002 = vrot.lane.b32.xlu0 %v2363, 32
      %v3003 = vpop.permute.xlu0 %3002
      %3004 = vrot.lane.b32.xlu0 %v2364, 32
      %v3005 = vpop.permute.xlu0 %3004
      %3006 = vrot.lane.b32.xlu0 %v2367, 32
      %v3007 = vpop.permute.xlu0 %3006
      %3008 = vrot.lane.b32.xlu0 %v2368, 32
      %v3009 = vpop.permute.xlu0 %3008
      %3010 = vrot.lane.b32.xlu0 %v2371, 32
      %v3011 = vpop.permute.xlu0 %3010
      %3012 = vrot.lane.b32.xlu0 %v2372, 32
      %v3013 = vpop.permute.xlu0 %3012
      %3014 = vrot.lane.b32.xlu0 %v2375, 32
      %v3015 = vpop.permute.xlu0 %3014
      %3016 = vrot.lane.b32.xlu0 %v2376, 32
      %v3017 = vpop.permute.xlu0 %3016
      %3018 = vrot.lane.b32.xlu0 %v2379, 32
      %v3019 = vpop.permute.xlu0 %3018
      %3020 = vrot.lane.b32.xlu0 %v2380, 32
      %v3021 = vpop.permute.xlu0 %3020
      %3022 = vrot.lane.b32.xlu0 %v2383, 32
      %v3023 = vpop.permute.xlu0 %3022
      %3024 = vrot.lane.b32.xlu0 %v2384, 32
      %v3025 = vpop.permute.xlu0 %3024
      %3026 = vrot.lane.b32.xlu0 %v2387, 32
      %v3027 = vpop.permute.xlu0 %3026
      %3028 = vrot.lane.b32.xlu0 %v2388, 32
      %v3029 = vpop.permute.xlu0 %3028
      %3030 = vrot.lane.b32.xlu0 %v2391, 32
      %v3031 = vpop.permute.xlu0 %3030
      %3032 = vrot.lane.b32.xlu0 %v2392, 32
      %v3033 = vpop.permute.xlu0 %3032
      %3034 = vrot.lane.b32.xlu0 %v2395, 32
      %v3035 = vpop.permute.xlu0 %3034
      %3036 = vrot.lane.b32.xlu0 %v2396, 32
      %v3037 = vpop.permute.xlu0 %3036
      %3038 = vrot.lane.b32.xlu0 %v2399, 32
      %v3039 = vpop.permute.xlu0 %3038
      %3040 = vrot.lane.b32.xlu0 %v2400, 32
      %v3041 = vpop.permute.xlu0 %3040
      %3042 = vrot.lane.b32.xlu0 %v2403, 32
      %v3043 = vpop.permute.xlu0 %3042
      %3044 = vrot.lane.b32.xlu0 %v2404, 32
      %v3045 = vpop.permute.xlu0 %3044
      %3046 = vrot.lane.b32.xlu0 %v2407, 32
      %v3047 = vpop.permute.xlu0 %3046
      %3048 = vrot.lane.b32.xlu0 %v2408, 32
      %v3049 = vpop.permute.xlu0 %3048
      %3050 = vrot.lane.b32.xlu0 %v2411, 32
      %v3051 = vpop.permute.xlu0 %3050
      %3052 = vrot.lane.b32.xlu0 %v2412, 32
      %v3053 = vpop.permute.xlu0 %3052
      %3054 = vrot.lane.b32.xlu0 %v2415, 32
      %v3055 = vpop.permute.xlu0 %3054
      %3056 = vrot.lane.b32.xlu0 %v2416, 32
      %v3057 = vpop.permute.xlu0 %3056
      %3058 = vrot.lane.b32.xlu0 %v2419, 32
      %v3059 = vpop.permute.xlu0 %3058
      %3060 = vrot.lane.b32.xlu0 %v2420, 32
      %v3061 = vpop.permute.xlu0 %3060
      %3094 = vrot.lane.b32.xlu0 %v2609, 40
      %v3095 = vpop.permute.xlu0 %3094
      %3096 = vrot.lane.b32.xlu0 %v2611, 40
      %v3097 = vpop.permute.xlu0 %3096
      %3098 = vrot.lane.b32.xlu0 %v2614, 40
      %v3099 = vpop.permute.xlu0 %3098
      %3100 = vrot.lane.b32.xlu0 %v2616, 40
      %v3101 = vpop.permute.xlu0 %3100
      %3102 = vrot.lane.b32.xlu0 %v2619, 40
      %v3103 = vpop.permute.xlu0 %3102
      %3104 = vrot.lane.b32.xlu0 %v2621, 40
      %v3105 = vpop.permute.xlu0 %3104
      %3106 = vrot.lane.b32.xlu0 %v2624, 40
      %v3107 = vpop.permute.xlu0 %3106
      %3108 = vrot.lane.b32.xlu0 %v2626, 40
      %v3109 = vpop.permute.xlu0 %3108
      %3110 = vrot.lane.b32.xlu0 %v2629, 40
      %v3111 = vpop.permute.xlu0 %3110
      %3112 = vrot.lane.b32.xlu0 %v2631, 40
      %v3113 = vpop.permute.xlu0 %3112
      %3114 = vrot.lane.b32.xlu0 %v2634, 40
      %v3115 = vpop.permute.xlu0 %3114
      %3116 = vrot.lane.b32.xlu0 %v2636, 40
      %v3117 = vpop.permute.xlu0 %3116
      %3118 = vrot.lane.b32.xlu0 %v2639, 40
      %v3119 = vpop.permute.xlu0 %3118
      %3120 = vrot.lane.b32.xlu0 %v2641, 40
      %v3121 = vpop.permute.xlu0 %3120
      %3122 = vrot.lane.b32.xlu0 %v2644, 40
      %v3123 = vpop.permute.xlu0 %3122
      %3124 = vrot.lane.b32.xlu0 %v2646, 40
      %v3125 = vpop.permute.xlu0 %3124
      %3126 = vrot.lane.b32.xlu0 %v2649, 40
      %v3127 = vpop.permute.xlu0 %3126
      %3128 = vrot.lane.b32.xlu0 %v2651, 40
      %v3129 = vpop.permute.xlu0 %3128
      %3130 = vrot.lane.b32.xlu0 %v2654, 40
      %v3131 = vpop.permute.xlu0 %3130
      %3132 = vrot.lane.b32.xlu0 %v2656, 40
      %v3133 = vpop.permute.xlu0 %3132
      %3134 = vrot.lane.b32.xlu0 %v2659, 40
      %v3135 = vpop.permute.xlu0 %3134
      %3136 = vrot.lane.b32.xlu0 %v2661, 40
      %v3137 = vpop.permute.xlu0 %3136
      %3138 = vrot.lane.b32.xlu0 %v2664, 40
      %v3139 = vpop.permute.xlu0 %3138
      %3140 = vrot.lane.b32.xlu0 %v2666, 40
      %v3141 = vpop.permute.xlu0 %3140
      %3142 = vrot.lane.b32.xlu0 %v2669, 40
      %v3143 = vpop.permute.xlu0 %3142
      %3144 = vrot.lane.b32.xlu0 %v2671, 40
      %v3145 = vpop.permute.xlu0 %3144
      %3146 = vrot.lane.b32.xlu0 %v2674, 40
      %v3147 = vpop.permute.xlu0 %3146
      %3148 = vrot.lane.b32.xlu0 %v2676, 40
      %v3149 = vpop.permute.xlu0 %3148
      %3150 = vrot.lane.b32.xlu0 %v2679, 40
      %v3151 = vpop.permute.xlu0 %3150
      %3152 = vrot.lane.b32.xlu0 %v2681, 40
      %v3153 = vpop.permute.xlu0 %3152
      %3154 = vrot.lane.b32.xlu0 %v2693, 40
      %v3155 = vpop.permute.xlu0 %3154
      %3156 = vrot.lane.b32.xlu0 %v2695, 40
      %v3157 = vpop.permute.xlu0 %3156
      %3190 = vrot.lane.b32.xlu0 %v2486, 48
      %v3191 = vpop.permute.xlu0 %3190
      %3192 = vrot.lane.b32.xlu0 %v2488, 48
      %v3193 = vpop.permute.xlu0 %3192
      %3194 = vrot.lane.b32.xlu0 %v2491, 48
      %v3195 = vpop.permute.xlu0 %3194
      %3196 = vrot.lane.b32.xlu0 %v2493, 48
      %v3197 = vpop.permute.xlu0 %3196
      %3198 = vrot.lane.b32.xlu0 %v2496, 48
      %v3199 = vpop.permute.xlu0 %3198
      %3200 = vrot.lane.b32.xlu0 %v2498, 48
      %v3201 = vpop.permute.xlu0 %3200
      %3202 = vrot.lane.b32.xlu0 %v2501, 48
      %v3203 = vpop.permute.xlu0 %3202
      %3204 = vrot.lane.b32.xlu0 %v2503, 48
      %v3205 = vpop.permute.xlu0 %3204
      %3206 = vrot.lane.b32.xlu0 %v2506, 48
      %v3207 = vpop.permute.xlu0 %3206
      %3208 = vrot.lane.b32.xlu0 %v2508, 48
      %v3209 = vpop.permute.xlu0 %3208
      %3210 = vrot.lane.b32.xlu0 %v2511, 48
      %v3211 = vpop.permute.xlu0 %3210
      %3212 = vrot.lane.b32.xlu0 %v2513, 48
      %v3213 = vpop.permute.xlu0 %3212
      %3214 = vrot.lane.b32.xlu0 %v2516, 48
      %v3215 = vpop.permute.xlu0 %3214
      %3216 = vrot.lane.b32.xlu0 %v2518, 48
      %v3217 = vpop.permute.xlu0 %3216
      %3218 = vrot.lane.b32.xlu0 %v2521, 48
      %v3219 = vpop.permute.xlu0 %3218
      %3220 = vrot.lane.b32.xlu0 %v2523, 48
      %v3221 = vpop.permute.xlu0 %3220
      %3222 = vrot.lane.b32.xlu0 %v2526, 48
      %v3223 = vpop.permute.xlu0 %3222
      %3224 = vrot.lane.b32.xlu0 %v2528, 48
      %v3225 = vpop.permute.xlu0 %3224
      %3226 = vrot.lane.b32.xlu0 %v2531, 48
      %v3227 = vpop.permute.xlu0 %3226
      %3228 = vrot.lane.b32.xlu0 %v2533, 48
      %v3229 = vpop.permute.xlu0 %3228
      %3230 = vrot.lane.b32.xlu0 %v2536, 48
      %v3231 = vpop.permute.xlu0 %3230
      %3232 = vrot.lane.b32.xlu0 %v2538, 48
      %v3233 = vpop.permute.xlu0 %3232
      %3234 = vrot.lane.b32.xlu0 %v2541, 48
      %v3235 = vpop.permute.xlu0 %3234
      %3236 = vrot.lane.b32.xlu0 %v2543, 48
      %v3237 = vpop.permute.xlu0 %3236
      %3238 = vrot.lane.b32.xlu0 %v2546, 48
      %v3239 = vpop.permute.xlu0 %3238
      %3240 = vrot.lane.b32.xlu0 %v2548, 48
      %v3241 = vpop.permute.xlu0 %3240
      %3242 = vrot.lane.b32.xlu0 %v2551, 48
      %v3243 = vpop.permute.xlu0 %3242
      %3244 = vrot.lane.b32.xlu0 %v2553, 48
      %v3245 = vpop.permute.xlu0 %3244
      %3246 = vrot.lane.b32.xlu0 %v2687, 48
      %v3247 = vpop.permute.xlu0 %3246
      %3248 = vrot.lane.b32.xlu0 %v2689, 48
      %v3249 = vpop.permute.xlu0 %3248
      %3250 = vrot.lane.b32.xlu0 %v2701, 48
      %v3251 = vpop.permute.xlu0 %3250
      %3252 = vrot.lane.b32.xlu0 %v2703, 48
      %v3253 = vpop.permute.xlu0 %3252
      %3286 = vrot.lane.b32.xlu0 %v2363, 56
      %v3287 = vpop.permute.xlu0 %3286
      %3288 = vrot.lane.b32.xlu0 %v2364, 56
      %v3289 = vpop.permute.xlu0 %3288
      %3290 = vrot.lane.b32.xlu0 %v2367, 56
      %v3291 = vpop.permute.xlu0 %3290
      %3292 = vrot.lane.b32.xlu0 %v2368, 56
      %v3293 = vpop.permute.xlu0 %3292
      %3294 = vrot.lane.b32.xlu0 %v2371, 56
      %v3295 = vpop.permute.xlu0 %3294
      %3296 = vrot.lane.b32.xlu0 %v2372, 56
      %v3297 = vpop.permute.xlu0 %3296
      %3298 = vrot.lane.b32.xlu0 %v2375, 56
      %v3299 = vpop.permute.xlu0 %3298
      %3300 = vrot.lane.b32.xlu0 %v2376, 56
      %v3301 = vpop.permute.xlu0 %3300
      %3302 = vrot.lane.b32.xlu0 %v2379, 56
      %v3303 = vpop.permute.xlu0 %3302
      %3304 = vrot.lane.b32.xlu0 %v2380, 56
      %v3305 = vpop.permute.xlu0 %3304
      %3306 = vrot.lane.b32.xlu0 %v2383, 56
      %v3307 = vpop.permute.xlu0 %3306
      %3308 = vrot.lane.b32.xlu0 %v2384, 56
      %v3309 = vpop.permute.xlu0 %3308
      %3310 = vrot.lane.b32.xlu0 %v2387, 56
      %v3311 = vpop.permute.xlu0 %3310
      %3312 = vrot.lane.b32.xlu0 %v2388, 56
      %v3313 = vpop.permute.xlu0 %3312
      %3314 = vrot.lane.b32.xlu0 %v2391, 56
      %v3315 = vpop.permute.xlu0 %3314
      %3316 = vrot.lane.b32.xlu0 %v2392, 56
      %v3317 = vpop.permute.xlu0 %3316
      %3318 = vrot.lane.b32.xlu0 %v2395, 56
      %v3319 = vpop.permute.xlu0 %3318
      %3320 = vrot.lane.b32.xlu0 %v2396, 56
      %v3321 = vpop.permute.xlu0 %3320
      %3322 = vrot.lane.b32.xlu0 %v2399, 56
      %v3323 = vpop.permute.xlu0 %3322
      %3324 = vrot.lane.b32.xlu0 %v2400, 56
      %v3325 = vpop.permute.xlu0 %3324
      %3326 = vrot.lane.b32.xlu0 %v2403, 56
      %v3327 = vpop.permute.xlu0 %3326
      %3328 = vrot.lane.b32.xlu0 %v2404, 56
      %v3329 = vpop.permute.xlu0 %3328
      %3330 = vrot.lane.b32.xlu0 %v2407, 56
      %v3331 = vpop.permute.xlu0 %3330
      %3332 = vrot.lane.b32.xlu0 %v2408, 56
      %v3333 = vpop.permute.xlu0 %3332
      %3334 = vrot.lane.b32.xlu0 %v2411, 56
      %v3335 = vpop.permute.xlu0 %3334
      %3336 = vrot.lane.b32.xlu0 %v2412, 56
      %v3337 = vpop.permute.xlu0 %3336
      %3338 = vrot.lane.b32.xlu0 %v2415, 56
      %v3339 = vpop.permute.xlu0 %3338
      %3340 = vrot.lane.b32.xlu0 %v2416, 56
      %v3341 = vpop.permute.xlu0 %3340
      %3342 = vrot.lane.b32.xlu0 %v2419, 56
      %v3343 = vpop.permute.xlu0 %3342
      %3344 = vrot.lane.b32.xlu0 %v2420, 56
      %v3345 = vpop.permute.xlu0 %3344
      %3346 = vrot.lane.b32.xlu0 %v2423, 56
      %v3347 = vpop.permute.xlu0 %3346
      %3348 = vrot.lane.b32.xlu0 %v2424, 56
      %v3349 = vpop.permute.xlu0 %3348
      %3382 = vrot.lane.b32.xlu0 %v2614, 64
      %v3383 = vpop.permute.xlu0 %3382
      %3384 = vrot.lane.b32.xlu0 %v2616, 64
      %v3385 = vpop.permute.xlu0 %3384
      %3386 = vrot.lane.b32.xlu0 %v2619, 64
      %v3387 = vpop.permute.xlu0 %3386
      %3388 = vrot.lane.b32.xlu0 %v2621, 64
      %v3389 = vpop.permute.xlu0 %3388
      %3390 = vrot.lane.b32.xlu0 %v2624, 64
      %v3391 = vpop.permute.xlu0 %3390
      %3392 = vrot.lane.b32.xlu0 %v2626, 64
      %v3393 = vpop.permute.xlu0 %3392
      %3394 = vrot.lane.b32.xlu0 %v2629, 64
      %v3395 = vpop.permute.xlu0 %3394
      %3396 = vrot.lane.b32.xlu0 %v2631, 64
      %v3397 = vpop.permute.xlu0 %3396
      %3398 = vrot.lane.b32.xlu0 %v2634, 64
      %v3399 = vpop.permute.xlu0 %3398
      %3400 = vrot.lane.b32.xlu0 %v2636, 64
      %v3401 = vpop.permute.xlu0 %3400
      %3402 = vrot.lane.b32.xlu0 %v2639, 64
      %v3403 = vpop.permute.xlu0 %3402
      %3404 = vrot.lane.b32.xlu0 %v2641, 64
      %v3405 = vpop.permute.xlu0 %3404
      %3406 = vrot.lane.b32.xlu0 %v2644, 64
      %v3407 = vpop.permute.xlu0 %3406
      %3408 = vrot.lane.b32.xlu0 %v2646, 64
      %v3409 = vpop.permute.xlu0 %3408
      %3410 = vrot.lane.b32.xlu0 %v2649, 64
      %v3411 = vpop.permute.xlu0 %3410
      %3412 = vrot.lane.b32.xlu0 %v2651, 64
      %v3413 = vpop.permute.xlu0 %3412
      %3414 = vrot.lane.b32.xlu0 %v2654, 64
      %v3415 = vpop.permute.xlu0 %3414
      %3416 = vrot.lane.b32.xlu0 %v2656, 64
      %v3417 = vpop.permute.xlu0 %3416
      %3418 = vrot.lane.b32.xlu0 %v2659, 64
      %v3419 = vpop.permute.xlu0 %3418
      %3420 = vrot.lane.b32.xlu0 %v2661, 64
      %v3421 = vpop.permute.xlu0 %3420
      %3422 = vrot.lane.b32.xlu0 %v2664, 64
      %v3423 = vpop.permute.xlu0 %3422
      %3424 = vrot.lane.b32.xlu0 %v2666, 64
      %v3425 = vpop.permute.xlu0 %3424
      %3426 = vrot.lane.b32.xlu0 %v2669, 64
      %v3427 = vpop.permute.xlu0 %3426
      %3428 = vrot.lane.b32.xlu0 %v2671, 64
      %v3429 = vpop.permute.xlu0 %3428
      %3430 = vrot.lane.b32.xlu0 %v2674, 64
      %v3431 = vpop.permute.xlu0 %3430
      %3432 = vrot.lane.b32.xlu0 %v2676, 64
      %v3433 = vpop.permute.xlu0 %3432
      %3434 = vrot.lane.b32.xlu0 %v2679, 64
      %v3435 = vpop.permute.xlu0 %3434
      %3436 = vrot.lane.b32.xlu0 %v2681, 64
      %v3437 = vpop.permute.xlu0 %3436
      %3438 = vrot.lane.b32.xlu0 %v2693, 64
      %v3439 = vpop.permute.xlu0 %3438
      %3440 = vrot.lane.b32.xlu0 %v2695, 64
      %v3441 = vpop.permute.xlu0 %3440
      %3442 = vrot.lane.b32.xlu0 %v2707, 64
      %v3443 = vpop.permute.xlu0 %3442
      %3444 = vrot.lane.b32.xlu0 %v2709, 64
      %v3445 = vpop.permute.xlu0 %3444
      %v3478 = vsel %vm1576, %v2476, %v2711
      %v3479 = vsel %vm1576, %v2478, %v2713
      %v3480 = vsel %vm1576, %v2481, %v2715
      %v3481 = vsel %vm1576, %v2483, %v2717
      %v3482 = vsel %vm1576, %v2486, %v2719
      %v3483 = vsel %vm1576, %v2488, %v2721
      %v3484 = vsel %vm1576, %v2491, %v2723
      %v3485 = vsel %vm1576, %v2493, %v2725
      %v3486 = vsel %vm1576, %v2496, %v2727
      %v3487 = vsel %vm1576, %v2498, %v2729
      %v3488 = vsel %vm1576, %v2501, %v2731
      %v3489 = vsel %vm1576, %v2503, %v2733
      %v3490 = vsel %vm1576, %v2506, %v2735
      %v3491 = vsel %vm1576, %v2508, %v2737
      %v3492 = vsel %vm1576, %v2511, %v2739
      %v3493 = vsel %vm1576, %v2513, %v2741
      %v3494 = vsel %vm1576, %v2516, %v2743
      %v3495 = vsel %vm1576, %v2518, %v2745
      %v3496 = vsel %vm1576, %v2521, %v2747
      %v3497 = vsel %vm1576, %v2523, %v2749
      %v3498 = vsel %vm1576, %v2526, %v2751
      %v3499 = vsel %vm1576, %v2528, %v2753
      %v3500 = vsel %vm1576, %v2531, %v2755
      %v3501 = vsel %vm1576, %v2533, %v2757
      %v3502 = vsel %vm1576, %v2536, %v2759
      %v3503 = vsel %vm1576, %v2538, %v2761
      %v3504 = vsel %vm1576, %v2541, %v2763
      %v3505 = vsel %vm1576, %v2543, %v2765
      %v3506 = vsel %vm1576, %v2546, %v2767
      %v3507 = vsel %vm1576, %v2548, %v2769
      %v3508 = vsel %vm1576, %v2551, %v2771
      %v3509 = vsel %vm1576, %v2553, %v2773
      %v3510 = vsel %vm1642, %v3478, %v2807
      %v3511 = vsel %vm1642, %v3479, %v2809
      %v3512 = vsel %vm1642, %v3480, %v2811
      %v3513 = vsel %vm1642, %v3481, %v2813
      %v3514 = vsel %vm1642, %v3482, %v2815
      %v3515 = vsel %vm1642, %v3483, %v2817
      %v3516 = vsel %vm1642, %v3484, %v2819
      %v3517 = vsel %vm1642, %v3485, %v2821
      %v3518 = vsel %vm1642, %v3486, %v2823
      %v3519 = vsel %vm1642, %v3487, %v2825
      %v3520 = vsel %vm1642, %v3488, %v2827
      %v3521 = vsel %vm1642, %v3489, %v2829
      %v3522 = vsel %vm1642, %v3490, %v2831
      %v3523 = vsel %vm1642, %v3491, %v2833
      %v3524 = vsel %vm1642, %v3492, %v2835
      %v3525 = vsel %vm1642, %v3493, %v2837
      %v3526 = vsel %vm1642, %v3494, %v2839
      %v3527 = vsel %vm1642, %v3495, %v2841
      %v3528 = vsel %vm1642, %v3496, %v2843
      %v3529 = vsel %vm1642, %v3497, %v2845
      %v3530 = vsel %vm1642, %v3498, %v2847
      %v3531 = vsel %vm1642, %v3499, %v2849
      %v3532 = vsel %vm1642, %v3500, %v2851
      %v3533 = vsel %vm1642, %v3501, %v2853
      %v3534 = vsel %vm1642, %v3502, %v2855
      %v3535 = vsel %vm1642, %v3503, %v2857
      %v3536 = vsel %vm1642, %v3504, %v2859
      %v3537 = vsel %vm1642, %v3505, %v2861
      %v3538 = vsel %vm1642, %v3506, %v2863
      %v3539 = vsel %vm1642, %v3507, %v2865
      %v3540 = vsel %vm1642, %v3508, %v2867
      %v3541 = vsel %vm1642, %v3509, %v2869
      %v3542 = vsel %vm1708, %v3510, %v2903
      %v3543 = vsel %vm1708, %v3511, %v2905
      %v3544 = vsel %vm1708, %v3512, %v2907
      %v3545 = vsel %vm1708, %v3513, %v2909
      %v3546 = vsel %vm1708, %v3514, %v2911
      %v3547 = vsel %vm1708, %v3515, %v2913
      %v3548 = vsel %vm1708, %v3516, %v2915
      %v3549 = vsel %vm1708, %v3517, %v2917
      %v3550 = vsel %vm1708, %v3518, %v2919
      %v3551 = vsel %vm1708, %v3519, %v2921
      %v3552 = vsel %vm1708, %v3520, %v2923
      %v3553 = vsel %vm1708, %v3521, %v2925
      %v3554 = vsel %vm1708, %v3522, %v2927
      %v3555 = vsel %vm1708, %v3523, %v2929
      %v3556 = vsel %vm1708, %v3524, %v2931
      %v3557 = vsel %vm1708, %v3525, %v2933
      %v3558 = vsel %vm1708, %v3526, %v2935
      %v3559 = vsel %vm1708, %v3527, %v2937
      %v3560 = vsel %vm1708, %v3528, %v2939
      %v3561 = vsel %vm1708, %v3529, %v2941
      %v3562 = vsel %vm1708, %v3530, %v2943
      %v3563 = vsel %vm1708, %v3531, %v2945
      %v3564 = vsel %vm1708, %v3532, %v2947
      %v3565 = vsel %vm1708, %v3533, %v2949
      %v3566 = vsel %vm1708, %v3534, %v2951
      %v3567 = vsel %vm1708, %v3535, %v2953
      %v3568 = vsel %vm1708, %v3536, %v2955
      %v3569 = vsel %vm1708, %v3537, %v2957
      %v3570 = vsel %vm1708, %v3538, %v2959
      %v3571 = vsel %vm1708, %v3539, %v2961
      %v3572 = vsel %vm1708, %v3540, %v2963
      %v3573 = vsel %vm1708, %v3541, %v2965
      %v3574 = vsel %vm1774, %v3542, %v2999
      %v3575 = vsel %vm1774, %v3543, %v3001
      %v3576 = vsel %vm1774, %v3544, %v3003
      %v3577 = vsel %vm1774, %v3545, %v3005
      %v3578 = vsel %vm1774, %v3546, %v3007
      %v3579 = vsel %vm1774, %v3547, %v3009
      %v3580 = vsel %vm1774, %v3548, %v3011
      %v3581 = vsel %vm1774, %v3549, %v3013
      %v3582 = vsel %vm1774, %v3550, %v3015
      %v3583 = vsel %vm1774, %v3551, %v3017
      %v3584 = vsel %vm1774, %v3552, %v3019
      %v3585 = vsel %vm1774, %v3553, %v3021
      %v3586 = vsel %vm1774, %v3554, %v3023
      %v3587 = vsel %vm1774, %v3555, %v3025
      %v3588 = vsel %vm1774, %v3556, %v3027
      %v3589 = vsel %vm1774, %v3557, %v3029
      %v3590 = vsel %vm1774, %v3558, %v3031
      %v3591 = vsel %vm1774, %v3559, %v3033
      %v3592 = vsel %vm1774, %v3560, %v3035
      %v3593 = vsel %vm1774, %v3561, %v3037
      %v3594 = vsel %vm1774, %v3562, %v3039
      %v3595 = vsel %vm1774, %v3563, %v3041
      %v3596 = vsel %vm1774, %v3564, %v3043
      %v3597 = vsel %vm1774, %v3565, %v3045
      %v3598 = vsel %vm1774, %v3566, %v3047
      %v3599 = vsel %vm1774, %v3567, %v3049
      %v3600 = vsel %vm1774, %v3568, %v3051
      %v3601 = vsel %vm1774, %v3569, %v3053
      %v3602 = vsel %vm1774, %v3570, %v3055
      %v3603 = vsel %vm1774, %v3571, %v3057
      %v3604 = vsel %vm1774, %v3572, %v3059
      %v3605 = vsel %vm1774, %v3573, %v3061
      %vm3606 = vcmask 326656
      %v3607 = vsel %vm3606, %v3574, %v3095
      %v3608 = vsel %vm3606, %v3575, %v3097
      %v3609 = vsel %vm3606, %v3576, %v3099
      %v3610 = vsel %vm3606, %v3577, %v3101
      %v3611 = vsel %vm3606, %v3578, %v3103
      %v3612 = vsel %vm3606, %v3579, %v3105
      %v3613 = vsel %vm3606, %v3580, %v3107
      %v3614 = vsel %vm3606, %v3581, %v3109
      %v3615 = vsel %vm3606, %v3582, %v3111
      %v3616 = vsel %vm3606, %v3583, %v3113
      %v3617 = vsel %vm3606, %v3584, %v3115
      %v3618 = vsel %vm3606, %v3585, %v3117
      %v3619 = vsel %vm3606, %v3586, %v3119
      %v3620 = vsel %vm3606, %v3587, %v3121
      %v3621 = vsel %vm3606, %v3588, %v3123
      %v3622 = vsel %vm3606, %v3589, %v3125
      %v3623 = vsel %vm3606, %v3590, %v3127
      %v3624 = vsel %vm3606, %v3591, %v3129
      %v3625 = vsel %vm3606, %v3592, %v3131
      %v3626 = vsel %vm3606, %v3593, %v3133
      %v3627 = vsel %vm3606, %v3594, %v3135
      %v3628 = vsel %vm3606, %v3595, %v3137
      %v3629 = vsel %vm3606, %v3596, %v3139
      %v3630 = vsel %vm3606, %v3597, %v3141
      %v3631 = vsel %vm3606, %v3598, %v3143
      %v3632 = vsel %vm3606, %v3599, %v3145
      %v3633 = vsel %vm3606, %v3600, %v3147
      %v3634 = vsel %vm3606, %v3601, %v3149
      %v3635 = vsel %vm3606, %v3602, %v3151
      %v3636 = vsel %vm3606, %v3603, %v3153
      %v3637 = vsel %vm3606, %v3604, %v3155
      %v3638 = vsel %vm3606, %v3605, %v3157
      %vm3639 = vcmask 392192
      %v3640 = vsel %vm3639, %v3607, %v3191
      %v3641 = vsel %vm3639, %v3608, %v3193
      %v3642 = vsel %vm3639, %v3609, %v3195
      %v3643 = vsel %vm3639, %v3610, %v3197
      %v3644 = vsel %vm3639, %v3611, %v3199
      %v3645 = vsel %vm3639, %v3612, %v3201
      %v3646 = vsel %vm3639, %v3613, %v3203
      %v3647 = vsel %vm3639, %v3614, %v3205
      %v3648 = vsel %vm3639, %v3615, %v3207
      %v3649 = vsel %vm3639, %v3616, %v3209
      %v3650 = vsel %vm3639, %v3617, %v3211
      %v3651 = vsel %vm3639, %v3618, %v3213
      %v3652 = vsel %vm3639, %v3619, %v3215
      %v3653 = vsel %vm3639, %v3620, %v3217
      %v3654 = vsel %vm3639, %v3621, %v3219
      %v3655 = vsel %vm3639, %v3622, %v3221
      %v3656 = vsel %vm3639, %v3623, %v3223
      %v3657 = vsel %vm3639, %v3624, %v3225
      %v3658 = vsel %vm3639, %v3625, %v3227
      %v3659 = vsel %vm3639, %v3626, %v3229
      %v3660 = vsel %vm3639, %v3627, %v3231
      %v3661 = vsel %vm3639, %v3628, %v3233
      %v3662 = vsel %vm3639, %v3629, %v3235
      %v3663 = vsel %vm3639, %v3630, %v3237
      %v3664 = vsel %vm3639, %v3631, %v3239
      %v3665 = vsel %vm3639, %v3632, %v3241
      %v3666 = vsel %vm3639, %v3633, %v3243
      %v3667 = vsel %vm3639, %v3634, %v3245
      %v3668 = vsel %vm3639, %v3635, %v3247
      %v3669 = vsel %vm3639, %v3636, %v3249
      %v3670 = vsel %vm3639, %v3637, %v3251
      %v3671 = vsel %vm3639, %v3638, %v3253
      %vm3672 = vcmask 457728
      %v3673 = vsel %vm3672, %v3640, %v3287
      %v3674 = vsel %vm3672, %v3641, %v3289
      %v3675 = vsel %vm3672, %v3642, %v3291
      %v3676 = vsel %vm3672, %v3643, %v3293
      %v3677 = vsel %vm3672, %v3644, %v3295
      %v3678 = vsel %vm3672, %v3645, %v3297
      %v3679 = vsel %vm3672, %v3646, %v3299
      %v3680 = vsel %vm3672, %v3647, %v3301
      %v3681 = vsel %vm3672, %v3648, %v3303
      %v3682 = vsel %vm3672, %v3649, %v3305
      %v3683 = vsel %vm3672, %v3650, %v3307
      %v3684 = vsel %vm3672, %v3651, %v3309
      %v3685 = vsel %vm3672, %v3652, %v3311
      %v3686 = vsel %vm3672, %v3653, %v3313
      %v3687 = vsel %vm3672, %v3654, %v3315
      %v3688 = vsel %vm3672, %v3655, %v3317
      %v3689 = vsel %vm3672, %v3656, %v3319
      %v3690 = vsel %vm3672, %v3657, %v3321
      %v3691 = vsel %vm3672, %v3658, %v3323
      %v3692 = vsel %vm3672, %v3659, %v3325
      %v3693 = vsel %vm3672, %v3660, %v3327
      %v3694 = vsel %vm3672, %v3661, %v3329
      %v3695 = vsel %vm3672, %v3662, %v3331
      %v3696 = vsel %vm3672, %v3663, %v3333
      %v3697 = vsel %vm3672, %v3664, %v3335
      %v3698 = vsel %vm3672, %v3665, %v3337
      %v3699 = vsel %vm3672, %v3666, %v3339
      %v3700 = vsel %vm3672, %v3667, %v3341
      %v3701 = vsel %vm3672, %v3668, %v3343
      %v3702 = vsel %vm3672, %v3669, %v3345
      %v3703 = vsel %vm3672, %v3670, %v3347
      %v3704 = vsel %vm3672, %v3671, %v3349
      %vm3705 = vcmask 523264
      %v3706 = vsel %vm3705, %v3673, %v3383
      %v3707 = vsel %vm3705, %v3674, %v3385
      %v3708 = vsel %vm3705, %v3675, %v3387
      %v3709 = vsel %vm3705, %v3676, %v3389
      %v3710 = vsel %vm3705, %v3677, %v3391
      %v3711 = vsel %vm3705, %v3678, %v3393
      %v3712 = vsel %vm3705, %v3679, %v3395
      %v3713 = vsel %vm3705, %v3680, %v3397
      %v3714 = vsel %vm3705, %v3681, %v3399
      %v3715 = vsel %vm3705, %v3682, %v3401
      %v3716 = vsel %vm3705, %v3683, %v3403
      %v3717 = vsel %vm3705, %v3684, %v3405
      %v3718 = vsel %vm3705, %v3685, %v3407
      %v3719 = vsel %vm3705, %v3686, %v3409
      %v3720 = vsel %vm3705, %v3687, %v3411
      %v3721 = vsel %vm3705, %v3688, %v3413
      %v3722 = vsel %vm3705, %v3689, %v3415
      %v3723 = vsel %vm3705, %v3690, %v3417
      %v3724 = vsel %vm3705, %v3691, %v3419
      %v3725 = vsel %vm3705, %v3692, %v3421
      %v3726 = vsel %vm3705, %v3693, %v3423
      %v3727 = vsel %vm3705, %v3694, %v3425
      %v3728 = vsel %vm3705, %v3695, %v3427
      %v3729 = vsel %vm3705, %v3696, %v3429
      %v3730 = vsel %vm3705, %v3697, %v3431
      %v3731 = vsel %vm3705, %v3698, %v3433
      %v3732 = vsel %vm3705, %v3699, %v3435
      %v3733 = vsel %vm3705, %v3700, %v3437
      %v3734 = vsel %vm3705, %v3701, %v3439
      %v3735 = vsel %vm3705, %v3702, %v3441
      %v3736 = vsel %vm3705, %v3703, %v3443
      %v3737 = vsel %vm3705, %v3704, %v3445
      %v3738 = vld [vmem:[%s4] sm:$0xff]
      %v3739 = vld [vmem:[%s4 + $0x8] sm:$0xff]
      %v3740 = vld [vmem:[%s4 + $0x10] sm:$0xff]
      %v3741 = vld [vmem:[%s4 + $0x18] sm:$0xff]
      %v3742 = vld [vmem:[%s4 + $0x20] sm:$0xff]
      %v3743 = vld [vmem:[%s4 + $0x28] sm:$0xff]
      %v3744 = vld [vmem:[%s4 + $0x30] sm:$0xff]
      %v3745 = vld [vmem:[%s4 + $0x38] sm:$0xff]
      %v3746 = vld [vmem:[%s4 + $0x40] sm:$0xff]
      %vm3747 = vcmask 588800
      %v3749 = vsel %vm3747, %v3706, 0
      %v3752 = vsel %vm3747, %v3707, 0
      %v3755 = vsel %vm3747, %v3708, 0
      %v3758 = vsel %vm3747, %v3709, 0
      %v3761 = vsel %vm3747, %v3710, 0
      %v3764 = vsel %vm3747, %v3711, 0
      %v3767 = vsel %vm3747, %v3712, 0
      %v3770 = vsel %vm3747, %v3713, 0
      %v3773 = vsel %vm3747, %v3714, 0
      %v3776 = vsel %vm3747, %v3715, 0
      %v3779 = vsel %vm3747, %v3716, 0
      %v3782 = vsel %vm3747, %v3717, 0
      %v3785 = vsel %vm3747, %v3718, 0
      %v3788 = vsel %vm3747, %v3719, 0
      %v3791 = vsel %vm3747, %v3720, 0
      %v3794 = vsel %vm3747, %v3721, 0
      %v3797 = vsel %vm3747, %v3722, 0
      %v3800 = vsel %vm3747, %v3723, 0
      %v3803 = vsel %vm3747, %v3724, 0
      %v3806 = vsel %vm3747, %v3725, 0
      %v3809 = vsel %vm3747, %v3726, 0
      %v3812 = vsel %vm3747, %v3727, 0
      %v3815 = vsel %vm3747, %v3728, 0
      %v3818 = vsel %vm3747, %v3729, 0
      %v3821 = vsel %vm3747, %v3730, 0
      %v3824 = vsel %vm3747, %v3731, 0
      %v3827 = vsel %vm3747, %v3732, 0
      %v3830 = vsel %vm3747, %v3733, 0
      %v3833 = vsel %vm3747, %v3734, 0
      %v3836 = vsel %vm3747, %v3735, 0
      %v3839 = vsel %vm3747, %v3736, 0
      %v3842 = vsel %vm3747, %v3737, 0
      %3844 = vmatprep.subr.mxu0 0.0
      %3845 = vmatpush1.msra.mxu0 0.0
      %3846 = vmatprep.subr.mxu0 0.0
      %3847 = vmatpush1.msra.mxu0 0.0
      %3848 = vmatprep.subr.mxu0 0.0
      %3849 = vmatpush1.msra.mxu0 0.0
      %3850 = vmatprep.subr.mxu0 0.0
      %3851 = vmatpush1.msra.mxu0 0.0
      %3852 = vmatprep.subr.mxu0 0.0
      %3853 = vmatpush1.msra.mxu0 0.0
      %3854 = vmatprep.subr.mxu0 0.0
      %3855 = vmatpush1.msra.mxu0 0.0
      %3856 = vmatprep.subr.mxu0 0.0
      %3857 = vmatpush1.msra.mxu0 0.0
      %3858 = vmatprep.subr.mxu0 0.0
      %3859 = vmatpush1.msra.mxu0 %v3746
      %3860 = vmatprep.subr.mxu0 0.0
      %3861 = vmatpush1.msra.mxu0 %v3745
      %3862 = vmatprep.subr.mxu0 0.0
      %3863 = vmatpush1.msra.mxu0 %v3744
      %3864 = vmatprep.subr.mxu0 0.0
      %3865 = vmatpush1.msra.mxu0 %v3743
      %3866 = vmatprep.subr.mxu0 0.0
      %3867 = vmatpush1.msra.mxu0 %v3742
      %3868 = vmatprep.subr.mxu0 0.0
      %3869 = vmatpush1.msra.mxu0 %v3741
      %3870 = vmatprep.subr.mxu0 0.0
      %3871 = vmatpush1.msra.mxu0 %v3740
      %3872 = vmatprep.subr.mxu0 0.0
      %3873 = vmatpush1.msra.mxu0 %v3739
      %3874 = vmatprep.subr.mxu0 0.0
      %3875 = vmatpush1.msra.mxu0 %v3738
      %3876 = vmatprep.subr.mxu0 0.0
      %3877 = vmatpush2.msra.mxu0 0.0
      %3878 = vmatprep.subr.mxu0 0.0
      %3879 = vmatpush2.msra.mxu0 0.0
      %3880 = vmatprep.subr.mxu0 0.0
      %3881 = vmatpush2.msra.mxu0 0.0
      %3882 = vmatprep.subr.mxu0 0.0
      %3883 = vmatpush2.msra.mxu0 0.0
      %3884 = vmatprep.subr.mxu0 0.0
      %3885 = vmatpush2.msra.mxu0 0.0
      %3886 = vmatprep.subr.mxu0 0.0
      %3887 = vmatpush2.msra.mxu0 0.0
      %3888 = vmatprep.subr.mxu0 0.0
      %3889 = vmatpush2.msra.mxu0 0.0
      %3890 = vmatprep.subr.mxu0 0.0
      %3891 = vmatpush2.msra.mxu0 0.0
      %3892 = vmatprep.subr.mxu0 0.0
      %3893 = vmatpush2.msra.mxu0 0.0
      %3894 = vmatprep.subr.mxu0 0.0
      %3895 = vmatpush2.msra.mxu0 0.0
      %3896 = vmatprep.subr.mxu0 0.0
      %3897 = vmatpush2.msra.mxu0 0.0
      %3898 = vmatprep.subr.mxu0 0.0
      %3899 = vmatpush2.msra.mxu0 0.0
      %3900 = vmatprep.subr.mxu0 0.0
      %3901 = vmatpush2.msra.mxu0 0.0
      %3902 = vmatprep.subr.mxu0 0.0
      %3903 = vmatpush2.msra.mxu0 0.0
      %3904 = vmatprep.subr.mxu0 0.0
      %3905 = vmatpush2.msra.mxu0 0.0
      %3906 = vmatprep.subr.mxu0 0.0
      %3907 = vmatpush2.msra.mxu0 0.0
      %3908 = vmatprep.mubr.f32.mxu0 0.0
      %3909 = vmatmul.mubr.f32.gmra.mxu0 %v3749
      %v3910 = vpop.f32.mrf.mxu0
      %v3911 = vadd.f32 0.0, %v3910
      %v3912 = vpop.f32.mrf.mxu0
      %3913 = vmatprep.mubr.f32.mxu0 0.0
      %3914 = vmatmul.mubr.f32.gmra.mxu0 %v3752
      %v3915 = vpop.f32.mrf.mxu0
      %v3916 = vadd.f32 0.0, %v3915
      %v3917 = vpop.f32.mrf.mxu0
      %3918 = vmatprep.mubr.f32.mxu0 0.0
      %3919 = vmatmul.mubr.f32.gmra.mxu0 %v3755
      %v3920 = vpop.f32.mrf.mxu0
      %v3921 = vadd.f32 0.0, %v3920
      %v3922 = vpop.f32.mrf.mxu0
      %3923 = vmatprep.mubr.f32.mxu0 0.0
      %3924 = vmatmul.mubr.f32.gmra.mxu0 %v3758
      %v3925 = vpop.f32.mrf.mxu0
      %v3926 = vadd.f32 0.0, %v3925
      %v3927 = vpop.f32.mrf.mxu0
      %3928 = vmatprep.mubr.f32.mxu0 0.0
      %3929 = vmatmul.mubr.f32.gmra.mxu0 %v3761
      %v3930 = vpop.f32.mrf.mxu0
      %v3931 = vadd.f32 0.0, %v3930
      %v3932 = vpop.f32.mrf.mxu0
      %3933 = vmatprep.mubr.f32.mxu0 0.0
      %3934 = vmatmul.mubr.f32.gmra.mxu0 %v3764
      %v3935 = vpop.f32.mrf.mxu0
      %v3936 = vadd.f32 0.0, %v3935
      %v3937 = vpop.f32.mrf.mxu0
      %3938 = vmatprep.mubr.f32.mxu0 0.0
      %3939 = vmatmul.mubr.f32.gmra.mxu0 %v3767
      %v3940 = vpop.f32.mrf.mxu0
      %v3941 = vadd.f32 0.0, %v3940
      %v3942 = vpop.f32.mrf.mxu0
      %3943 = vmatprep.mubr.f32.mxu0 0.0
      %3944 = vmatmul.mubr.f32.gmra.mxu0 %v3770
      %v3945 = vpop.f32.mrf.mxu0
      %v3946 = vadd.f32 0.0, %v3945
      %v3947 = vpop.f32.mrf.mxu0
      %3948 = vmatprep.mubr.f32.mxu0 0.0
      %3949 = vmatmul.mubr.f32.gmra.mxu0 %v3773
      %v3950 = vpop.f32.mrf.mxu0
      %v3951 = vadd.f32 0.0, %v3950
      %v3952 = vpop.f32.mrf.mxu0
      %3953 = vmatprep.mubr.f32.mxu0 0.0
      %3954 = vmatmul.mubr.f32.gmra.mxu0 %v3776
      %v3955 = vpop.f32.mrf.mxu0
      %v3956 = vadd.f32 0.0, %v3955
      %v3957 = vpop.f32.mrf.mxu0
      %3958 = vmatprep.mubr.f32.mxu0 0.0
      %3959 = vmatmul.mubr.f32.gmra.mxu0 %v3779
      %v3960 = vpop.f32.mrf.mxu0
      %v3961 = vadd.f32 0.0, %v3960
      %v3962 = vpop.f32.mrf.mxu0
      %3963 = vmatprep.mubr.f32.mxu0 0.0
      %3964 = vmatmul.mubr.f32.gmra.mxu0 %v3782
      %v3965 = vpop.f32.mrf.mxu0
      %v3966 = vadd.f32 0.0, %v3965
      %v3967 = vpop.f32.mrf.mxu0
      %3968 = vmatprep.mubr.f32.mxu0 0.0
      %3969 = vmatmul.mubr.f32.gmra.mxu0 %v3785
      %v3970 = vpop.f32.mrf.mxu0
      %v3971 = vadd.f32 0.0, %v3970
      %v3972 = vpop.f32.mrf.mxu0
      %3973 = vmatprep.mubr.f32.mxu0 0.0
      %3974 = vmatmul.mubr.f32.gmra.mxu0 %v3788
      %v3975 = vpop.f32.mrf.mxu0
      %v3976 = vadd.f32 0.0, %v3975
      %v3977 = vpop.f32.mrf.mxu0
      %3978 = vmatprep.mubr.f32.mxu0 0.0
      %3979 = vmatmul.mubr.f32.gmra.mxu0 %v3791
      %v3980 = vpop.f32.mrf.mxu0
      %v3981 = vadd.f32 0.0, %v3980
      %v3982 = vpop.f32.mrf.mxu0
      %3983 = vmatprep.mubr.f32.mxu0 0.0
      %3984 = vmatmul.mubr.f32.gmra.mxu0 %v3794
      %v3985 = vpop.f32.mrf.mxu0
      %v3986 = vadd.f32 0.0, %v3985
      %v3987 = vpop.f32.mrf.mxu0
      %3988 = vmatprep.mubr.f32.mxu0 0.0
      %3989 = vmatmul.mubr.f32.gmra.mxu0 %v3797
      %v3990 = vpop.f32.mrf.mxu0
      %v3991 = vadd.f32 0.0, %v3990
      %v3992 = vpop.f32.mrf.mxu0
      %3993 = vmatprep.mubr.f32.mxu0 0.0
      %3994 = vmatmul.mubr.f32.gmra.mxu0 %v3800
      %v3995 = vpop.f32.mrf.mxu0
      %v3996 = vadd.f32 0.0, %v3995
      %v3997 = vpop.f32.mrf.mxu0
      %3998 = vmatprep.mubr.f32.mxu0 0.0
      %3999 = vmatmul.mubr.f32.gmra.mxu0 %v3803
      %v4000 = vpop.f32.mrf.mxu0
      %v4001 = vadd.f32 0.0, %v4000
      %v4002 = vpop.f32.mrf.mxu0
      %4003 = vmatprep.mubr.f32.mxu0 0.0
      %4004 = vmatmul.mubr.f32.gmra.mxu0 %v3806
      %v4005 = vpop.f32.mrf.mxu0
      %v4006 = vadd.f32 0.0, %v4005
      %v4007 = vpop.f32.mrf.mxu0
      %4008 = vmatprep.mubr.f32.mxu0 0.0
      %4009 = vmatmul.mubr.f32.gmra.mxu0 %v3809
      %v4010 = vpop.f32.mrf.mxu0
      %v4011 = vadd.f32 0.0, %v4010
      %v4012 = vpop.f32.mrf.mxu0
      %4013 = vmatprep.mubr.f32.mxu0 0.0
      %4014 = vmatmul.mubr.f32.gmra.mxu0 %v3812
      %v4015 = vpop.f32.mrf.mxu0
      %v4016 = vadd.f32 0.0, %v4015
      %v4017 = vpop.f32.mrf.mxu0
      %4018 = vmatprep.mubr.f32.mxu0 0.0
      %4019 = vmatmul.mubr.f32.gmra.mxu0 %v3815
      %v4020 = vpop.f32.mrf.mxu0
      %v4021 = vadd.f32 0.0, %v4020
      %v4022 = vpop.f32.mrf.mxu0
      %4023 = vmatprep.mubr.f32.mxu0 0.0
      %4024 = vmatmul.mubr.f32.gmra.mxu0 %v3818
      %v4025 = vpop.f32.mrf.mxu0
      %v4026 = vadd.f32 0.0, %v4025
      %v4027 = vpop.f32.mrf.mxu0
      %4028 = vmatprep.mubr.f32.mxu0 0.0
      %4029 = vmatmul.mubr.f32.gmra.mxu0 %v3821
      %v4030 = vpop.f32.mrf.mxu0
      %v4031 = vadd.f32 0.0, %v4030
      %v4032 = vpop.f32.mrf.mxu0
      %4033 = vmatprep.mubr.f32.mxu0 0.0
      %4034 = vmatmul.mubr.f32.gmra.mxu0 %v3824
      %v4035 = vpop.f32.mrf.mxu0
      %v4036 = vadd.f32 0.0, %v4035
      %v4037 = vpop.f32.mrf.mxu0
      %4038 = vmatprep.mubr.f32.mxu0 0.0
      %4039 = vmatmul.mubr.f32.gmra.mxu0 %v3827
      %v4040 = vpop.f32.mrf.mxu0
      %v4041 = vadd.f32 0.0, %v4040
      %v4042 = vpop.f32.mrf.mxu0
      %4043 = vmatprep.mubr.f32.mxu0 0.0
      %4044 = vmatmul.mubr.f32.gmra.mxu0 %v3830
      %v4045 = vpop.f32.mrf.mxu0
      %v4046 = vadd.f32 0.0, %v4045
      %v4047 = vpop.f32.mrf.mxu0
      %4048 = vmatprep.mubr.f32.mxu0 0.0
      %4049 = vmatmul.mubr.f32.gmra.mxu0 %v3833
      %v4050 = vpop.f32.mrf.mxu0
      %v4051 = vadd.f32 0.0, %v4050
      %v4052 = vpop.f32.mrf.mxu0
      %4053 = vmatprep.mubr.f32.mxu0 0.0
      %4054 = vmatmul.mubr.f32.gmra.mxu0 %v3836
      %v4055 = vpop.f32.mrf.mxu0
      %v4056 = vadd.f32 0.0, %v4055
      %v4057 = vpop.f32.mrf.mxu0
      %4058 = vmatprep.mubr.f32.mxu0 0.0
      %4059 = vmatmul.mubr.f32.gmra.mxu0 %v3839
      %v4060 = vpop.f32.mrf.mxu0
      %v4061 = vadd.f32 0.0, %v4060
      %v4062 = vpop.f32.mrf.mxu0
      %4063 = vmatprep.mubr.f32.mxu0 0.0
      %4064 = vmatmul.mubr.f32.gmra.mxu0 %v3842
      %v4065 = vpop.f32.mrf.mxu0
      %v4066 = vadd.f32 0.0, %v4065
      %v4067 = vpop.f32.mrf.mxu0
      %4068 = vdwg.mxu0
      %v4069 = vld [vmem:[%s5] sm:$0x1]
      %v4071 = vlaneseq
      %v4072 = vshrl.u32 %v4071, 7
      %v4073 = vsub.s32 0, %v4072
      %v4074 = vrot.slane %v4069, %v4073
      %v4076 = vmul.f32 %v3911, %v4074
      %v4077 = vmul.f32 %v3916, %v4074
      %v4078 = vmul.f32 %v3921, %v4074
      %v4079 = vmul.f32 %v3926, %v4074
      %v4080 = vmul.f32 %v3931, %v4074
      %v4081 = vmul.f32 %v3936, %v4074
      %v4082 = vmul.f32 %v3941, %v4074
      %v4083 = vmul.f32 %v3946, %v4074
      %v4084 = vmul.f32 %v3951, %v4074
      %v4085 = vmul.f32 %v3956, %v4074
      %v4086 = vmul.f32 %v3961, %v4074
      %v4087 = vmul.f32 %v3966, %v4074
      %v4088 = vmul.f32 %v3971, %v4074
      %v4089 = vmul.f32 %v3976, %v4074
      %v4090 = vmul.f32 %v3981, %v4074
      %v4091 = vmul.f32 %v3986, %v4074
      %v4092 = vmul.f32 %v3991, %v4074
      %v4093 = vmul.f32 %v3996, %v4074
      %v4094 = vmul.f32 %v4001, %v4074
      %v4095 = vmul.f32 %v4006, %v4074
      %v4096 = vmul.f32 %v4011, %v4074
      %v4097 = vmul.f32 %v4016, %v4074
      %v4098 = vmul.f32 %v4021, %v4074
      %v4099 = vmul.f32 %v4026, %v4074
      %v4100 = vmul.f32 %v4031, %v4074
      %v4101 = vmul.f32 %v4036, %v4074
      %v4102 = vmul.f32 %v4041, %v4074
      %v4103 = vmul.f32 %v4046, %v4074
      %v4104 = vmul.f32 %v4051, %v4074
      %v4105 = vmul.f32 %v4056, %v4074
      %v4106 = vmul.f32 %v4061, %v4074
      %v4107 = vmul.f32 %v4066, %v4074
      %v4108 = vld [vmem:[%s6] sm:$0x1]
      %v4110 = vlaneseq
      %v4111 = vshrl.u32 %v4110, 7
      %v4112 = vsub.s32 0, %v4111
      %v4113 = vrot.slane %v4108, %v4112
      %v4115 = vadd.f32 %v4076, %v4113
      %v4116 = vadd.f32 %v4077, %v4113
      %v4117 = vadd.f32 %v4078, %v4113
      %v4118 = vadd.f32 %v4079, %v4113
      %v4119 = vadd.f32 %v4080, %v4113
      %v4120 = vadd.f32 %v4081, %v4113
      %v4121 = vadd.f32 %v4082, %v4113
      %v4122 = vadd.f32 %v4083, %v4113
      %v4123 = vadd.f32 %v4084, %v4113
      %v4124 = vadd.f32 %v4085, %v4113
      %v4125 = vadd.f32 %v4086, %v4113
      %v4126 = vadd.f32 %v4087, %v4113
      %v4127 = vadd.f32 %v4088, %v4113
      %v4128 = vadd.f32 %v4089, %v4113
      %v4129 = vadd.f32 %v4090, %v4113
      %v4130 = vadd.f32 %v4091, %v4113
      %v4131 = vadd.f32 %v4092, %v4113
      %v4132 = vadd.f32 %v4093, %v4113
      %v4133 = vadd.f32 %v4094, %v4113
      %v4134 = vadd.f32 %v4095, %v4113
      %v4135 = vadd.f32 %v4096, %v4113
      %v4136 = vadd.f32 %v4097, %v4113
      %v4137 = vadd.f32 %v4098, %v4113
      %v4138 = vadd.f32 %v4099, %v4113
      %v4139 = vadd.f32 %v4100, %v4113
      %v4140 = vadd.f32 %v4101, %v4113
      %v4141 = vadd.f32 %v4102, %v4113
      %v4142 = vadd.f32 %v4103, %v4113
      %v4143 = vadd.f32 %v4104, %v4113
      %v4144 = vadd.f32 %v4105, %v4113
      %v4145 = vadd.f32 %v4106, %v4113
      %v4146 = vadd.f32 %v4107, %v4113
      %4147 = vst.msk [vmem:[%s278] sm:$0xff] %vm1576, %v4115
      %4148 = vst.msk [vmem:[%s278 + $0x8] sm:$0xff] %vm1576, %v4116
      %4149 = vst.msk [vmem:[%s278 + $0x10] sm:$0xff] %vm1576, %v4117
      %4150 = vst.msk [vmem:[%s278 + $0x18] sm:$0xff] %vm1576, %v4118
      %4151 = vst.msk [vmem:[%s278 + $0x20] sm:$0xff] %vm1576, %v4119
      %4152 = vst.msk [vmem:[%s278 + $0x28] sm:$0xff] %vm1576, %v4120
      %4153 = vst.msk [vmem:[%s278 + $0x30] sm:$0xff] %vm1576, %v4121
      %4154 = vst.msk [vmem:[%s278 + $0x38] sm:$0xff] %vm1576, %v4122
      %4155 = vst.msk [vmem:[%s278 + $0x40] sm:$0xff] %vm1576, %v4123
      %4156 = vst.msk [vmem:[%s278 + $0x48] sm:$0xff] %vm1576, %v4124
      %4157 = vst.msk [vmem:[%s278 + $0x50] sm:$0xff] %vm1576, %v4125
      %4158 = vst.msk [vmem:[%s278 + $0x58] sm:$0xff] %vm1576, %v4126
      %4159 = vst.msk [vmem:[%s278 + $0x60] sm:$0xff] %vm1576, %v4127
      %4160 = vst.msk [vmem:[%s278 + $0x68] sm:$0xff] %vm1576, %v4128
      %4161 = vst.msk [vmem:[%s278 + $0x70] sm:$0xff] %vm1576, %v4129
      %4162 = vst.msk [vmem:[%s278 + $0x78] sm:$0xff] %vm1576, %v4130
      %4163 = vst.msk [vmem:[%s278 + $0x80] sm:$0xff] %vm1576, %v4131
      %4164 = vst.msk [vmem:[%s278 + $0x88] sm:$0xff] %vm1576, %v4132
      %4165 = vst.msk [vmem:[%s278 + $0x90] sm:$0xff] %vm1576, %v4133
      %4166 = vst.msk [vmem:[%s278 + $0x98] sm:$0xff] %vm1576, %v4134
      %4167 = vst.msk [vmem:[%s278 + $0xa0] sm:$0xff] %vm1576, %v4135
      %4168 = vst.msk [vmem:[%s278 + $0xa8] sm:$0xff] %vm1576, %v4136
      %4169 = vst.msk [vmem:[%s278 + $0xb0] sm:$0xff] %vm1576, %v4137
      %4170 = vst.msk [vmem:[%s278 + $0xb8] sm:$0xff] %vm1576, %v4138
      %4171 = vst.msk [vmem:[%s278 + $0xc0] sm:$0xff] %vm1576, %v4139
      %4172 = vst.msk [vmem:[%s278 + $0xc8] sm:$0xff] %vm1576, %v4140
      %4173 = vst.msk [vmem:[%s278 + $0xd0] sm:$0xff] %vm1576, %v4141
      %4174 = vst.msk [vmem:[%s278 + $0xd8] sm:$0xff] %vm1576, %v4142
      %4175 = vst.msk [vmem:[%s278 + $0xe0] sm:$0xff] %vm1576, %v4143
      %4176 = vst.msk [vmem:[%s278 + $0xe8] sm:$0xff] %vm1576, %v4144
      %4177 = vst.msk [vmem:[%s278 + $0xf0] sm:$0xff] %vm1576, %v4145
      %4178 = vst.msk [vmem:[%s278 + $0xf8] sm:$0xff] %vm1576, %v4146
      %p4179 = scmp.lt.s32.totalorder %s18, 1
      %s4180 = scalar_select %p4179, %s18, 1
      %s4181 = smul.addr %s4180, 32
      %s4182 = smul.addr %s4181, 8
      %s4183 = scalar_lea.vmem %s7, %s4182
      // Predicated region
      $region49: #{tpu_custom_call.1} parent=47 // pred_check
        %p4184 = pneg %p188
      $region50: #{tpu_custom_call.1} parent=47 // pred_check_branch
        %4186 = sbr.rel (%p4184) target = $region52
      $region51: #{tpu_custom_call.1} parent=47 // pred_region
        _
      $region52: #{tpu_custom_call.1} parent=47 // pred_fallthru
        _
    $region48: #{tpu_custom_call.1} parent=5 // pred_fallthru
      _
    %p4187 = scmp.le.s32.totalorder 2, %s13
    // Predicated region
    $region53: #{tpu_custom_call.1} parent=5 // pred_check
      %p4188 = pneg %p4187
    $region54: #{tpu_custom_call.1} parent=5 // pred_check_branch
      %4190 = sbr.rel (%p4188) target = $region56
    $region55: #{tpu_custom_call.1} parent=5 // pred_region
      %s4191 = ssub.s32 %s13, 2
      // Predicated region
      $region57: #{tpu_custom_call.1} parent=55 // pred_check
        %p4192 = pneg %p194
      $region58: #{tpu_custom_call.1} parent=55 // pred_check_branch
        %4194 = sbr.rel (%p4192) target = $region60
      $region59: #{tpu_custom_call.1} parent=55 // pred_region
        %p4195 = scmp.lt.s32.totalorder %s19, 1
        %s4196 = scalar_select %p4195, %s19, 1
        %s4197 = smul.addr %s4196, 32
        %s4198 = smul.addr %s4197, 8
        %s4199 = scalar_lea.vmem %s7, %s4198
      $region60: #{tpu_custom_call.1} parent=55 // pred_fallthru
        _
    $region56: #{tpu_custom_call.1} parent=5 // pred_fallthru
      _
  $region6: #{tpu_custom_call.1} parent=0 // loop_footer
    %s17 = sadd.s32 1, %s13
  $region7: #{tpu_custom_call.1} parent=0 // loop_footer_branch
    %12 = sbr.rel target = $region3
  $region8: #{tpu_custom_call.1} parent=0 // loop_exit
    _

</llo_original>
